<compile_context>
chip_gen: v5e
topology: v5e:2x2
jax: 0.10.0
libtpu: 0.0.40
codegen_flags: <defaults>
</compile_context>

<pallas_src>
import functools

import jax
import jax.numpy as jnp
from jax.experimental import pallas as pl
from jax.experimental.pallas import tpu as pltpu

LANE = 128
_VMEM_LIMIT = 32 * 1024 * 1024


def _round_up(x, m):
    return (x + m - 1) // m * m


def _pad_to(x, shape):
    return jnp.pad(x, [(0, t - s) for s, t in zip(x.shape, shape)])


def _act(v, is_leaky, alpha):
    return jnp.where(v > 0, v, alpha * v) if is_leaky else jnp.maximum(v, 0.0)


# ---------------------------------------------------------------------------
# Kernel 1: 1x1 conv + activation  ==  tiled matmul + bias + act.
# ---------------------------------------------------------------------------
def _matmul_act_kernel(x_ref, w_ref, b_ref, o_ref, *, is_leaky, alpha):
    # x_ref: (tm, Cp) bf16; w_ref: (Cp, Op) bf16; b_ref: (1, Op) f32; o_ref: (tm, Op) bf16
    acc = jnp.dot(x_ref[...], w_ref[...], preferred_element_type=jnp.float32)
    acc = acc + b_ref[...]
    o_ref[...] = _act(acc, is_leaky, alpha).astype(o_ref.dtype)


def conv1x1_act(x_nhwc, w, b, *, is_leaky, alpha):
    """x_nhwc: (N,H,W,Cp) bf16 (channel-padded); w: (Cp,Op) bf16; b: (Op,) f32."""
    N, H, W, Cp = x_nhwc.shape
    Op = w.shape[1]
    M = N * H * W
    tm = min(_round_up(M, 8), 256)
    Mp = _round_up(M, tm)
    x2d = x_nhwc.reshape(M, Cp)
    if Mp != M:
        x2d = jnp.pad(x2d, ((0, Mp - M), (0, 0)))

    kern = functools.partial(_matmul_act_kernel, is_leaky=is_leaky, alpha=alpha)
    out = pl.pallas_call(
        kern,
        out_shape=jax.ShapeDtypeStruct((Mp, Op), jnp.bfloat16),
        grid=(Mp // tm,),
        in_specs=[
            pl.BlockSpec((tm, Cp), lambda m: (m, 0)),
            pl.BlockSpec((Cp, Op), lambda m: (0, 0)),
            pl.BlockSpec((1, Op), lambda m: (0, 0)),
        ],
        out_specs=pl.BlockSpec((tm, Op), lambda m: (m, 0)),
        compiler_params=pltpu.CompilerParams(
            dimension_semantics=("parallel",),
            vmem_limit_bytes=_VMEM_LIMIT,
        ),
    )(x2d, w, b.reshape(1, Op))
    return out[:M].reshape(N, H, W, Op)


# ---------------------------------------------------------------------------
# Kernel 2: 3x3 "same" conv + activation, tiled over (batch, row-tile).
# ---------------------------------------------------------------------------
def _conv3x3_act_kernel(x_ref, w_ref, b_ref, o_ref, *, is_leaky, alpha):
    # x_ref: (1, 1, tr+2, W+2, Cp) bf16  haloed row slab for this tile
    # w_ref: (9, Cp, Op)          bf16  tap-major k = dh*3 + dw
    # b_ref: (1, Op)              f32
    # o_ref: (1, tr, W, Op)       bf16
    _, tr, W, Op = o_ref.shape
    Cp = x_ref.shape[-1]

    # Per-tile f32 accumulator (bounded by tile-size heuristic to <= ~512 KiB).
    acc = jnp.zeros((tr * W, Op), jnp.float32)
    # 9 shifted taps -> 9 MXU matmuls with f32 accumulation (static unroll).
    for k in range(9):
        dh, dw = divmod(k, 3)
        patch = x_ref[0, 0, dh:dh + tr, dw:dw + W, :].reshape(tr * W, Cp)
        acc = acc + jnp.dot(patch, w_ref[k], preferred_element_type=jnp.float32)

    acc = acc + b_ref[...]
    acc = _act(acc, is_leaky, alpha)
    o_ref[...] = acc.reshape(1, tr, W, Op).astype(o_ref.dtype)


def conv3x3_act(x_nhwc, w9, b, *, is_leaky, alpha):
    """x_nhwc: (N,H,W,Cp) bf16 (channel-padded); w9: (9,Cp,Op) bf16; b: (Op,) f32.
    Returns (N,H,W,Op) bf16 (valid channels first, padded tail exactly zero)."""
    N, H, W, Cp = x_nhwc.shape
    Op = w9.shape[-1]

    # Row-tile size: keep tr*W (MXU M dim) around <=1024 rows -> small VMEM footprint.
    tr = max(1, min(H, max(1, 1024 // max(W, 1))))
    n_tiles = -(-H // tr)
    Ht = n_tiles * tr

    # Zero pad: 1-pixel conv halo + bottom rows so Ht is a multiple of tr.
    xpad = jnp.pad(x_nhwc, ((0, 0), (1, 1 + Ht - H), (1, 1), (0, 0)))

    # Pre-gather overlapping haloed row slabs so the kernel needs only Blocked specs
    # (automatic double-buffered pipelining; correct under parallel core sharding).
    if n_tiles == 1:
        slab = xpad[:, None]
    else:
        slab = jnp.stack(
            [xpad[:, i * tr:i * tr + tr + 2] for i in range(n_tiles)], axis=1)
    # slab: (N, n_tiles, tr+2, W+2, Cp)

    kern = functools.partial(_conv3x3_act_kernel, is_leaky=is_leaky, alpha=alpha)
    out = pl.pallas_call(
        kern,
        out_shape=jax.ShapeDtypeStruct((N, Ht, W, Op), jnp.bfloat16),
        grid=(N, n_tiles),
        in_specs=[
            pl.BlockSpec((1, 1, tr + 2, W + 2, Cp), lambda n, i: (n, i, 0, 0, 0)),
            pl.BlockSpec((9, Cp, Op), lambda n, i: (0, 0, 0)),
            pl.BlockSpec((1, Op), lambda n, i: (0, 0)),
        ],
        out_specs=pl.BlockSpec((1, tr, W, Op), lambda n, i: (n, i, 0, 0)),
        compiler_params=pltpu.CompilerParams(
            dimension_semantics=("parallel", "parallel"),
            vmem_limit_bytes=_VMEM_LIMIT,
        ),
    )(slab, w9, b.reshape(1, Op))
    return out[:, :H]


# ---------------------------------------------------------------------------
# Module forward.
# ---------------------------------------------------------------------------
def _prep_conv3x3_weight(w, cin_p, cout_p):
    # PyTorch Conv2d weight (cout, cin, 3, 3) -> (9, cin_p, cout_p) bf16, k = dh*3+dw.
    cout, cin = w.shape[0], w.shape[1]
    wk = jnp.transpose(w, (2, 3, 1, 0)).reshape(9, cin, cout)
    return _pad_to(wk, (9, cin_p, cout_p)).astype(jnp.bfloat16)


def unet_upx3_forward(x1, x2, params, *, is_leaky=False, alpha=0.1):
    """UNetUpx3.forward (is_deconv=False, is_bn=False).
    x1: (N, in_ch, H1, W1) f32 NCHW ; x2: (N, in_ch-out_ch, 2*H1, 2*W1) f32 NCHW.
    Returns (N, out_ch, 2*H1, 2*W1) f32 NCHW.
    """
    N, in_ch, H1, W1 = x1.shape
    _, skip_ch, H, W = x2.shape
    out_ch = params["up_w"].shape[0]
    cat_ch = out_ch + skip_ch
    assert H == 2 * H1 and W == 2 * W1
    assert params["c1_w"].shape[1] == cat_ch

    Cin_p = _round_up(in_ch, LANE)
    Ccat_p = _round_up(cat_ch, LANE)
    Co_p = _round_up(out_ch, LANE)

    # One NCHW->NHWC transpose per module input; everything stays NHWC/bf16 inside.
    x1h = _pad_to(jnp.transpose(x1, (0, 2, 3, 1)).astype(jnp.bfloat16),
                  (N, H1, W1, Cin_p))
    x2h = jnp.transpose(x2, (0, 2, 3, 1)).astype(jnp.bfloat16)

    # upscale: 1x1 conv + act (Pallas), then nearest 2x upsample (glue).
    w_up = _pad_to(jnp.transpose(params["up_w"][:, :, 0, 0], (1, 0)),
                   (Cin_p, Co_p)).astype(jnp.bfloat16)
    b_up = _pad_to(params["up_b"], (Co_p,)).astype(jnp.float32)
    y1 = conv1x1_act(x1h, w_up, b_up, is_leaky=is_leaky, alpha=alpha)
    y1 = y1[..., :out_ch]
    y1 = jnp.repeat(jnp.repeat(y1, 2, axis=1), 2, axis=2)          # (N, H, W, out_ch)

    # concat([upscaled, skip], channels) then pad channels to lane width.
    xcat = _pad_to(jnp.concatenate([y1, x2h], axis=-1), (N, H, W, Ccat_p))

    # ConvBlockx3: three 3x3 same convs + act (Pallas).
    w1 = _prep_conv3x3_weight(params["c1_w"], Ccat_p, Co_p)
    w2 = _prep_conv3x3_weight(params["c2_w"], Co_p, Co_p)
    w3 = _prep_conv3x3_weight(params["c3_w"], Co_p, Co_p)
    b1 = _pad_to(params["c1_b"], (Co_p,)).astype(jnp.float32)
    b2 = _pad_to(params["c2_b"], (Co_p,)).astype(jnp.float32)
    b3 = _pad_to(params["c3_b"], (Co_p,)).astype(jnp.float32)

    h = conv3x3_act(xcat, w1, b1, is_leaky=is_leaky, alpha=alpha)
    h = conv3x3_act(h, w2, b2, is_leaky=is_leaky, alpha=alpha)
    h = conv3x3_act(h, w3, b3, is_leaky=is_leaky, alpha=alpha)

    # Single transpose back to NCHW at the module output.
    return jnp.transpose(h[..., :out_ch].astype(jnp.float32), (0, 3, 1, 2))


# ---------------------------------------------------------------------------
# Pure-JAX f32 reference of the same forward pass.
# ---------------------------------------------------------------------------
def _reference(x1, x2, params, *, is_leaky=False, alpha=0.1):
    def conv(x, w, b, pad):
        y = jax.lax.conv_general_dilated(
            x, w, (1, 1), ((pad, pad), (pad, pad)),
            dimension_numbers=("NCHW", "OIHW", "NCHW"),
            precision=jax.lax.Precision.HIGHEST)
        return y + b.reshape(1, -1, 1, 1)

    y1 = _act(conv(x1, params["up_w"], params["up_b"], 0), is_leaky, alpha)
    y1 = jnp.repeat(jnp.repeat(y1, 2, axis=2), 2, axis=3)
    x = jnp.concatenate([y1, x2], axis=1)
    x = _act(conv(x, params["c1_w"], params["c1_b"], 1), is_leaky, alpha)
    x = _act(conv(x, params["c2_w"], params["c2_b"], 1), is_leaky, alpha)
    x = _act(conv(x, params["c3_w"], params["c3_b"], 1), is_leaky, alpha)
    return x


if __name__ == "__main__":
    key = jax.random.PRNGKey(0)
    ks = jax.random.split(key, 10)

    N, in_ch, out_ch = 2, 8, 4
    H1 = W1 = 8                      # x1 spatial; x2 / output spatial = 16
    skip_ch = in_ch - out_ch         # concat channels = in_ch (standard UNet wiring)

    x1 = jax.random.normal(ks[0], (N, in_ch, H1, W1), jnp.float32)
    x2 = jax.random.normal(ks[1], (N, skip_ch, 2 * H1, 2 * W1), jnp.float32)
    params = {
        "up_w": jax.random.normal(ks[2], (out_ch, in_ch, 1, 1), jnp.float32) * 0.2,
        "up_b": jax.random.normal(ks[3], (out_ch,), jnp.float32) * 0.1,
        "c1_w": jax.random.normal(ks[4], (out_ch, in_ch, 3, 3), jnp.float32) * 0.2,
        "c1_b": jax.random.normal(ks[5], (out_ch,), jnp.float32) * 0.1,
        "c2_w": jax.random.normal(ks[6], (out_ch, out_ch, 3, 3), jnp.float32) * 0.2,
        "c2_b": jax.random.normal(ks[7], (out_ch,), jnp.float32) * 0.1,
        "c3_w": jax.random.normal(ks[8], (out_ch, out_ch, 3, 3), jnp.float32) * 0.2,
        "c3_b": jax.random.normal(ks[9], (out_ch,), jnp.float32) * 0.1,
    }

    out = jax.jit(unet_upx3_forward)(x1, x2, params)
    out = jax.block_until_ready(out)

    ref = _reference(x1, x2, params)
    assert out.shape == (N, out_ch, 2 * H1, 2 * W1)
    # bf16 MXU inputs with f32 accumulation -> loose tolerance vs f32 reference.
    assert jnp.allclose(out, ref, atol=5e-2, rtol=5e-2), (
        float(jnp.max(jnp.abs(out - ref))))

    print("KERNEL_OK")
</pallas_src>

<mosaic_0001>
module attributes {stable_mosaic.version = 11 : i64} {
  func.func @_matmul_act_kernel(%arg0: i32, %arg1: memref<128x128xbf16, #tpu.memory_space<vmem>>, %arg2: memref<128x128xbf16, #tpu.memory_space<vmem>>, %arg3: memref<1x128xf32, #tpu.memory_space<vmem>>, %arg4: memref<128x128xbf16, #tpu.memory_space<vmem>>) attributes {dimension_semantics = [#tpu.dimension_semantics<parallel>], iteration_bounds = array<i64: 1>, scalar_prefetch = 0 : i64, scratch_operands = 0 : i64, tpu.core_type = #tpu.core_type<tc>, window_params = [{transform_indices = @transform_0, window_bounds = array<i64: 128, 128>}, {pipeline_mode = #tpu.pipeline_mode<synchronous>, transform_indices = @transform_1, window_bounds = array<i64: 128, 128>}, {pipeline_mode = #tpu.pipeline_mode<synchronous>, transform_indices = @transform_2, window_bounds = array<i64: 1, 128>}, {transform_indices = @transform_3, window_bounds = array<i64: 128, 128>}]} {
    %c0 = arith.constant 0 : index
    %c0_0 = arith.constant 0 : index
    %0 = vector.load %arg1[%c0, %c0_0] : memref<128x128xbf16, #tpu.memory_space<vmem>>, vector<128x128xbf16>
    %c0_1 = arith.constant 0 : index
    %c0_2 = arith.constant 0 : index
    %1 = vector.load %arg2[%c0_1, %c0_2] : memref<128x128xbf16, #tpu.memory_space<vmem>>, vector<128x128xbf16>
    %cst = arith.constant dense<0.000000e+00> : vector<128x128xf32>
    %2 = tpu.matmul %0, %1, %cst {dimension_numbers = #tpu.dot_dimension_numbers<[1], [0], [0], [1], [0, 0, 1, 1], [], []>} : vector<128x128xbf16>, vector<128x128xbf16>, vector<128x128xf32> -> vector<128x128xf32>
    %c0_3 = arith.constant 0 : index
    %c0_4 = arith.constant 0 : index
    %3 = vector.load %arg3[%c0_3, %c0_4] : memref<1x128xf32, #tpu.memory_space<vmem>>, vector<1x128xf32>
    %4 = vector.broadcast %3 : vector<1x128xf32> to vector<128x128xf32>
    %5 = arith.addf %2, %4 : vector<128x128xf32>
    %cst_5 = arith.constant 0.000000e+00 : f32
    %6 = vector.broadcast %cst_5 : f32 to vector<128x128xf32>
    %7 = arith.maximumf %5, %6 : vector<128x128xf32>
    %8 = arith.truncf %7 : vector<128x128xf32> to vector<128x128xbf16>
    %c0_6 = arith.constant 0 : index
    %c0_7 = arith.constant 0 : index
    %9 = vector.load %arg4[%c0_6, %c0_7] : memref<128x128xbf16, #tpu.memory_space<vmem>>, vector<128x128xbf16>
    tpu.vector_store %arg4[%c0_6, %c0_7], %8 {strides = array<i32>} : memref<128x128xbf16, #tpu.memory_space<vmem>>, vector<128x128xbf16>,
    return
  }
  func.func @transform_0(%arg0: i32) -> (i32, i32) {
    %c0_i32 = arith.constant 0 : i32
    %c0_i32_0 = arith.constant 0 : i32
    return %arg0, %c0_i32 : i32, i32
  }
  func.func @transform_1(%arg0: i32) -> (i32, i32) {
    %c0_i32 = arith.constant 0 : i32
    %c0_i32_0 = arith.constant 0 : i32
    %c0_i32_1 = arith.constant 0 : i32
    return %c0_i32, %c0_i32_0 : i32, i32
  }
  func.func @transform_2(%arg0: i32) -> (i32, i32) {
    %c0_i32 = arith.constant 0 : i32
    %c0_i32_0 = arith.constant 0 : i32
    %c0_i32_1 = arith.constant 0 : i32
    return %c0_i32, %c0_i32_0 : i32, i32
  }
  func.func @transform_3(%arg0: i32) -> (i32, i32) {
    %c0_i32 = arith.constant 0 : i32
    %c0_i32_0 = arith.constant 0 : i32
    return %arg0, %c0_i32 : i32, i32
  }
}

module attributes {stable_mosaic.version = 11 : i64} {
  func.func @_conv3x3_act_kernel(%arg0: i32, %arg1: i32, %arg2: memref<1x1x18x18x128xbf16, #tpu.memory_space<vmem>>, %arg3: memref<9x128x128xbf16, #tpu.memory_space<vmem>>, %arg4: memref<1x128xf32, #tpu.memory_space<vmem>>, %arg5: memref<1x16x16x128xbf16, #tpu.memory_space<vmem>>) attributes {dimension_semantics = [#tpu.dimension_semantics<parallel>, #tpu.dimension_semantics<parallel>], iteration_bounds = array<i64: 2, 1>, scalar_prefetch = 0 : i64, scratch_operands = 0 : i64, tpu.core_type = #tpu.core_type<tc>, window_params = [{transform_indices = @transform_0, window_bounds = array<i64: 1, 1, 18, 18, 128>}, {pipeline_mode = #tpu.pipeline_mode<synchronous>, transform_indices = @transform_1, window_bounds = array<i64: 9, 128, 128>}, {pipeline_mode = #tpu.pipeline_mode<synchronous>, transform_indices = @transform_2, window_bounds = array<i64: 1, 128>}, {transform_indices = @transform_3, window_bounds = array<i64: 1, 16, 16, 128>}]} {
    %cst = arith.constant 0.000000e+00 : f32
    %0 = vector.broadcast %cst : f32 to vector<256x128xf32>
    %c0 = arith.constant 0 : index
    %c0_0 = arith.constant 0 : index
    %c0_1 = arith.constant 0 : index
    %c0_2 = arith.constant 0 : index
    %c0_3 = arith.constant 0 : index
    %1 = vector.load %arg2[%c0, %c0_0, %c0_1, %c0_2, %c0_3] : memref<1x1x18x18x128xbf16, #tpu.memory_space<vmem>>, vector<1x1x16x16x128xbf16>
    %2 = vector.shape_cast %1 : vector<1x1x16x16x128xbf16> to vector<16x16x128xbf16>
    %3 = vector.shape_cast %2 : vector<16x16x128xbf16> to vector<256x128xbf16>
    %c0_4 = arith.constant 0 : index
    %c0_5 = arith.constant 0 : index
    %c0_6 = arith.constant 0 : index
    %4 = vector.load %arg3[%c0_4, %c0_5, %c0_6] : memref<9x128x128xbf16, #tpu.memory_space<vmem>>, vector<1x128x128xbf16>
    %5 = vector.shape_cast %4 : vector<1x128x128xbf16> to vector<128x128xbf16>
    %cst_7 = arith.constant dense<0.000000e+00> : vector<256x128xf32>
    %6 = tpu.matmul %3, %5, %cst_7 {dimension_numbers = #tpu.dot_dimension_numbers<[1], [0], [0], [1], [0, 0, 1, 1], [], []>} : vector<256x128xbf16>, vector<128x128xbf16>, vector<256x128xf32> -> vector<256x128xf32>
    %7 = arith.addf %0, %6 : vector<256x128xf32>
    %c0_8 = arith.constant 0 : index
    %c0_9 = arith.constant 0 : index
    %c0_10 = arith.constant 0 : index
    %c1 = arith.constant 1 : index
    %c0_11 = arith.constant 0 : index
    %8 = vector.load %arg2[%c0_8, %c0_9, %c0_10, %c1, %c0_11] : memref<1x1x18x18x128xbf16, #tpu.memory_space<vmem>>, vector<1x1x16x16x128xbf16>
    %9 = vector.shape_cast %8 : vector<1x1x16x16x128xbf16> to vector<16x16x128xbf16>
    %10 = vector.shape_cast %9 : vector<16x16x128xbf16> to vector<256x128xbf16>
    %c1_12 = arith.constant 1 : index
    %c0_13 = arith.constant 0 : index
    %c0_14 = arith.constant 0 : index
    %11 = vector.load %arg3[%c1_12, %c0_13, %c0_14] : memref<9x128x128xbf16, #tpu.memory_space<vmem>>, vector<1x128x128xbf16>
    %12 = vector.shape_cast %11 : vector<1x128x128xbf16> to vector<128x128xbf16>
    %cst_15 = arith.constant dense<0.000000e+00> : vector<256x128xf32>
    %13 = tpu.matmul %10, %12, %cst_15 {dimension_numbers = #tpu.dot_dimension_numbers<[1], [0], [0], [1], [0, 0, 1, 1], [], []>} : vector<256x128xbf16>, vector<128x128xbf16>, vector<256x128xf32> -> vector<256x128xf32>
    %14 = arith.addf %7, %13 : vector<256x128xf32>
    %c0_16 = arith.constant 0 : index
    %c0_17 = arith.constant 0 : index
    %c0_18 = arith.constant 0 : index
    %c2 = arith.constant 2 : index
    %c0_19 = arith.constant 0 : index
    %15 = vector.load %arg2[%c0_16, %c0_17, %c0_18, %c2, %c0_19] : memref<1x1x18x18x128xbf16, #tpu.memory_space<vmem>>, vector<1x1x16x16x128xbf16>
    %16 = vector.shape_cast %15 : vector<1x1x16x16x128xbf16> to vector<16x16x128xbf16>
    %17 = vector.shape_cast %16 : vector<16x16x128xbf16> to vector<256x128xbf16>
    %c2_20 = arith.constant 2 : index
    %c0_21 = arith.constant 0 : index
    %c0_22 = arith.constant 0 : index
    %18 = vector.load %arg3[%c2_20, %c0_21, %c0_22] : memref<9x128x128xbf16, #tpu.memory_space<vmem>>, vector<1x128x128xbf16>
    %19 = vector.shape_cast %18 : vector<1x128x128xbf16> to vector<128x128xbf16>
    %cst_23 = arith.constant dense<0.000000e+00> : vector<256x128xf32>
    %20 = tpu.matmul %17, %19, %cst_23 {dimension_numbers = #tpu.dot_dimension_numbers<[1], [0], [0], [1], [0, 0, 1, 1], [], []>} : vector<256x128xbf16>, vector<128x128xbf16>, vector<256x128xf32> -> vector<256x128xf32>
    %21 = arith.addf %14, %20 : vector<256x128xf32>
    %c0_24 = arith.constant 0 : index
    %c0_25 = arith.constant 0 : index
    %c1_26 = arith.constant 1 : index
    %c0_27 = arith.constant 0 : index
    %c0_28 = arith.constant 0 : index
    %22 = vector.load %arg2[%c0_24, %c0_25, %c1_26, %c0_27, %c0_28] : memref<1x1x18x18x128xbf16, #tpu.memory_space<vmem>>, vector<1x1x16x16x128xbf16>
    %23 = vector.shape_cast %22 : vector<1x1x16x16x128xbf16> to vector<16x16x128xbf16>
    %24 = vector.shape_cast %23 : vector<16x16x128xbf16> to vector<256x128xbf16>
    %c3 = arith.constant 3 : index
    %c0_29 = arith.constant 0 : index
    %c0_30 = arith.constant 0 : index
    %25 = vector.load %arg3[%c3, %c0_29, %c0_30] : memref<9x128x128xbf16, #tpu.memory_space<vmem>>, vector<1x128x128xbf16>
    %26 = vector.shape_cast %25 : vector<1x128x128xbf16> to vector<128x128xbf16>
    %cst_31 = arith.constant dense<0.000000e+00> : vector<256x128xf32>
    %27 = tpu.matmul %24, %26, %cst_31 {dimension_numbers = #tpu.dot_dimension_numbers<[1], [0], [0], [1], [0, 0, 1, 1], [], []>} : vector<256x128xbf16>, vector<128x128xbf16>, vector<256x128xf32> -> vector<256x128xf32>
    %28 = arith.addf %21, %27 : vector<256x128xf32>
    %c0_32 = arith.constant 0 : index
    %c0_33 = arith.constant 0 : index
    %c1_34 = arith.constant 1 : index
    %c1_35 = arith.constant 1 : index
    %c0_36 = arith.constant 0 : index
    %29 = vector.load %arg2[%c0_32, %c0_33, %c1_34, %c1_35, %c0_36] : memref<1x1x18x18x128xbf16, #tpu.memory_space<vmem>>, vector<1x1x16x16x128xbf16>
    %30 = vector.shape_cast %29 : vector<1x1x16x16x128xbf16> to vector<16x16x128xbf16>
    %31 = vector.shape_cast %30 : vector<16x16x128xbf16> to vector<256x128xbf16>
    %c4 = arith.constant 4 : index
    %c0_37 = arith.constant 0 : index
    %c0_38 = arith.constant 0 : index
    %32 = vector.load %arg3[%c4, %c0_37, %c0_38] : memref<9x128x128xbf16, #tpu.memory_space<vmem>>, vector<1x128x128xbf16>
    %33 = vector.shape_cast %32 : vector<1x128x128xbf16> to vector<128x128xbf16>
    %cst_39 = arith.constant dense<0.000000e+00> : vector<256x128xf32>
    %34 = tpu.matmul %31, %33, %cst_39 {dimension_numbers = #tpu.dot_dimension_numbers<[1], [0], [0], [1], [0, 0, 1, 1], [], []>} : vector<256x128xbf16>, vector<128x128xbf16>, vector<256x128xf32> -> vector<256x128xf32>
    %35 = arith.addf %28, %34 : vector<256x128xf32>
    %c0_40 = arith.constant 0 : index
    %c0_41 = arith.constant 0 : index
    %c1_42 = arith.constant 1 : index
    %c2_43 = arith.constant 2 : index
    %c0_44 = arith.constant 0 : index
    %36 = vector.load %arg2[%c0_40, %c0_41, %c1_42, %c2_43, %c0_44] : memref<1x1x18x18x128xbf16, #tpu.memory_space<vmem>>, vector<1x1x16x16x128xbf16>
    %37 = vector.shape_cast %36 : vector<1x1x16x16x128xbf16> to vector<16x16x128xbf16>
    %38 = vector.shape_cast %37 : vector<16x16x128xbf16> to vector<256x128xbf16>
    %c5 = arith.constant 5 : index
    %c0_45 = arith.constant 0 : index
    %c0_46 = arith.constant 0 : index
    %39 = vector.load %arg3[%c5, %c0_45, %c0_46] : memref<9x128x128xbf16, #tpu.memory_space<vmem>>, vector<1x128x128xbf16>
    %40 = vector.shape_cast %39 : vector<1x128x128xbf16> to vector<128x128xbf16>
    %cst_47 = arith.constant dense<0.000000e+00> : vector<256x128xf32>
    %41 = tpu.matmul %38, %40, %cst_47 {dimension_numbers = #tpu.dot_dimension_numbers<[1], [0], [0], [1], [0, 0, 1, 1], [], []>} : vector<256x128xbf16>, vector<128x128xbf16>, vector<256x128xf32> -> vector<256x128xf32>
    %42 = arith.addf %35, %41 : vector<256x128xf32>
    %c0_48 = arith.constant 0 : index
    %c0_49 = arith.constant 0 : index
    %c2_50 = arith.constant 2 : index
    %c0_51 = arith.constant 0 : index
    %c0_52 = arith.constant 0 : index
    %43 = vector.load %arg2[%c0_48, %c0_49, %c2_50, %c0_51, %c0_52] : memref<1x1x18x18x128xbf16, #tpu.memory_space<vmem>>, vector<1x1x16x16x128xbf16>
    %44 = vector.shape_cast %43 : vector<1x1x16x16x128xbf16> to vector<16x16x128xbf16>
    %45 = vector.shape_cast %44 : vector<16x16x128xbf16> to vector<256x128xbf16>
    %c6 = arith.constant 6 : index
    %c0_53 = arith.constant 0 : index
    %c0_54 = arith.constant 0 : index
    %46 = vector.load %arg3[%c6, %c0_53, %c0_54] : memref<9x128x128xbf16, #tpu.memory_space<vmem>>, vector<1x128x128xbf16>
    %47 = vector.shape_cast %46 : vector<1x128x128xbf16> to vector<128x128xbf16>
    %cst_55 = arith.constant dense<0.000000e+00> : vector<256x128xf32>
    %48 = tpu.matmul %45, %47, %cst_55 {dimension_numbers = #tpu.dot_dimension_numbers<[1], [0], [0], [1], [0, 0, 1, 1], [], []>} : vector<256x128xbf16>, vector<128x128xbf16>, vector<256x128xf32> -> vector<256x128xf32>
    %49 = arith.addf %42, %48 : vector<256x128xf32>
    %c0_56 = arith.constant 0 : index
    %c0_57 = arith.constant 0 : index
    %c2_58 = arith.constant 2 : index
    %c1_59 = arith.constant 1 : index
    %c0_60 = arith.constant 0 : index
    %50 = vector.load %arg2[%c0_56, %c0_57, %c2_58, %c1_59, %c0_60] : memref<1x1x18x18x128xbf16, #tpu.memory_space<vmem>>, vector<1x1x16x16x128xbf16>
    %51 = vector.shape_cast %50 : vector<1x1x16x16x128xbf16> to vector<16x16x128xbf16>
    %52 = vector.shape_cast %51 : vector<16x16x128xbf16> to vector<256x128xbf16>
    %c7 = arith.constant 7 : index
    %c0_61 = arith.constant 0 : index
    %c0_62 = arith.constant 0 : index
    %53 = vector.load %arg3[%c7, %c0_61, %c0_62] : memref<9x128x128xbf16, #tpu.memory_space<vmem>>, vector<1x128x128xbf16>
    %54 = vector.shape_cast %53 : vector<1x128x128xbf16> to vector<128x128xbf16>
    %cst_63 = arith.constant dense<0.000000e+00> : vector<256x128xf32>
    %55 = tpu.matmul %52, %54, %cst_63 {dimension_numbers = #tpu.dot_dimension_numbers<[1], [0], [0], [1], [0, 0, 1, 1], [], []>} : vector<256x128xbf16>, vector<128x128xbf16>, vector<256x128xf32> -> vector<256x128xf32>
    %56 = arith.addf %49, %55 : vector<256x128xf32>
    %c0_64 = arith.constant 0 : index
    %c0_65 = arith.constant 0 : index
    %c2_66 = arith.constant 2 : index
    %c2_67 = arith.constant 2 : index
    %c0_68 = arith.constant 0 : index
    %57 = vector.load %arg2[%c0_64, %c0_65, %c2_66, %c2_67, %c0_68] : memref<1x1x18x18x128xbf16, #tpu.memory_space<vmem>>, vector<1x1x16x16x128xbf16>
    %58 = vector.shape_cast %57 : vector<1x1x16x16x128xbf16> to vector<16x16x128xbf16>
    %59 = vector.shape_cast %58 : vector<16x16x128xbf16> to vector<256x128xbf16>
    %c8 = arith.constant 8 : index
    %c0_69 = arith.constant 0 : index
    %c0_70 = arith.constant 0 : index
    %60 = vector.load %arg3[%c8, %c0_69, %c0_70] : memref<9x128x128xbf16, #tpu.memory_space<vmem>>, vector<1x128x128xbf16>
    %61 = vector.shape_cast %60 : vector<1x128x128xbf16> to vector<128x128xbf16>
    %cst_71 = arith.constant dense<0.000000e+00> : vector<256x128xf32>
    %62 = tpu.matmul %59, %61, %cst_71 {dimension_numbers = #tpu.dot_dimension_numbers<[1], [0], [0], [1], [0, 0, 1, 1], [], []>} : vector<256x128xbf16>, vector<128x128xbf16>, vector<256x128xf32> -> vector<256x128xf32>
    %63 = arith.addf %56, %62 : vector<256x128xf32>
    %c0_72 = arith.constant 0 : index
    %c0_73 = arith.constant 0 : index
    %64 = vector.load %arg4[%c0_72, %c0_73] : memref<1x128xf32, #tpu.memory_space<vmem>>, vector<1x128xf32>
    %65 = vector.broadcast %64 : vector<1x128xf32> to vector<256x128xf32>
    %66 = arith.addf %63, %65 : vector<256x128xf32>
    %cst_74 = arith.constant 0.000000e+00 : f32
    %67 = vector.broadcast %cst_74 : f32 to vector<256x128xf32>
    %68 = arith.maximumf %66, %67 : vector<256x128xf32>
    %69 = vector.shape_cast %68 : vector<256x128xf32> to vector<1x16x16x128xf32>
    %70 = arith.truncf %69 : vector<1x16x16x128xf32> to vector<1x16x16x128xbf16>
    %c0_75 = arith.constant 0 : index
    %c0_76 = arith.constant 0 : index
    %c0_77 = arith.constant 0 : index
    %c0_78 = arith.constant 0 : index
    %71 = vector.load %arg5[%c0_75, %c0_76, %c0_77, %c0_78] : memref<1x16x16x128xbf16, #tpu.memory_space<vmem>>, vector<1x16x16x128xbf16>
    tpu.vector_store %arg5[%c0_75, %c0_76, %c0_77, %c0_78], %70 {strides = array<i32>} : memref<1x16x16x128xbf16, #tpu.memory_space<vmem>>, vector<1x16x16x128xbf16>,
    return
  }
  func.func @transform_0(%arg0: i32, %arg1: i32) -> (i32, i32, i32, i32, i32) {
    %c0_i32 = arith.constant 0 : i32
    %c0_i32_0 = arith.constant 0 : i32
    %c0_i32_1 = arith.constant 0 : i32
    %c0_i32_2 = arith.constant 0 : i32
    return %arg0, %arg1, %c0_i32, %c0_i32_0, %c0_i32_1 : i32, i32, i32, i32, i32
  }
  func.func @transform_1(%arg0: i32, %arg1: i32) -> (i32, i32, i32) {
    %c0_i32 = arith.constant 0 : i32
    %c0_i32_0 = arith.constant 0 : i32
    %c0_i32_1 = arith.constant 0 : i32
    %c0_i32_2 = arith.constant 0 : i32
    return %c0_i32, %c0_i32_0, %c0_i32_1 : i32, i32, i32
  }
  func.func @transform_2(%arg0: i32, %arg1: i32) -> (i32, i32) {
    %c0_i32 = arith.constant 0 : i32
    %c0_i32_0 = arith.constant 0 : i32
    %c0_i32_1 = arith.constant 0 : i32
    return %c0_i32, %c0_i32_0 : i32, i32
  }
  func.func @transform_3(%arg0: i32, %arg1: i32) -> (i32, i32, i32, i32) {
    %c0_i32 = arith.constant 0 : i32
    %c0_i32_0 = arith.constant 0 : i32
    %c0_i32_1 = arith.constant 0 : i32
    return %arg0, %arg1, %c0_i32, %c0_i32_0 : i32, i32, i32, i32
  }
}

</mosaic_0001>

<llo_original>
// kernel: unet_upx3_forward.4
$region0: #{unet_upx3_forward.4}
  #allocation0 [shape = 'u32[]', space=smem, size = 0x4, offset = 0x4, fixed_abs, tag = 'smem constant byte address 0x4 - core index']
  #allocation1 [shape = 'u32[72,128]{1,0:T(1,128)}', space=vmem, size = 0x9000, scoped, tag = 'internal scratch']
  %s0 = inlined_call_operand.vmem [shape: bf16[128,128], index: 0, kind: input, shape index: {}]
  %s1 = inlined_call_operand.vmem [shape: bf16[128,128], index: 1, kind: input, shape index: {}]
  %s2 = inlined_call_operand.vmem [shape: f32[1,128], index: 2, kind: input, shape index: {}]
  %s3 = inlined_call_operand.vmem [shape: bf16[128,128], index: 3, kind: output, shape index: {}]
  %s4 = sld [smem:[#allocation0]]
  $region22: #{unet_upx3_forward.4} parent=0
    _
  %s6 = ssub.s32 1, %s4
  %s7 = scalar_select 0, %s6, %s4
  // Predicated region
  $region2: #{unet_upx3_forward.4} parent=0 // pred_check
    _
  $region3: #{unet_upx3_forward.4} parent=0 // pred_check_branch
    %9 = sbr.rel (0) target = $region5
  $region4: #{unet_upx3_forward.4} parent=0 // pred_region
    _
  $region5: #{unet_upx3_forward.4} parent=0 // pred_fallthru
    _
  // Predicated region
  $region6: #{unet_upx3_forward.4} parent=0 // pred_check
    _
  $region7: #{unet_upx3_forward.4} parent=0 // pred_check_branch
    %11 = sbr.rel (0) target = $region9
  $region8: #{unet_upx3_forward.4} parent=0 // pred_region
    _
  $region9: #{unet_upx3_forward.4} parent=0 // pred_fallthru
    _
  // Predicated region
  $region10: #{unet_upx3_forward.4} parent=0 // pred_check
    _
  $region11: #{unet_upx3_forward.4} parent=0 // pred_check_branch
    %13 = sbr.rel (0) target = $region13
  $region12: #{unet_upx3_forward.4} parent=0 // pred_region
    _
  $region13: #{unet_upx3_forward.4} parent=0 // pred_fallthru
    _
  %v14 = vld [vmem:[%s0] sm:$0xf]
  %v15 = vld [vmem:[%s0 + $0x4] sm:$0xf]
  %v16 = vld [vmem:[%s0 + $0x8] sm:$0xf]
  %v17 = vld [vmem:[%s0 + $0xc] sm:$0xf]
  %v18 = vld [vmem:[%s0 + $0x10] sm:$0xf]
  %v19 = vld [vmem:[%s0 + $0x14] sm:$0xf]
  %v20 = vld [vmem:[%s0 + $0x18] sm:$0xf]
  %v21 = vld [vmem:[%s0 + $0x1c] sm:$0xf]
  %v22 = vld [vmem:[%s0 + $0x20] sm:$0xf]
  %v23 = vld [vmem:[%s0 + $0x24] sm:$0xf]
  %v24 = vld [vmem:[%s0 + $0x28] sm:$0xf]
  %v25 = vld [vmem:[%s0 + $0x2c] sm:$0xf]
  %v26 = vld [vmem:[%s0 + $0x30] sm:$0xf]
  %v27 = vld [vmem:[%s0 + $0x34] sm:$0xf]
  %v28 = vld [vmem:[%s0 + $0x38] sm:$0xf]
  %v29 = vld [vmem:[%s0 + $0x3c] sm:$0xf]
  %v30 = vld [vmem:[%s1] sm:$0xf]
  %v31 = vld [vmem:[%s1 + $0x4] sm:$0xf]
  %v32 = vld [vmem:[%s1 + $0x8] sm:$0xf]
  %v33 = vld [vmem:[%s1 + $0xc] sm:$0xf]
  %v34 = vld [vmem:[%s1 + $0x10] sm:$0xf]
  %v35 = vld [vmem:[%s1 + $0x14] sm:$0xf]
  %v36 = vld [vmem:[%s1 + $0x18] sm:$0xf]
  %v37 = vld [vmem:[%s1 + $0x1c] sm:$0xf]
  %v38 = vld [vmem:[%s1 + $0x20] sm:$0xf]
  %v39 = vld [vmem:[%s1 + $0x24] sm:$0xf]
  %v40 = vld [vmem:[%s1 + $0x28] sm:$0xf]
  %v41 = vld [vmem:[%s1 + $0x2c] sm:$0xf]
  %v42 = vld [vmem:[%s1 + $0x30] sm:$0xf]
  %v43 = vld [vmem:[%s1 + $0x34] sm:$0xf]
  %v44 = vld [vmem:[%s1 + $0x38] sm:$0xf]
  %v45 = vld [vmem:[%s1 + $0x3c] sm:$0xf]
  %v46 = vld [vmem:[%s2] sm:$0x1]
  %v48 = vperm.slane %v46, 0
  %v66 = vunpack.c.l.b16 %v14
  %v67 = vunpack.c.l.b16 %v15
  %v68 = vunpack.c.l.b16 %v16
  %v69 = vunpack.c.l.b16 %v17
  %v70 = vunpack.c.l.b16 %v18
  %v71 = vunpack.c.l.b16 %v19
  %v72 = vunpack.c.l.b16 %v20
  %v73 = vunpack.c.l.b16 %v21
  %v74 = vunpack.c.l.b16 %v22
  %v75 = vunpack.c.l.b16 %v23
  %v76 = vunpack.c.l.b16 %v24
  %v77 = vunpack.c.l.b16 %v25
  %v78 = vunpack.c.l.b16 %v26
  %v79 = vunpack.c.l.b16 %v27
  %v80 = vunpack.c.l.b16 %v28
  %v81 = vunpack.c.l.b16 %v29
  %v82 = vpack.c.b16 %v67, %v66
  %v83 = vpack.c.b16 %v69, %v68
  %v84 = vpack.c.b16 %v71, %v70
  %v85 = vpack.c.b16 %v73, %v72
  %v86 = vpack.c.b16 %v75, %v74
  %v87 = vpack.c.b16 %v77, %v76
  %v88 = vpack.c.b16 %v79, %v78
  %v89 = vpack.c.b16 %v81, %v80
  %v114 = vunpack.c.l.b16 %v30
  %v115 = vunpack.c.l.b16 %v31
  %v116 = vunpack.c.l.b16 %v32
  %v117 = vunpack.c.l.b16 %v33
  %v118 = vunpack.c.l.b16 %v34
  %v119 = vunpack.c.l.b16 %v35
  %v120 = vunpack.c.l.b16 %v36
  %v121 = vunpack.c.l.b16 %v37
  %v122 = vunpack.c.l.b16 %v38
  %v123 = vunpack.c.l.b16 %v39
  %v124 = vunpack.c.l.b16 %v40
  %v125 = vunpack.c.l.b16 %v41
  %v126 = vunpack.c.l.b16 %v42
  %v127 = vunpack.c.l.b16 %v43
  %v128 = vunpack.c.l.b16 %v44
  %v129 = vunpack.c.l.b16 %v45
  %v130 = vpack.c.b16 %v115, %v114
  %v131 = vpack.c.b16 %v117, %v116
  %v132 = vpack.c.b16 %v119, %v118
  %v133 = vpack.c.b16 %v121, %v120
  %v134 = vpack.c.b16 %v123, %v122
  %v135 = vpack.c.b16 %v125, %v124
  %v136 = vpack.c.b16 %v127, %v126
  %v137 = vpack.c.b16 %v129, %v128
  %146 = vmatpush.bf16.msra.mxu0 %v137
  %147 = vmatpush.bf16.msra.mxu0 %v136
  %148 = vmatpush.bf16.msra.mxu0 %v135
  %149 = vmatpush.bf16.msra.mxu0 %v134
  %150 = vmatpush.bf16.msra.mxu0 %v133
  %151 = vmatpush.bf16.msra.mxu0 %v132
  %152 = vmatpush.bf16.msra.mxu0 %v131
  %153 = vmatpush.bf16.msra.mxu0 %v130
  %154 = vmatmul.bf16.gmra.mxu0 %v82
  %v155 = vpop.f32.mrf.mxu0
  %v156 = vadd.f32 %v48, %v155
  %v157 = vpop.f32.mrf.mxu0
  %v158 = vadd.f32 %v48, %v157
  %159 = vmatmul.bf16.gmra.mxu0 %v83
  %v160 = vpop.f32.mrf.mxu0
  %v161 = vadd.f32 %v48, %v160
  %v162 = vpop.f32.mrf.mxu0
  %v163 = vadd.f32 %v48, %v162
  %164 = vmatmul.bf16.gmra.mxu0 %v84
  %v165 = vpop.f32.mrf.mxu0
  %v166 = vadd.f32 %v48, %v165
  %v167 = vpop.f32.mrf.mxu0
  %v168 = vadd.f32 %v48, %v167
  %169 = vmatmul.bf16.gmra.mxu0 %v85
  %v170 = vpop.f32.mrf.mxu0
  %v171 = vadd.f32 %v48, %v170
  %v172 = vpop.f32.mrf.mxu0
  %v173 = vadd.f32 %v48, %v172
  %174 = vmatmul.bf16.gmra.mxu0 %v86
  %v175 = vpop.f32.mrf.mxu0
  %v176 = vadd.f32 %v48, %v175
  %v177 = vpop.f32.mrf.mxu0
  %v178 = vadd.f32 %v48, %v177
  %179 = vmatmul.bf16.gmra.mxu0 %v87
  %v180 = vpop.f32.mrf.mxu0
  %v181 = vadd.f32 %v48, %v180
  %v182 = vpop.f32.mrf.mxu0
  %v183 = vadd.f32 %v48, %v182
  %184 = vmatmul.bf16.gmra.mxu0 %v88
  %v185 = vpop.f32.mrf.mxu0
  %v186 = vadd.f32 %v48, %v185
  %v187 = vpop.f32.mrf.mxu0
  %v188 = vadd.f32 %v48, %v187
  %189 = vmatmul.bf16.gmra.mxu0 %v89
  %v190 = vpop.f32.mrf.mxu0
  %v191 = vadd.f32 %v48, %v190
  %v192 = vpop.f32.mrf.mxu0
  %v193 = vadd.f32 %v48, %v192
  %194 = vdwg.mxu0
  %v195 = vmax.f32 %v156, 0.0
  %v196 = vmax.f32 %v158, 0.0
  %v197 = vmax.f32 %v161, 0.0
  %v198 = vmax.f32 %v163, 0.0
  %v199 = vmax.f32 %v166, 0.0
  %v200 = vmax.f32 %v168, 0.0
  %v201 = vmax.f32 %v171, 0.0
  %v202 = vmax.f32 %v173, 0.0
  %v203 = vmax.f32 %v176, 0.0
  %v204 = vmax.f32 %v178, 0.0
  %v205 = vmax.f32 %v181, 0.0
  %v206 = vmax.f32 %v183, 0.0
  %v207 = vmax.f32 %v186, 0.0
  %v208 = vmax.f32 %v188, 0.0
  %v209 = vmax.f32 %v191, 0.0
  %v210 = vmax.f32 %v193, 0.0
  %v211 = vpack.c.bf16 %v195, %v195
  %v212 = vpack.c.bf16 %v196, %v196
  %v213 = vpack.c.bf16 %v197, %v197
  %v214 = vpack.c.bf16 %v198, %v198
  %v215 = vpack.c.bf16 %v199, %v199
  %v216 = vpack.c.bf16 %v200, %v200
  %v217 = vpack.c.bf16 %v201, %v201
  %v218 = vpack.c.bf16 %v202, %v202
  %v219 = vpack.c.bf16 %v203, %v203
  %v220 = vpack.c.bf16 %v204, %v204
  %v221 = vpack.c.bf16 %v205, %v205
  %v222 = vpack.c.bf16 %v206, %v206
  %v223 = vpack.c.bf16 %v207, %v207
  %v224 = vpack.c.bf16 %v208, %v208
  %v225 = vpack.c.bf16 %v209, %v209
  %v226 = vpack.c.bf16 %v210, %v210
  %227 = vst [vmem:[%s3] sm:$0xf] %v211
  %228 = vst [vmem:[%s3 + $0x4] sm:$0xf] %v212
  %229 = vst [vmem:[%s3 + $0x8] sm:$0xf] %v213
  %230 = vst [vmem:[%s3 + $0xc] sm:$0xf] %v214
  %231 = vst [vmem:[%s3 + $0x10] sm:$0xf] %v215
  %232 = vst [vmem:[%s3 + $0x14] sm:$0xf] %v216
  %233 = vst [vmem:[%s3 + $0x18] sm:$0xf] %v217
  %234 = vst [vmem:[%s3 + $0x1c] sm:$0xf] %v218
  %235 = vst [vmem:[%s3 + $0x20] sm:$0xf] %v219
  %236 = vst [vmem:[%s3 + $0x24] sm:$0xf] %v220
  %237 = vst [vmem:[%s3 + $0x28] sm:$0xf] %v221
  %238 = vst [vmem:[%s3 + $0x2c] sm:$0xf] %v222
  %239 = vst [vmem:[%s3 + $0x30] sm:$0xf] %v223
  %240 = vst [vmem:[%s3 + $0x34] sm:$0xf] %v224
  %241 = vst [vmem:[%s3 + $0x38] sm:$0xf] %v225
  %242 = vst [vmem:[%s3 + $0x3c] sm:$0xf] %v226
  // Predicated region
  $region14: #{unet_upx3_forward.4} parent=0 // pred_check
    _
  $region15: #{unet_upx3_forward.4} parent=0 // pred_check_branch
    %244 = sbr.rel (0) target = $region17
  $region16: #{unet_upx3_forward.4} parent=0 // pred_region
    _
  $region17: #{unet_upx3_forward.4} parent=0 // pred_fallthru
    _
  // Predicated region
  $region18: #{unet_upx3_forward.4} parent=0 // pred_check
    _
  $region19: #{unet_upx3_forward.4} parent=0 // pred_check_branch
    %246 = sbr.rel (0) target = $region21
  $region20: #{unet_upx3_forward.4} parent=0 // pred_region
    _
  $region21: #{unet_upx3_forward.4} parent=0 // pred_fallthru
    _

// kernel: unet_upx3_forward.5
$region0: #{unet_upx3_forward.5}
  #allocation0 [shape = 'u32[]', space=smem, size = 0x4, offset = 0x4, fixed_abs, tag = 'smem constant byte address 0x4 - core index']
  #allocation1 [shape = 'u32[72,128]{1,0:T(1,128)}', space=vmem, size = 0x9000, scoped, tag = 'internal scratch']
  %s0 = inlined_call_operand.vmem [shape: bf16[2,1,18,18,128], index: 0, kind: input, shape index: {}]
  %s1 = inlined_call_operand.vmem [shape: bf16[9,128,128], index: 1, kind: input, shape index: {}]
  %s2 = inlined_call_operand.vmem [shape: f32[1,128], index: 2, kind: input, shape index: {}]
  %s3 = inlined_call_operand.vmem [shape: bf16[2,16,16,128], index: 3, kind: output, shape index: {}]
  %s4 = sld [smem:[#allocation0]]
  $region45: #{unet_upx3_forward.5} parent=0
    _
  %s6 = ssub.s32 1, %s4
  %s7 = scalar_select 0, %s6, %s4
  loop: start=0, step=1, limit=4
  $region2: #{unet_upx3_forward.5} parent=0 // loop_pre_header
    _
  $region3: #{unet_upx3_forward.5} parent=0 // loop_header
    %s9 = sphi 0, %s13
    %p10 = scmp.ge.s32.totalorder %s9, 4
    %s16 = sphi 0, %s28
    %s17 = sphi 0, %s24
    %s18 = sphi 0, %s16
    %s19 = sphi 0, %s17
    %s20 = sphi 0, %s18
    %s21 = sphi 0, %s19
    %s33 = sphi 0, %s35
    %s36 = sphi 0, %s33
    %s37 = sphi 0, %s36
    %s53 = sphi 0, %s37
    %s57 = sphi 0, %s57
    %s59 = sphi 0, %s57
    %s60 = sphi 0, %s59
    %s74 = sphi 0, %s60
    %s78 = sphi 0, %s78
    %s80 = sphi 0, %s78
    %s81 = sphi 0, %s80
    %s95 = sphi 0, %s81
    %s103 = sphi 0, %s105
    %s106 = sphi 0, %s103
    %s107 = sphi 0, %s106
    %s123 = sphi 0, %s107
  $region4: #{unet_upx3_forward.5} parent=0 // loop_header_branch
    %12 = sbr.rel (%p10) target = $region8
  $region5: #{unet_upx3_forward.5} parent=0 // loop_body
    %s14 = ssub.s32 %s9, 1
    %s15 = ssub.s32 %s9, 2
    %s22 = sadd.s32 1, %s17
    %p23 = scmp.ge.s32.totalorder %s22, 1
    %s24 = scalar_select %p23, 0, %s22
    %s25 = sadd.s32 1, %s16
    %s26 = scalar_select %p23, %s25, %s16
    %p27 = scmp.ge.s32.totalorder %s26, 2
    %s28 = scalar_select %p27, 0, %s26
    %s29 = ssub.s32 %s16, %s28
    %s30 = ssub.s32 %s17, %s24
    %s31 = sor.u32 %s29, %s30
    %p32 = scmp.eq.s32.totalorder %s31, 0
    %s34 = sadd.s32 %s33, 1
    %s35 = scalar_select %p32, %s33, %s34
    %p38 = pneg %p32
    %p39 = scmp.eq.s32.totalorder %s9, 1
    %p40 = por %p38, %p39
    %p41 = scmp.ne.s32.totalorder %s33, %s36
    %p42 = scmp.eq.s32.totalorder %s9, 0
    %p43 = por %p41, %p42
    %p44 = scmp.ne.s32.totalorder %s33, %s36
    %p45 = scmp.eq.s32.totalorder %s14, 1
    %p46 = por %p44, %p45
    %p47 = scmp.ne.s32.totalorder %s36, %s37
    %p48 = scmp.eq.s32.totalorder %s14, 0
    %p49 = por %p47, %p48
    %p50 = scmp.ne.s32.totalorder %s36, %s37
    %p51 = scmp.eq.s32.totalorder %s15, 1
    %p52 = por %p50, %p51
    %p54 = scmp.ne.s32.totalorder %s37, %s53
    %p55 = scmp.eq.s32.totalorder %s15, 0
    %p56 = por %p54, %p55
    %s58 = sadd.s32 %s57, 1
    %p61 = scmp.eq.s32.totalorder %s9, 1
    %p62 = scmp.ne.s32.totalorder %s57, %s59
    %p63 = scmp.eq.s32.totalorder %s9, 0
    %p64 = por %p62, %p63
    %p65 = scmp.ne.s32.totalorder %s57, %s59
    %p66 = scmp.eq.s32.totalorder %s14, 1
    %p67 = por %p65, %p66
    %p68 = scmp.ne.s32.totalorder %s59, %s60
    %p69 = scmp.eq.s32.totalorder %s14, 0
    %p70 = por %p68, %p69
    %p71 = scmp.ne.s32.totalorder %s59, %s60
    %p72 = scmp.eq.s32.totalorder %s15, 1
    %p73 = por %p71, %p72
    %p75 = scmp.ne.s32.totalorder %s60, %s74
    %p76 = scmp.eq.s32.totalorder %s15, 0
    %p77 = por %p75, %p76
    %s79 = sadd.s32 %s78, 1
    %p82 = scmp.eq.s32.totalorder %s9, 1
    %p83 = scmp.ne.s32.totalorder %s78, %s80
    %p84 = scmp.eq.s32.totalorder %s9, 0
    %p85 = por %p83, %p84
    %p86 = scmp.ne.s32.totalorder %s78, %s80
    %p87 = scmp.eq.s32.totalorder %s14, 1
    %p88 = por %p86, %p87
    %p89 = scmp.ne.s32.totalorder %s80, %s81
    %p90 = scmp.eq.s32.totalorder %s14, 0
    %p91 = por %p89, %p90
    %p92 = scmp.ne.s32.totalorder %s80, %s81
    %p93 = scmp.eq.s32.totalorder %s15, 1
    %p94 = por %p92, %p93
    %p96 = scmp.ne.s32.totalorder %s81, %s95
    %p97 = scmp.eq.s32.totalorder %s15, 0
    %p98 = por %p96, %p97
    %s99 = ssub.s32 %s16, %s28
    %s100 = ssub.s32 %s17, %s24
    %s101 = sor.u32 %s99, %s100
    %p102 = scmp.eq.s32.totalorder %s101, 0
    %s104 = sadd.s32 %s103, 1
    %s105 = scalar_select %p102, %s103, %s104
    %p108 = pneg %p102
    %p109 = scmp.eq.s32.totalorder %s9, 1
    %p110 = por %p108, %p109
    %p111 = scmp.ne.s32.totalorder %s103, %s106
    %p112 = scmp.eq.s32.totalorder %s9, 0
    %p113 = por %p111, %p112
    %p114 = scmp.ne.s32.totalorder %s103, %s106
    %p115 = scmp.eq.s32.totalorder %s14, 1
    %p116 = por %p114, %p115
    %p117 = scmp.ne.s32.totalorder %s106, %s107
    %p118 = scmp.eq.s32.totalorder %s14, 0
    %p119 = por %p117, %p118
    %p120 = scmp.ne.s32.totalorder %s106, %s107
    %p121 = scmp.eq.s32.totalorder %s15, 1
    %p122 = por %p120, %p121
    %p124 = scmp.ne.s32.totalorder %s107, %s123
    %p125 = scmp.eq.s32.totalorder %s15, 0
    %p126 = por %p124, %p125
    %p127 = scmp.le.s32.totalorder 1, %s9
    %p128 = scmp.lt.s32.totalorder %s9, 3
    %p129 = pnand %p127, %p128
    %p130 = pneg %p129
    // Predicated region
    $region9: #{unet_upx3_forward.5} parent=5 // pred_check
      _
    $region10: #{unet_upx3_forward.5} parent=5 // pred_check_branch
      %132 = sbr.rel (%p129) target = $region12
    $region11: #{unet_upx3_forward.5} parent=5 // pred_region
      %s133 = ssub.s32 %s9, 1
      // Predicated region
      $region13: #{unet_upx3_forward.5} parent=11 // pred_check
        %p134 = pneg %p70
      $region14: #{unet_upx3_forward.5} parent=11 // pred_check_branch
        %136 = sbr.rel (%p134) target = $region16
      $region15: #{unet_upx3_forward.5} parent=11 // pred_region
        _
      $region16: #{unet_upx3_forward.5} parent=11 // pred_fallthru
        _
      // Predicated region
      $region17: #{unet_upx3_forward.5} parent=11 // pred_check
        %p137 = pneg %p91
      $region18: #{unet_upx3_forward.5} parent=11 // pred_check_branch
        %139 = sbr.rel (%p137) target = $region20
      $region19: #{unet_upx3_forward.5} parent=11 // pred_region
        _
      $region20: #{unet_upx3_forward.5} parent=11 // pred_fallthru
        _
    $region12: #{unet_upx3_forward.5} parent=5 // pred_fallthru
      _
    %p140 = scmp.lt.s32.totalorder %s9, 2
    // Predicated region
    $region21: #{unet_upx3_forward.5} parent=5 // pred_check
      %p141 = pneg %p140
    $region22: #{unet_upx3_forward.5} parent=5 // pred_check_branch
      %143 = sbr.rel (%p141) target = $region24
    $region23: #{unet_upx3_forward.5} parent=5 // pred_region
      // Predicated region
      $region25: #{unet_upx3_forward.5} parent=23 // pred_check
        %p144 = pneg %p43
      $region26: #{unet_upx3_forward.5} parent=23 // pred_check_branch
        %146 = sbr.rel (%p144) target = $region28
      $region27: #{unet_upx3_forward.5} parent=23 // pred_region
        %p147 = scmp.lt.s32.totalorder %s16, 1
        %s148 = scalar_select %p147, %s16, 1
        %p149 = scmp.lt.s32.totalorder %s17, 0
        %s150 = scalar_select %p149, %s17, 0
        %s151 = smul.addr %s150, 54
        %s152 = smul.addr %s148, 54
        %s153 = sadd.s32 %s151, %s152
        %s154 = smul.addr %s153, 4
        %s155 = scalar_lea.vmem %s0, %s154
      $region28: #{unet_upx3_forward.5} parent=23 // pred_fallthru
        _
    $region24: #{unet_upx3_forward.5} parent=5 // pred_fallthru
      _
    %p156 = scmp.le.s32.totalorder 1, %s9
    %p157 = scmp.lt.s32.totalorder %s9, 3
    %p158 = pnand %p156, %p157
    %p159 = pneg %p158
    // Predicated region
    $region29: #{unet_upx3_forward.5} parent=5 // pred_check
      _
    $region30: #{unet_upx3_forward.5} parent=5 // pred_check_branch
      %161 = sbr.rel (%p158) target = $region32
    $region31: #{unet_upx3_forward.5} parent=5 // pred_region
      %s162 = ssub.s32 %s9, 1
      %p163 = scmp.lt.s32.totalorder %s18, 1
      %s164 = scalar_select %p163, %s18, 1
      %p165 = scmp.lt.s32.totalorder %s19, 0
      %s166 = scalar_select %p165, %s19, 0
      %s167 = smul.addr %s166, 54
      %s168 = smul.addr %s164, 54
      %s169 = sadd.s32 %s167, %s168
      %s170 = smul.addr %s169, 4
      %s171 = scalar_lea.vmem %s0, %s170
      %p172 = pneg %p49
      %p173 = pneg %p46
      %p174 = pneg %p70
      %p175 = pneg %p67
      %p176 = pneg %p91
      %p177 = pneg %p88
      %p178 = pneg %p119
      %p179 = pneg %p116
      %s180 = smul.u32 16, %s19
      %p181 = scmp.lt.s32.totalorder %s18, 1
      %s182 = scalar_select %p181, %s18, 1
      %p183 = scmp.lt.s32.totalorder %s180, 15
      %s184 = scalar_select %p183, %s180, 15
      %s185 = smul.addr %s184, 2
      %s186 = smul.addr %s182, 32
      %s187 = sadd.s32 %s185, %s186
      %s188 = smul.addr %s187, 4
      %s189 = scalar_lea.vmem %s3, %s188
      %p190 = scmp.lt.s32.totalorder %s18, 1
      %s191 = scalar_select %p190, %s18, 1
      %p192 = scmp.lt.s32.totalorder %s19, 0
      %s193 = scalar_select %p192, %s19, 0
      %s194 = smul.addr %s193, 54
      %s195 = smul.addr %s191, 54
      %s196 = sadd.s32 %s194, %s195
      %s197 = smul.addr %s196, 4
      %s198 = scalar_lea.vmem %s0, %s197
      %s199 = smul.u32 16, %s19
      %p200 = scmp.lt.s32.totalorder %s18, 1
      %s201 = scalar_select %p200, %s18, 1
      %p202 = scmp.lt.s32.totalorder %s199, 15
      %s203 = scalar_select %p202, %s199, 15
      %s204 = smul.addr %s203, 2
      %s205 = smul.addr %s201, 32
      %s206 = sadd.s32 %s204, %s205
      %s207 = smul.addr %s206, 4
      %s208 = scalar_lea.vmem %s3, %s207
      %s209 = smul.u32 16, %s19
      %v210 = vld [vmem:[%s198] sm:$0xf]
      %v211 = vld [vmem:[%s198 + $0x4] sm:$0xf]
      %v212 = vld [vmem:[%s198 + $0xc] sm:$0xf]
      %v213 = vld [vmem:[%s198 + $0x10] sm:$0xf]
      %v214 = vld [vmem:[%s198 + $0x18] sm:$0xf]
      %v215 = vld [vmem:[%s198 + $0x1c] sm:$0xf]
      %v216 = vld [vmem:[%s198 + $0x24] sm:$0xf]
      %v217 = vld [vmem:[%s198 + $0x28] sm:$0xf]
      %v218 = vld [vmem:[%s198 + $0x30] sm:$0xf]
      %v219 = vld [vmem:[%s198 + $0x34] sm:$0xf]
      %v220 = vld [vmem:[%s198 + $0x3c] sm:$0xf]
      %v221 = vld [vmem:[%s198 + $0x40] sm:$0xf]
      %v222 = vld [vmem:[%s198 + $0x48] sm:$0xf]
      %v223 = vld [vmem:[%s198 + $0x4c] sm:$0xf]
      %v224 = vld [vmem:[%s198 + $0x54] sm:$0xf]
      %v225 = vld [vmem:[%s198 + $0x58] sm:$0xf]
      %v226 = vld [vmem:[%s198 + $0x60] sm:$0xf]
      %v227 = vld [vmem:[%s198 + $0x64] sm:$0xf]
      %v228 = vld [vmem:[%s198 + $0x6c] sm:$0xf]
      %v229 = vld [vmem:[%s198 + $0x70] sm:$0xf]
      %v230 = vld [vmem:[%s198 + $0x78] sm:$0xf]
      %v231 = vld [vmem:[%s198 + $0x7c] sm:$0xf]
      %v232 = vld [vmem:[%s198 + $0x84] sm:$0xf]
      %v233 = vld [vmem:[%s198 + $0x88] sm:$0xf]
      %v234 = vld [vmem:[%s198 + $0x90] sm:$0xf]
      %v235 = vld [vmem:[%s198 + $0x94] sm:$0xf]
      %v236 = vld [vmem:[%s198 + $0x9c] sm:$0xf]
      %v237 = vld [vmem:[%s198 + $0xa0] sm:$0xf]
      %v238 = vld [vmem:[%s198 + $0xa8] sm:$0xf]
      %v239 = vld [vmem:[%s198 + $0xac] sm:$0xf]
      %v240 = vld [vmem:[%s198 + $0xb4] sm:$0xf]
      %v241 = vld [vmem:[%s198 + $0xb8] sm:$0xf]
      %v242 = vld [vmem:[%s1] sm:$0xf]
      %v243 = vld [vmem:[%s1 + $0x4] sm:$0xf]
      %v244 = vld [vmem:[%s1 + $0x8] sm:$0xf]
      %v245 = vld [vmem:[%s1 + $0xc] sm:$0xf]
      %v246 = vld [vmem:[%s1 + $0x10] sm:$0xf]
      %v247 = vld [vmem:[%s1 + $0x14] sm:$0xf]
      %v248 = vld [vmem:[%s1 + $0x18] sm:$0xf]
      %v249 = vld [vmem:[%s1 + $0x1c] sm:$0xf]
      %v250 = vld [vmem:[%s1 + $0x20] sm:$0xf]
      %v251 = vld [vmem:[%s1 + $0x24] sm:$0xf]
      %v252 = vld [vmem:[%s1 + $0x28] sm:$0xf]
      %v253 = vld [vmem:[%s1 + $0x2c] sm:$0xf]
      %v254 = vld [vmem:[%s1 + $0x30] sm:$0xf]
      %v255 = vld [vmem:[%s1 + $0x34] sm:$0xf]
      %v256 = vld [vmem:[%s1 + $0x38] sm:$0xf]
      %v257 = vld [vmem:[%s1 + $0x3c] sm:$0xf]
      %v258 = vld [vmem:[%s198 + $0x8] sm:$0x1]
      %v259 = vld [vmem:[%s198 + $0x14] sm:$0x1]
      %v260 = vld [vmem:[%s198 + $0x20] sm:$0x1]
      %v261 = vld [vmem:[%s198 + $0x2c] sm:$0x1]
      %v262 = vld [vmem:[%s198 + $0x38] sm:$0x1]
      %v263 = vld [vmem:[%s198 + $0x44] sm:$0x1]
      %v264 = vld [vmem:[%s198 + $0x50] sm:$0x1]
      %v265 = vld [vmem:[%s198 + $0x5c] sm:$0x1]
      %v266 = vld [vmem:[%s198 + $0x68] sm:$0x1]
      %v267 = vld [vmem:[%s198 + $0x74] sm:$0x1]
      %v268 = vld [vmem:[%s198 + $0x80] sm:$0x1]
      %v269 = vld [vmem:[%s198 + $0x8c] sm:$0x1]
      %v270 = vld [vmem:[%s198 + $0x98] sm:$0x1]
      %v271 = vld [vmem:[%s198 + $0xa4] sm:$0x1]
      %v272 = vld [vmem:[%s198 + $0xb0] sm:$0x1]
      %v273 = vld [vmem:[%s198 + $0xbc] sm:$0x1]
      %vm274 = vsmask.f32 3328
      %vm275 = vsmask.f32 7440
      %vm276 = vmor %vm274, %vm275
      %v278 = vshrl.u32 %v210, 16
      %v280 = vrot.slane %v278, 4
      %v281 = vshll.u32 %v210, 16
      %v283 = vrot.slane %v281, 5
      %v284 = vor.u32 %v280, %v283
      %v285 = vrot.slane %v284, 4
      %v287 = vshll.u32 %v211, 16
      %v289 = vrot.slane %v287, 5
      %v290 = vsel %vm276, %v285, %v289
      %v291 = vshrl.u32 %v211, 16
      %v293 = vrot.slane %v291, 4
      %v294 = vor.u32 %v293, %v289
      %v295 = vrot.slane %v294, 4
      %v297 = vshll.u32 %v258, 16
      %v299 = vrot.slane %v297, 5
      %v300 = vsel %vm276, %v295, %v299
      %v302 = vshrl.u32 %v212, 16
      %v304 = vrot.slane %v302, 4
      %v305 = vshll.u32 %v212, 16
      %v307 = vrot.slane %v305, 5
      %v308 = vor.u32 %v304, %v307
      %v309 = vrot.slane %v308, 4
      %v311 = vshll.u32 %v213, 16
      %v313 = vrot.slane %v311, 5
      %v314 = vsel %vm276, %v309, %v313
      %v315 = vshrl.u32 %v213, 16
      %v317 = vrot.slane %v315, 4
      %v318 = vor.u32 %v317, %v313
      %v319 = vrot.slane %v318, 4
      %v321 = vshll.u32 %v259, 16
      %v323 = vrot.slane %v321, 5
      %v324 = vsel %vm276, %v319, %v323
      %v326 = vshrl.u32 %v214, 16
      %v328 = vrot.slane %v326, 4
      %v329 = vshll.u32 %v214, 16
      %v331 = vrot.slane %v329, 5
      %v332 = vor.u32 %v328, %v331
      %v333 = vrot.slane %v332, 4
      %v335 = vshll.u32 %v215, 16
      %v337 = vrot.slane %v335, 5
      %v338 = vsel %vm276, %v333, %v337
      %v339 = vshrl.u32 %v215, 16
      %v341 = vrot.slane %v339, 4
      %v342 = vor.u32 %v341, %v337
      %v343 = vrot.slane %v342, 4
      %v345 = vshll.u32 %v260, 16
      %v347 = vrot.slane %v345, 5
      %v348 = vsel %vm276, %v343, %v347
      %v350 = vshrl.u32 %v216, 16
      %v352 = vrot.slane %v350, 4
      %v353 = vshll.u32 %v216, 16
      %v355 = vrot.slane %v353, 5
      %v356 = vor.u32 %v352, %v355
      %v357 = vrot.slane %v356, 4
      %v359 = vshll.u32 %v217, 16
      %v361 = vrot.slane %v359, 5
      %v362 = vsel %vm276, %v357, %v361
      %v363 = vshrl.u32 %v217, 16
      %v365 = vrot.slane %v363, 4
      %v366 = vor.u32 %v365, %v361
      %v367 = vrot.slane %v366, 4
      %v369 = vshll.u32 %v261, 16
      %v371 = vrot.slane %v369, 5
      %v372 = vsel %vm276, %v367, %v371
      %v374 = vshrl.u32 %v218, 16
      %v376 = vrot.slane %v374, 4
      %v377 = vshll.u32 %v218, 16
      %v379 = vrot.slane %v377, 5
      %v380 = vor.u32 %v376, %v379
      %v381 = vrot.slane %v380, 4
      %v383 = vshll.u32 %v219, 16
      %v385 = vrot.slane %v383, 5
      %v386 = vsel %vm276, %v381, %v385
      %v387 = vshrl.u32 %v219, 16
      %v389 = vrot.slane %v387, 4
      %v390 = vor.u32 %v389, %v385
      %v391 = vrot.slane %v390, 4
      %v393 = vshll.u32 %v262, 16
      %v395 = vrot.slane %v393, 5
      %v396 = vsel %vm276, %v391, %v395
      %v398 = vshrl.u32 %v220, 16
      %v400 = vrot.slane %v398, 4
      %v401 = vshll.u32 %v220, 16
      %v403 = vrot.slane %v401, 5
      %v404 = vor.u32 %v400, %v403
      %v405 = vrot.slane %v404, 4
      %v407 = vshll.u32 %v221, 16
      %v409 = vrot.slane %v407, 5
      %v410 = vsel %vm276, %v405, %v409
      %v411 = vshrl.u32 %v221, 16
      %v413 = vrot.slane %v411, 4
      %v414 = vor.u32 %v413, %v409
      %v415 = vrot.slane %v414, 4
      %v417 = vshll.u32 %v263, 16
      %v419 = vrot.slane %v417, 5
      %v420 = vsel %vm276, %v415, %v419
      %v422 = vshrl.u32 %v222, 16
      %v424 = vrot.slane %v422, 4
      %v425 = vshll.u32 %v222, 16
      %v427 = vrot.slane %v425, 5
      %v428 = vor.u32 %v424, %v427
      %v429 = vrot.slane %v428, 4
      %v431 = vshll.u32 %v223, 16
      %v433 = vrot.slane %v431, 5
      %v434 = vsel %vm276, %v429, %v433
      %v435 = vshrl.u32 %v223, 16
      %v437 = vrot.slane %v435, 4
      %v438 = vor.u32 %v437, %v433
      %v439 = vrot.slane %v438, 4
      %v441 = vshll.u32 %v264, 16
      %v443 = vrot.slane %v441, 5
      %v444 = vsel %vm276, %v439, %v443
      %v446 = vshrl.u32 %v224, 16
      %v448 = vrot.slane %v446, 4
      %v449 = vshll.u32 %v224, 16
      %v451 = vrot.slane %v449, 5
      %v452 = vor.u32 %v448, %v451
      %v453 = vrot.slane %v452, 4
      %v455 = vshll.u32 %v225, 16
      %v457 = vrot.slane %v455, 5
      %v458 = vsel %vm276, %v453, %v457
      %v459 = vshrl.u32 %v225, 16
      %v461 = vrot.slane %v459, 4
      %v462 = vor.u32 %v461, %v457
      %v463 = vrot.slane %v462, 4
      %v465 = vshll.u32 %v265, 16
      %v467 = vrot.slane %v465, 5
      %v468 = vsel %vm276, %v463, %v467
      %v470 = vshrl.u32 %v226, 16
      %v472 = vrot.slane %v470, 4
      %v473 = vshll.u32 %v226, 16
      %v475 = vrot.slane %v473, 5
      %v476 = vor.u32 %v472, %v475
      %v477 = vrot.slane %v476, 4
      %v479 = vshll.u32 %v227, 16
      %v481 = vrot.slane %v479, 5
      %v482 = vsel %vm276, %v477, %v481
      %v483 = vshrl.u32 %v227, 16
      %v485 = vrot.slane %v483, 4
      %v486 = vor.u32 %v485, %v481
      %v487 = vrot.slane %v486, 4
      %v489 = vshll.u32 %v266, 16
      %v491 = vrot.slane %v489, 5
      %v492 = vsel %vm276, %v487, %v491
      %v494 = vshrl.u32 %v228, 16
      %v496 = vrot.slane %v494, 4
      %v497 = vshll.u32 %v228, 16
      %v499 = vrot.slane %v497, 5
      %v500 = vor.u32 %v496, %v499
      %v501 = vrot.slane %v500, 4
      %v503 = vshll.u32 %v229, 16
      %v505 = vrot.slane %v503, 5
      %v506 = vsel %vm276, %v501, %v505
      %v507 = vshrl.u32 %v229, 16
      %v509 = vrot.slane %v507, 4
      %v510 = vor.u32 %v509, %v505
      %v511 = vrot.slane %v510, 4
      %v513 = vshll.u32 %v267, 16
      %v515 = vrot.slane %v513, 5
      %v516 = vsel %vm276, %v511, %v515
      %v518 = vshrl.u32 %v230, 16
      %v520 = vrot.slane %v518, 4
      %v521 = vshll.u32 %v230, 16
      %v523 = vrot.slane %v521, 5
      %v524 = vor.u32 %v520, %v523
      %v525 = vrot.slane %v524, 4
      %v527 = vshll.u32 %v231, 16
      %v529 = vrot.slane %v527, 5
      %v530 = vsel %vm276, %v525, %v529
      %v531 = vshrl.u32 %v231, 16
      %v533 = vrot.slane %v531, 4
      %v534 = vor.u32 %v533, %v529
      %v535 = vrot.slane %v534, 4
      %v537 = vshll.u32 %v268, 16
      %v539 = vrot.slane %v537, 5
      %v540 = vsel %vm276, %v535, %v539
      %v542 = vshrl.u32 %v232, 16
      %v544 = vrot.slane %v542, 4
      %v545 = vshll.u32 %v232, 16
      %v547 = vrot.slane %v545, 5
      %v548 = vor.u32 %v544, %v547
      %v549 = vrot.slane %v548, 4
      %v551 = vshll.u32 %v233, 16
      %v553 = vrot.slane %v551, 5
      %v554 = vsel %vm276, %v549, %v553
      %v555 = vshrl.u32 %v233, 16
      %v557 = vrot.slane %v555, 4
      %v558 = vor.u32 %v557, %v553
      %v559 = vrot.slane %v558, 4
      %v561 = vshll.u32 %v269, 16
      %v563 = vrot.slane %v561, 5
      %v564 = vsel %vm276, %v559, %v563
      %v566 = vshrl.u32 %v234, 16
      %v568 = vrot.slane %v566, 4
      %v569 = vshll.u32 %v234, 16
      %v571 = vrot.slane %v569, 5
      %v572 = vor.u32 %v568, %v571
      %v573 = vrot.slane %v572, 4
      %v575 = vshll.u32 %v235, 16
      %v577 = vrot.slane %v575, 5
      %v578 = vsel %vm276, %v573, %v577
      %v579 = vshrl.u32 %v235, 16
      %v581 = vrot.slane %v579, 4
      %v582 = vor.u32 %v581, %v577
      %v583 = vrot.slane %v582, 4
      %v585 = vshll.u32 %v270, 16
      %v587 = vrot.slane %v585, 5
      %v588 = vsel %vm276, %v583, %v587
      %v590 = vshrl.u32 %v236, 16
      %v592 = vrot.slane %v590, 4
      %v593 = vshll.u32 %v236, 16
      %v595 = vrot.slane %v593, 5
      %v596 = vor.u32 %v592, %v595
      %v597 = vrot.slane %v596, 4
      %v599 = vshll.u32 %v237, 16
      %v601 = vrot.slane %v599, 5
      %v602 = vsel %vm276, %v597, %v601
      %v603 = vshrl.u32 %v237, 16
      %v605 = vrot.slane %v603, 4
      %v606 = vor.u32 %v605, %v601
      %v607 = vrot.slane %v606, 4
      %v609 = vshll.u32 %v271, 16
      %v611 = vrot.slane %v609, 5
      %v612 = vsel %vm276, %v607, %v611
      %v614 = vshrl.u32 %v238, 16
      %v616 = vrot.slane %v614, 4
      %v617 = vshll.u32 %v238, 16
      %v619 = vrot.slane %v617, 5
      %v620 = vor.u32 %v616, %v619
      %v621 = vrot.slane %v620, 4
      %v623 = vshll.u32 %v239, 16
      %v625 = vrot.slane %v623, 5
      %v626 = vsel %vm276, %v621, %v625
      %v627 = vshrl.u32 %v239, 16
      %v629 = vrot.slane %v627, 4
      %v630 = vor.u32 %v629, %v625
      %v631 = vrot.slane %v630, 4
      %v633 = vshll.u32 %v272, 16
      %v635 = vrot.slane %v633, 5
      %v636 = vsel %vm276, %v631, %v635
      %v638 = vshrl.u32 %v240, 16
      %v640 = vrot.slane %v638, 4
      %v641 = vshll.u32 %v240, 16
      %v643 = vrot.slane %v641, 5
      %v644 = vor.u32 %v640, %v643
      %v645 = vrot.slane %v644, 4
      %v647 = vshll.u32 %v241, 16
      %v649 = vrot.slane %v647, 5
      %v650 = vsel %vm276, %v645, %v649
      %v651 = vshrl.u32 %v241, 16
      %v653 = vrot.slane %v651, 4
      %v654 = vor.u32 %v653, %v649
      %v655 = vrot.slane %v654, 4
      %v657 = vshll.u32 %v273, 16
      %v659 = vrot.slane %v657, 5
      %v660 = vsel %vm276, %v655, %v659
      %s661 = scalar_lea.vmem %s1, 64
      %v662 = vld [vmem:[%s661] sm:$0xf]
      %v663 = vld [vmem:[%s661 + $0x4] sm:$0xf]
      %v664 = vld [vmem:[%s661 + $0x8] sm:$0xf]
      %v665 = vld [vmem:[%s661 + $0xc] sm:$0xf]
      %v666 = vld [vmem:[%s661 + $0x10] sm:$0xf]
      %v667 = vld [vmem:[%s661 + $0x14] sm:$0xf]
      %v668 = vld [vmem:[%s661 + $0x18] sm:$0xf]
      %v669 = vld [vmem:[%s661 + $0x1c] sm:$0xf]
      %v670 = vld [vmem:[%s661 + $0x20] sm:$0xf]
      %v671 = vld [vmem:[%s661 + $0x24] sm:$0xf]
      %v672 = vld [vmem:[%s661 + $0x28] sm:$0xf]
      %v673 = vld [vmem:[%s661 + $0x2c] sm:$0xf]
      %v674 = vld [vmem:[%s661 + $0x30] sm:$0xf]
      %v675 = vld [vmem:[%s661 + $0x34] sm:$0xf]
      %v676 = vld [vmem:[%s661 + $0x38] sm:$0xf]
      %v677 = vld [vmem:[%s661 + $0x3c] sm:$0xf]
      %v678 = vunpack.c.l.b16 %v290
      %v679 = vunpack.c.l.b16 %v300
      %v680 = vunpack.c.l.b16 %v314
      %v681 = vunpack.c.l.b16 %v324
      %v682 = vunpack.c.l.b16 %v338
      %v683 = vunpack.c.l.b16 %v348
      %v684 = vunpack.c.l.b16 %v362
      %v685 = vunpack.c.l.b16 %v372
      %v686 = vunpack.c.l.b16 %v386
      %v687 = vunpack.c.l.b16 %v396
      %v688 = vunpack.c.l.b16 %v410
      %v689 = vunpack.c.l.b16 %v420
      %v690 = vunpack.c.l.b16 %v434
      %v691 = vunpack.c.l.b16 %v444
      %v692 = vunpack.c.l.b16 %v458
      %v693 = vunpack.c.l.b16 %v468
      %v694 = vunpack.c.l.b16 %v482
      %v695 = vunpack.c.l.b16 %v492
      %v696 = vunpack.c.l.b16 %v506
      %v697 = vunpack.c.l.b16 %v516
      %v698 = vunpack.c.l.b16 %v530
      %v699 = vunpack.c.l.b16 %v540
      %v700 = vunpack.c.l.b16 %v554
      %v701 = vunpack.c.l.b16 %v564
      %v702 = vunpack.c.l.b16 %v578
      %v703 = vunpack.c.l.b16 %v588
      %v704 = vunpack.c.l.b16 %v602
      %v705 = vunpack.c.l.b16 %v612
      %v706 = vunpack.c.l.b16 %v626
      %v707 = vunpack.c.l.b16 %v636
      %v708 = vunpack.c.l.b16 %v650
      %v709 = vunpack.c.l.b16 %v660
      %v710 = vpack.c.b16 %v679, %v678
      %v711 = vpack.c.b16 %v681, %v680
      %v712 = vpack.c.b16 %v683, %v682
      %v713 = vpack.c.b16 %v685, %v684
      %v714 = vpack.c.b16 %v687, %v686
      %v715 = vpack.c.b16 %v689, %v688
      %v716 = vpack.c.b16 %v691, %v690
      %v717 = vpack.c.b16 %v693, %v692
      %v718 = vpack.c.b16 %v695, %v694
      %v719 = vpack.c.b16 %v697, %v696
      %v720 = vpack.c.b16 %v699, %v698
      %v721 = vpack.c.b16 %v701, %v700
      %v722 = vpack.c.b16 %v703, %v702
      %v723 = vpack.c.b16 %v705, %v704
      %v724 = vpack.c.b16 %v707, %v706
      %v725 = vpack.c.b16 %v709, %v708
      %v758 = vunpack.c.l.b16 %v662
      %v759 = vunpack.c.l.b16 %v663
      %v760 = vunpack.c.l.b16 %v664
      %v761 = vunpack.c.l.b16 %v665
      %v762 = vunpack.c.l.b16 %v666
      %v763 = vunpack.c.l.b16 %v667
      %v764 = vunpack.c.l.b16 %v668
      %v765 = vunpack.c.l.b16 %v669
      %v766 = vunpack.c.l.b16 %v670
      %v767 = vunpack.c.l.b16 %v671
      %v768 = vunpack.c.l.b16 %v672
      %v769 = vunpack.c.l.b16 %v673
      %v770 = vunpack.c.l.b16 %v674
      %v771 = vunpack.c.l.b16 %v675
      %v772 = vunpack.c.l.b16 %v676
      %v773 = vunpack.c.l.b16 %v677
      %v774 = vpack.c.b16 %v759, %v758
      %v775 = vpack.c.b16 %v761, %v760
      %v776 = vpack.c.b16 %v763, %v762
      %v777 = vpack.c.b16 %v765, %v764
      %v778 = vpack.c.b16 %v767, %v766
      %v779 = vpack.c.b16 %v769, %v768
      %v780 = vpack.c.b16 %v771, %v770
      %v781 = vpack.c.b16 %v773, %v772
      %790 = vmatpush.bf16.msra.mxu0 %v781
      %791 = vmatpush.bf16.msra.mxu0 %v780
      %792 = vmatpush.bf16.msra.mxu0 %v779
      %793 = vmatpush.bf16.msra.mxu0 %v778
      %794 = vmatpush.bf16.msra.mxu0 %v777
      %795 = vmatpush.bf16.msra.mxu0 %v776
      %796 = vmatpush.bf16.msra.mxu0 %v775
      %797 = vmatpush.bf16.msra.mxu0 %v774
      %798 = vmatmul.bf16.gmra.mxu0 %v710
      %v799 = vpop.f32.mrf.mxu0
      %v800 = vadd.f32 0.0, %v799
      %v801 = vpop.f32.mrf.mxu0
      %v802 = vadd.f32 0.0, %v801
      %803 = vmatmul.bf16.gmra.mxu0 %v711
      %v804 = vpop.f32.mrf.mxu0
      %v805 = vadd.f32 0.0, %v804
      %v806 = vpop.f32.mrf.mxu0
      %v807 = vadd.f32 0.0, %v806
      %808 = vmatmul.bf16.gmra.mxu0 %v712
      %v809 = vpop.f32.mrf.mxu0
      %v810 = vadd.f32 0.0, %v809
      %v811 = vpop.f32.mrf.mxu0
      %v812 = vadd.f32 0.0, %v811
      %813 = vmatmul.bf16.gmra.mxu0 %v713
      %v814 = vpop.f32.mrf.mxu0
      %v815 = vadd.f32 0.0, %v814
      %v816 = vpop.f32.mrf.mxu0
      %v817 = vadd.f32 0.0, %v816
      %818 = vmatmul.bf16.gmra.mxu0 %v714
      %v819 = vpop.f32.mrf.mxu0
      %v820 = vadd.f32 0.0, %v819
      %v821 = vpop.f32.mrf.mxu0
      %v822 = vadd.f32 0.0, %v821
      %823 = vmatmul.bf16.gmra.mxu0 %v715
      %v824 = vpop.f32.mrf.mxu0
      %v825 = vadd.f32 0.0, %v824
      %v826 = vpop.f32.mrf.mxu0
      %v827 = vadd.f32 0.0, %v826
      %828 = vmatmul.bf16.gmra.mxu0 %v716
      %v829 = vpop.f32.mrf.mxu0
      %v830 = vadd.f32 0.0, %v829
      %v831 = vpop.f32.mrf.mxu0
      %v832 = vadd.f32 0.0, %v831
      %833 = vmatmul.bf16.gmra.mxu0 %v717
      %v834 = vpop.f32.mrf.mxu0
      %v835 = vadd.f32 0.0, %v834
      %v836 = vpop.f32.mrf.mxu0
      %v837 = vadd.f32 0.0, %v836
      %838 = vmatmul.bf16.gmra.mxu0 %v718
      %v839 = vpop.f32.mrf.mxu0
      %v840 = vadd.f32 0.0, %v839
      %v841 = vpop.f32.mrf.mxu0
      %v842 = vadd.f32 0.0, %v841
      %843 = vmatmul.bf16.gmra.mxu0 %v719
      %v844 = vpop.f32.mrf.mxu0
      %v845 = vadd.f32 0.0, %v844
      %v846 = vpop.f32.mrf.mxu0
      %v847 = vadd.f32 0.0, %v846
      %848 = vmatmul.bf16.gmra.mxu0 %v720
      %v849 = vpop.f32.mrf.mxu0
      %v850 = vadd.f32 0.0, %v849
      %v851 = vpop.f32.mrf.mxu0
      %v852 = vadd.f32 0.0, %v851
      %853 = vmatmul.bf16.gmra.mxu0 %v721
      %v854 = vpop.f32.mrf.mxu0
      %v855 = vadd.f32 0.0, %v854
      %v856 = vpop.f32.mrf.mxu0
      %v857 = vadd.f32 0.0, %v856
      %858 = vmatmul.bf16.gmra.mxu0 %v722
      %v859 = vpop.f32.mrf.mxu0
      %v860 = vadd.f32 0.0, %v859
      %v861 = vpop.f32.mrf.mxu0
      %v862 = vadd.f32 0.0, %v861
      %863 = vmatmul.bf16.gmra.mxu0 %v723
      %v864 = vpop.f32.mrf.mxu0
      %v865 = vadd.f32 0.0, %v864
      %v866 = vpop.f32.mrf.mxu0
      %v867 = vadd.f32 0.0, %v866
      %868 = vmatmul.bf16.gmra.mxu0 %v724
      %v869 = vpop.f32.mrf.mxu0
      %v870 = vadd.f32 0.0, %v869
      %v871 = vpop.f32.mrf.mxu0
      %v872 = vadd.f32 0.0, %v871
      %873 = vmatmul.bf16.gmra.mxu0 %v725
      %v874 = vpop.f32.mrf.mxu0
      %v875 = vadd.f32 0.0, %v874
      %v876 = vpop.f32.mrf.mxu0
      %v877 = vadd.f32 0.0, %v876
      %878 = vdwg.mxu0
      %v911 = vunpack.c.l.b16 %v210
      %v912 = vunpack.c.l.b16 %v211
      %v913 = vunpack.c.l.b16 %v212
      %v914 = vunpack.c.l.b16 %v213
      %v915 = vunpack.c.l.b16 %v214
      %v916 = vunpack.c.l.b16 %v215
      %v917 = vunpack.c.l.b16 %v216
      %v918 = vunpack.c.l.b16 %v217
      %v919 = vunpack.c.l.b16 %v218
      %v920 = vunpack.c.l.b16 %v219
      %v921 = vunpack.c.l.b16 %v220
      %v922 = vunpack.c.l.b16 %v221
      %v923 = vunpack.c.l.b16 %v222
      %v924 = vunpack.c.l.b16 %v223
      %v925 = vunpack.c.l.b16 %v224
      %v926 = vunpack.c.l.b16 %v225
      %v927 = vunpack.c.l.b16 %v226
      %v928 = vunpack.c.l.b16 %v227
      %v929 = vunpack.c.l.b16 %v228
      %v930 = vunpack.c.l.b16 %v229
      %v931 = vunpack.c.l.b16 %v230
      %v932 = vunpack.c.l.b16 %v231
      %v933 = vunpack.c.l.b16 %v232
      %v934 = vunpack.c.l.b16 %v233
      %v935 = vunpack.c.l.b16 %v234
      %v936 = vunpack.c.l.b16 %v235
      %v937 = vunpack.c.l.b16 %v236
      %v938 = vunpack.c.l.b16 %v237
      %v939 = vunpack.c.l.b16 %v238
      %v940 = vunpack.c.l.b16 %v239
      %v941 = vunpack.c.l.b16 %v240
      %v942 = vunpack.c.l.b16 %v241
      %v943 = vpack.c.b16 %v912, %v911
      %v944 = vpack.c.b16 %v914, %v913
      %v945 = vpack.c.b16 %v916, %v915
      %v946 = vpack.c.b16 %v918, %v917
      %v947 = vpack.c.b16 %v920, %v919
      %v948 = vpack.c.b16 %v922, %v921
      %v949 = vpack.c.b16 %v924, %v923
      %v950 = vpack.c.b16 %v926, %v925
      %v951 = vpack.c.b16 %v928, %v927
      %v952 = vpack.c.b16 %v930, %v929
      %v953 = vpack.c.b16 %v932, %v931
      %v954 = vpack.c.b16 %v934, %v933
      %v955 = vpack.c.b16 %v936, %v935
      %v956 = vpack.c.b16 %v938, %v937
      %v957 = vpack.c.b16 %v940, %v939
      %v958 = vpack.c.b16 %v942, %v941
      %v991 = vunpack.c.l.b16 %v242
      %v992 = vunpack.c.l.b16 %v243
      %v993 = vunpack.c.l.b16 %v244
      %v994 = vunpack.c.l.b16 %v245
      %v995 = vunpack.c.l.b16 %v246
      %v996 = vunpack.c.l.b16 %v247
      %v997 = vunpack.c.l.b16 %v248
      %v998 = vunpack.c.l.b16 %v249
      %v999 = vunpack.c.l.b16 %v250
      %v1000 = vunpack.c.l.b16 %v251
      %v1001 = vunpack.c.l.b16 %v252
      %v1002 = vunpack.c.l.b16 %v253
      %v1003 = vunpack.c.l.b16 %v254
      %v1004 = vunpack.c.l.b16 %v255
      %v1005 = vunpack.c.l.b16 %v256
      %v1006 = vunpack.c.l.b16 %v257
      %v1007 = vpack.c.b16 %v992, %v991
      %v1008 = vpack.c.b16 %v994, %v993
      %v1009 = vpack.c.b16 %v996, %v995
      %v1010 = vpack.c.b16 %v998, %v997
      %v1011 = vpack.c.b16 %v1000, %v999
      %v1012 = vpack.c.b16 %v1002, %v1001
      %v1013 = vpack.c.b16 %v1004, %v1003
      %v1014 = vpack.c.b16 %v1006, %v1005
      %1023 = vmatpush.bf16.msra.mxu0 %v1014
      %1024 = vmatpush.bf16.msra.mxu0 %v1013
      %1025 = vmatpush.bf16.msra.mxu0 %v1012
      %1026 = vmatpush.bf16.msra.mxu0 %v1011
      %1027 = vmatpush.bf16.msra.mxu0 %v1010
      %1028 = vmatpush.bf16.msra.mxu0 %v1009
      %1029 = vmatpush.bf16.msra.mxu0 %v1008
      %1030 = vmatpush.bf16.msra.mxu0 %v1007
      %1031 = vmatmul.bf16.gmra.mxu0 %v943
      %v1032 = vpop.f32.mrf.mxu0
      %v1033 = vadd.f32 %v800, %v1032
      %v1034 = vpop.f32.mrf.mxu0
      %v1035 = vadd.f32 %v802, %v1034
      %1036 = vmatmul.bf16.gmra.mxu0 %v944
      %v1037 = vpop.f32.mrf.mxu0
      %v1038 = vadd.f32 %v805, %v1037
      %v1039 = vpop.f32.mrf.mxu0
      %v1040 = vadd.f32 %v807, %v1039
      %1041 = vmatmul.bf16.gmra.mxu0 %v945
      %v1042 = vpop.f32.mrf.mxu0
      %v1043 = vadd.f32 %v810, %v1042
      %v1044 = vpop.f32.mrf.mxu0
      %v1045 = vadd.f32 %v812, %v1044
      %1046 = vmatmul.bf16.gmra.mxu0 %v946
      %v1047 = vpop.f32.mrf.mxu0
      %v1048 = vadd.f32 %v815, %v1047
      %v1049 = vpop.f32.mrf.mxu0
      %v1050 = vadd.f32 %v817, %v1049
      %1051 = vmatmul.bf16.gmra.mxu0 %v947
      %v1052 = vpop.f32.mrf.mxu0
      %v1053 = vadd.f32 %v820, %v1052
      %v1054 = vpop.f32.mrf.mxu0
      %v1055 = vadd.f32 %v822, %v1054
      %1056 = vmatmul.bf16.gmra.mxu0 %v948
      %v1057 = vpop.f32.mrf.mxu0
      %v1058 = vadd.f32 %v825, %v1057
      %v1059 = vpop.f32.mrf.mxu0
      %v1060 = vadd.f32 %v827, %v1059
      %1061 = vmatmul.bf16.gmra.mxu0 %v949
      %v1062 = vpop.f32.mrf.mxu0
      %v1063 = vadd.f32 %v830, %v1062
      %v1064 = vpop.f32.mrf.mxu0
      %v1065 = vadd.f32 %v832, %v1064
      %1066 = vmatmul.bf16.gmra.mxu0 %v950
      %v1067 = vpop.f32.mrf.mxu0
      %v1068 = vadd.f32 %v835, %v1067
      %v1069 = vpop.f32.mrf.mxu0
      %v1070 = vadd.f32 %v837, %v1069
      %1071 = vmatmul.bf16.gmra.mxu0 %v951
      %v1072 = vpop.f32.mrf.mxu0
      %v1073 = vadd.f32 %v840, %v1072
      %v1074 = vpop.f32.mrf.mxu0
      %v1075 = vadd.f32 %v842, %v1074
      %1076 = vmatmul.bf16.gmra.mxu0 %v952
      %v1077 = vpop.f32.mrf.mxu0
      %v1078 = vadd.f32 %v845, %v1077
      %v1079 = vpop.f32.mrf.mxu0
      %v1080 = vadd.f32 %v847, %v1079
      %1081 = vmatmul.bf16.gmra.mxu0 %v953
      %v1082 = vpop.f32.mrf.mxu0
      %v1083 = vadd.f32 %v850, %v1082
      %v1084 = vpop.f32.mrf.mxu0
      %v1085 = vadd.f32 %v852, %v1084
      %1086 = vmatmul.bf16.gmra.mxu0 %v954
      %v1087 = vpop.f32.mrf.mxu0
      %v1088 = vadd.f32 %v855, %v1087
      %v1089 = vpop.f32.mrf.mxu0
      %v1090 = vadd.f32 %v857, %v1089
      %1091 = vmatmul.bf16.gmra.mxu0 %v955
      %v1092 = vpop.f32.mrf.mxu0
      %v1093 = vadd.f32 %v860, %v1092
      %v1094 = vpop.f32.mrf.mxu0
      %v1095 = vadd.f32 %v862, %v1094
      %1096 = vmatmul.bf16.gmra.mxu0 %v956
      %v1097 = vpop.f32.mrf.mxu0
      %v1098 = vadd.f32 %v865, %v1097
      %v1099 = vpop.f32.mrf.mxu0
      %v1100 = vadd.f32 %v867, %v1099
      %1101 = vmatmul.bf16.gmra.mxu0 %v957
      %v1102 = vpop.f32.mrf.mxu0
      %v1103 = vadd.f32 %v870, %v1102
      %v1104 = vpop.f32.mrf.mxu0
      %v1105 = vadd.f32 %v872, %v1104
      %1106 = vmatmul.bf16.gmra.mxu0 %v958
      %v1107 = vpop.f32.mrf.mxu0
      %v1108 = vadd.f32 %v875, %v1107
      %v1109 = vpop.f32.mrf.mxu0
      %v1110 = vadd.f32 %v877, %v1109
      %1111 = vdwg.mxu0
      %v1112 = vld [vmem:[%s198] sm:$0xe]
      %v1113 = vld [vmem:[%s198 + $0xc] sm:$0xe]
      %v1114 = vld [vmem:[%s198 + $0x18] sm:$0xe]
      %v1115 = vld [vmem:[%s198 + $0x24] sm:$0xe]
      %v1116 = vld [vmem:[%s198 + $0x30] sm:$0xe]
      %v1117 = vld [vmem:[%s198 + $0x3c] sm:$0xe]
      %v1118 = vld [vmem:[%s198 + $0x48] sm:$0xe]
      %v1119 = vld [vmem:[%s198 + $0x54] sm:$0xe]
      %v1120 = vld [vmem:[%s198 + $0x60] sm:$0xe]
      %v1121 = vld [vmem:[%s198 + $0x6c] sm:$0xe]
      %v1122 = vld [vmem:[%s198 + $0x78] sm:$0xe]
      %v1123 = vld [vmem:[%s198 + $0x84] sm:$0xe]
      %v1124 = vld [vmem:[%s198 + $0x90] sm:$0xe]
      %v1125 = vld [vmem:[%s198 + $0x9c] sm:$0xe]
      %v1126 = vld [vmem:[%s198 + $0xa8] sm:$0xe]
      %v1127 = vld [vmem:[%s198 + $0xb4] sm:$0xe]
      %vm1160 = vcmask 1042432
      %vm1161 = vcmask 1046532
      %vm1162 = vmor %vm1160, %vm1161
      %v1163 = vrot.slane %v1112, 5
      %v1164 = vrot.slane %v1163, 4
      %v1165 = vrot.slane %v211, 5
      %v1166 = vsel %vm1162, %v1164, %v1165
      %v1167 = vrot.slane %v1165, 4
      %v1168 = vrot.slane %v258, 5
      %v1169 = vsel %vm1162, %v1167, %v1168
      %v1170 = vrot.slane %v1113, 5
      %v1171 = vrot.slane %v1170, 4
      %v1172 = vrot.slane %v213, 5
      %v1173 = vsel %vm1162, %v1171, %v1172
      %v1174 = vrot.slane %v1172, 4
      %v1175 = vrot.slane %v259, 5
      %v1176 = vsel %vm1162, %v1174, %v1175
      %v1177 = vrot.slane %v1114, 5
      %v1178 = vrot.slane %v1177, 4
      %v1179 = vrot.slane %v215, 5
      %v1180 = vsel %vm1162, %v1178, %v1179
      %v1181 = vrot.slane %v1179, 4
      %v1182 = vrot.slane %v260, 5
      %v1183 = vsel %vm1162, %v1181, %v1182
      %v1184 = vrot.slane %v1115, 5
      %v1185 = vrot.slane %v1184, 4
      %v1186 = vrot.slane %v217, 5
      %v1187 = vsel %vm1162, %v1185, %v1186
      %v1188 = vrot.slane %v1186, 4
      %v1189 = vrot.slane %v261, 5
      %v1190 = vsel %vm1162, %v1188, %v1189
      %v1191 = vrot.slane %v1116, 5
      %v1192 = vrot.slane %v1191, 4
      %v1193 = vrot.slane %v219, 5
      %v1194 = vsel %vm1162, %v1192, %v1193
      %v1195 = vrot.slane %v1193, 4
      %v1196 = vrot.slane %v262, 5
      %v1197 = vsel %vm1162, %v1195, %v1196
      %v1198 = vrot.slane %v1117, 5
      %v1199 = vrot.slane %v1198, 4
      %v1200 = vrot.slane %v221, 5
      %v1201 = vsel %vm1162, %v1199, %v1200
      %v1202 = vrot.slane %v1200, 4
      %v1203 = vrot.slane %v263, 5
      %v1204 = vsel %vm1162, %v1202, %v1203
      %v1205 = vrot.slane %v1118, 5
      %v1206 = vrot.slane %v1205, 4
      %v1207 = vrot.slane %v223, 5
      %v1208 = vsel %vm1162, %v1206, %v1207
      %v1209 = vrot.slane %v1207, 4
      %v1210 = vrot.slane %v264, 5
      %v1211 = vsel %vm1162, %v1209, %v1210
      %v1212 = vrot.slane %v1119, 5
      %v1213 = vrot.slane %v1212, 4
      %v1214 = vrot.slane %v225, 5
      %v1215 = vsel %vm1162, %v1213, %v1214
      %v1216 = vrot.slane %v1214, 4
      %v1217 = vrot.slane %v265, 5
      %v1218 = vsel %vm1162, %v1216, %v1217
      %v1219 = vrot.slane %v1120, 5
      %v1220 = vrot.slane %v1219, 4
      %v1221 = vrot.slane %v227, 5
      %v1222 = vsel %vm1162, %v1220, %v1221
      %v1223 = vrot.slane %v1221, 4
      %v1224 = vrot.slane %v266, 5
      %v1225 = vsel %vm1162, %v1223, %v1224
      %v1226 = vrot.slane %v1121, 5
      %v1227 = vrot.slane %v1226, 4
      %v1228 = vrot.slane %v229, 5
      %v1229 = vsel %vm1162, %v1227, %v1228
      %v1230 = vrot.slane %v1228, 4
      %v1231 = vrot.slane %v267, 5
      %v1232 = vsel %vm1162, %v1230, %v1231
      %v1233 = vrot.slane %v1122, 5
      %v1234 = vrot.slane %v1233, 4
      %v1235 = vrot.slane %v231, 5
      %v1236 = vsel %vm1162, %v1234, %v1235
      %v1237 = vrot.slane %v1235, 4
      %v1238 = vrot.slane %v268, 5
      %v1239 = vsel %vm1162, %v1237, %v1238
      %v1240 = vrot.slane %v1123, 5
      %v1241 = vrot.slane %v1240, 4
      %v1242 = vrot.slane %v233, 5
      %v1243 = vsel %vm1162, %v1241, %v1242
      %v1244 = vrot.slane %v1242, 4
      %v1245 = vrot.slane %v269, 5
      %v1246 = vsel %vm1162, %v1244, %v1245
      %v1247 = vrot.slane %v1124, 5
      %v1248 = vrot.slane %v1247, 4
      %v1249 = vrot.slane %v235, 5
      %v1250 = vsel %vm1162, %v1248, %v1249
      %v1251 = vrot.slane %v1249, 4
      %v1252 = vrot.slane %v270, 5
      %v1253 = vsel %vm1162, %v1251, %v1252
      %v1254 = vrot.slane %v1125, 5
      %v1255 = vrot.slane %v1254, 4
      %v1256 = vrot.slane %v237, 5
      %v1257 = vsel %vm1162, %v1255, %v1256
      %v1258 = vrot.slane %v1256, 4
      %v1259 = vrot.slane %v271, 5
      %v1260 = vsel %vm1162, %v1258, %v1259
      %v1261 = vrot.slane %v1126, 5
      %v1262 = vrot.slane %v1261, 4
      %v1263 = vrot.slane %v239, 5
      %v1264 = vsel %vm1162, %v1262, %v1263
      %v1265 = vrot.slane %v1263, 4
      %v1266 = vrot.slane %v272, 5
      %v1267 = vsel %vm1162, %v1265, %v1266
      %v1268 = vrot.slane %v1127, 5
      %v1269 = vrot.slane %v1268, 4
      %v1270 = vrot.slane %v241, 5
      %v1271 = vsel %vm1162, %v1269, %v1270
      %v1272 = vrot.slane %v1270, 4
      %v1273 = vrot.slane %v273, 5
      %v1274 = vsel %vm1162, %v1272, %v1273
      %s1275 = scalar_lea.vmem %s1, 128
      %v1276 = vld [vmem:[%s1275] sm:$0xf]
      %v1277 = vld [vmem:[%s1275 + $0x4] sm:$0xf]
      %v1278 = vld [vmem:[%s1275 + $0x8] sm:$0xf]
      %v1279 = vld [vmem:[%s1275 + $0xc] sm:$0xf]
      %v1280 = vld [vmem:[%s1275 + $0x10] sm:$0xf]
      %v1281 = vld [vmem:[%s1275 + $0x14] sm:$0xf]
      %v1282 = vld [vmem:[%s1275 + $0x18] sm:$0xf]
      %v1283 = vld [vmem:[%s1275 + $0x1c] sm:$0xf]
      %v1284 = vld [vmem:[%s1275 + $0x20] sm:$0xf]
      %v1285 = vld [vmem:[%s1275 + $0x24] sm:$0xf]
      %v1286 = vld [vmem:[%s1275 + $0x28] sm:$0xf]
      %v1287 = vld [vmem:[%s1275 + $0x2c] sm:$0xf]
      %v1288 = vld [vmem:[%s1275 + $0x30] sm:$0xf]
      %v1289 = vld [vmem:[%s1275 + $0x34] sm:$0xf]
      %v1290 = vld [vmem:[%s1275 + $0x38] sm:$0xf]
      %v1291 = vld [vmem:[%s1275 + $0x3c] sm:$0xf]
      %v1292 = vunpack.c.l.b16 %v1166
      %v1293 = vunpack.c.l.b16 %v1169
      %v1294 = vunpack.c.l.b16 %v1173
      %v1295 = vunpack.c.l.b16 %v1176
      %v1296 = vunpack.c.l.b16 %v1180
      %v1297 = vunpack.c.l.b16 %v1183
      %v1298 = vunpack.c.l.b16 %v1187
      %v1299 = vunpack.c.l.b16 %v1190
      %v1300 = vunpack.c.l.b16 %v1194
      %v1301 = vunpack.c.l.b16 %v1197
      %v1302 = vunpack.c.l.b16 %v1201
      %v1303 = vunpack.c.l.b16 %v1204
      %v1304 = vunpack.c.l.b16 %v1208
      %v1305 = vunpack.c.l.b16 %v1211
      %v1306 = vunpack.c.l.b16 %v1215
      %v1307 = vunpack.c.l.b16 %v1218
      %v1308 = vunpack.c.l.b16 %v1222
      %v1309 = vunpack.c.l.b16 %v1225
      %v1310 = vunpack.c.l.b16 %v1229
      %v1311 = vunpack.c.l.b16 %v1232
      %v1312 = vunpack.c.l.b16 %v1236
      %v1313 = vunpack.c.l.b16 %v1239
      %v1314 = vunpack.c.l.b16 %v1243
      %v1315 = vunpack.c.l.b16 %v1246
      %v1316 = vunpack.c.l.b16 %v1250
      %v1317 = vunpack.c.l.b16 %v1253
      %v1318 = vunpack.c.l.b16 %v1257
      %v1319 = vunpack.c.l.b16 %v1260
      %v1320 = vunpack.c.l.b16 %v1264
      %v1321 = vunpack.c.l.b16 %v1267
      %v1322 = vunpack.c.l.b16 %v1271
      %v1323 = vunpack.c.l.b16 %v1274
      %v1324 = vpack.c.b16 %v1293, %v1292
      %v1325 = vpack.c.b16 %v1295, %v1294
      %v1326 = vpack.c.b16 %v1297, %v1296
      %v1327 = vpack.c.b16 %v1299, %v1298
      %v1328 = vpack.c.b16 %v1301, %v1300
      %v1329 = vpack.c.b16 %v1303, %v1302
      %v1330 = vpack.c.b16 %v1305, %v1304
      %v1331 = vpack.c.b16 %v1307, %v1306
      %v1332 = vpack.c.b16 %v1309, %v1308
      %v1333 = vpack.c.b16 %v1311, %v1310
      %v1334 = vpack.c.b16 %v1313, %v1312
      %v1335 = vpack.c.b16 %v1315, %v1314
      %v1336 = vpack.c.b16 %v1317, %v1316
      %v1337 = vpack.c.b16 %v1319, %v1318
      %v1338 = vpack.c.b16 %v1321, %v1320
      %v1339 = vpack.c.b16 %v1323, %v1322
      %v1372 = vunpack.c.l.b16 %v1276
      %v1373 = vunpack.c.l.b16 %v1277
      %v1374 = vunpack.c.l.b16 %v1278
      %v1375 = vunpack.c.l.b16 %v1279
      %v1376 = vunpack.c.l.b16 %v1280
      %v1377 = vunpack.c.l.b16 %v1281
      %v1378 = vunpack.c.l.b16 %v1282
      %v1379 = vunpack.c.l.b16 %v1283
      %v1380 = vunpack.c.l.b16 %v1284
      %v1381 = vunpack.c.l.b16 %v1285
      %v1382 = vunpack.c.l.b16 %v1286
      %v1383 = vunpack.c.l.b16 %v1287
      %v1384 = vunpack.c.l.b16 %v1288
      %v1385 = vunpack.c.l.b16 %v1289
      %v1386 = vunpack.c.l.b16 %v1290
      %v1387 = vunpack.c.l.b16 %v1291
      %v1388 = vpack.c.b16 %v1373, %v1372
      %v1389 = vpack.c.b16 %v1375, %v1374
      %v1390 = vpack.c.b16 %v1377, %v1376
      %v1391 = vpack.c.b16 %v1379, %v1378
      %v1392 = vpack.c.b16 %v1381, %v1380
      %v1393 = vpack.c.b16 %v1383, %v1382
      %v1394 = vpack.c.b16 %v1385, %v1384
      %v1395 = vpack.c.b16 %v1387, %v1386
      %1404 = vmatpush.bf16.msra.mxu0 %v1395
      %1405 = vmatpush.bf16.msra.mxu0 %v1394
      %1406 = vmatpush.bf16.msra.mxu0 %v1393
      %1407 = vmatpush.bf16.msra.mxu0 %v1392
      %1408 = vmatpush.bf16.msra.mxu0 %v1391
      %1409 = vmatpush.bf16.msra.mxu0 %v1390
      %1410 = vmatpush.bf16.msra.mxu0 %v1389
      %1411 = vmatpush.bf16.msra.mxu0 %v1388
      %1412 = vmatmul.bf16.gmra.mxu0 %v1324
      %v1413 = vpop.f32.mrf.mxu0
      %v1414 = vadd.f32 0.0, %v1413
      %v1415 = vpop.f32.mrf.mxu0
      %v1416 = vadd.f32 0.0, %v1415
      %1417 = vmatmul.bf16.gmra.mxu0 %v1325
      %v1418 = vpop.f32.mrf.mxu0
      %v1419 = vadd.f32 0.0, %v1418
      %v1420 = vpop.f32.mrf.mxu0
      %v1421 = vadd.f32 0.0, %v1420
      %1422 = vmatmul.bf16.gmra.mxu0 %v1326
      %v1423 = vpop.f32.mrf.mxu0
      %v1424 = vadd.f32 0.0, %v1423
      %v1425 = vpop.f32.mrf.mxu0
      %v1426 = vadd.f32 0.0, %v1425
      %1427 = vmatmul.bf16.gmra.mxu0 %v1327
      %v1428 = vpop.f32.mrf.mxu0
      %v1429 = vadd.f32 0.0, %v1428
      %v1430 = vpop.f32.mrf.mxu0
      %v1431 = vadd.f32 0.0, %v1430
      %1432 = vmatmul.bf16.gmra.mxu0 %v1328
      %v1433 = vpop.f32.mrf.mxu0
      %v1434 = vadd.f32 0.0, %v1433
      %v1435 = vpop.f32.mrf.mxu0
      %v1436 = vadd.f32 0.0, %v1435
      %1437 = vmatmul.bf16.gmra.mxu0 %v1329
      %v1438 = vpop.f32.mrf.mxu0
      %v1439 = vadd.f32 0.0, %v1438
      %v1440 = vpop.f32.mrf.mxu0
      %v1441 = vadd.f32 0.0, %v1440
      %1442 = vmatmul.bf16.gmra.mxu0 %v1330
      %v1443 = vpop.f32.mrf.mxu0
      %v1444 = vadd.f32 0.0, %v1443
      %v1445 = vpop.f32.mrf.mxu0
      %v1446 = vadd.f32 0.0, %v1445
      %1447 = vmatmul.bf16.gmra.mxu0 %v1331
      %v1448 = vpop.f32.mrf.mxu0
      %v1449 = vadd.f32 0.0, %v1448
      %v1450 = vpop.f32.mrf.mxu0
      %v1451 = vadd.f32 0.0, %v1450
      %1452 = vmatmul.bf16.gmra.mxu0 %v1332
      %v1453 = vpop.f32.mrf.mxu0
      %v1454 = vadd.f32 0.0, %v1453
      %v1455 = vpop.f32.mrf.mxu0
      %v1456 = vadd.f32 0.0, %v1455
      %1457 = vmatmul.bf16.gmra.mxu0 %v1333
      %v1458 = vpop.f32.mrf.mxu0
      %v1459 = vadd.f32 0.0, %v1458
      %v1460 = vpop.f32.mrf.mxu0
      %v1461 = vadd.f32 0.0, %v1460
      %1462 = vmatmul.bf16.gmra.mxu0 %v1334
      %v1463 = vpop.f32.mrf.mxu0
      %v1464 = vadd.f32 0.0, %v1463
      %v1465 = vpop.f32.mrf.mxu0
      %v1466 = vadd.f32 0.0, %v1465
      %1467 = vmatmul.bf16.gmra.mxu0 %v1335
      %v1468 = vpop.f32.mrf.mxu0
      %v1469 = vadd.f32 0.0, %v1468
      %v1470 = vpop.f32.mrf.mxu0
      %v1471 = vadd.f32 0.0, %v1470
      %1472 = vmatmul.bf16.gmra.mxu0 %v1336
      %v1473 = vpop.f32.mrf.mxu0
      %v1474 = vadd.f32 0.0, %v1473
      %v1475 = vpop.f32.mrf.mxu0
      %v1476 = vadd.f32 0.0, %v1475
      %1477 = vmatmul.bf16.gmra.mxu0 %v1337
      %v1478 = vpop.f32.mrf.mxu0
      %v1479 = vadd.f32 0.0, %v1478
      %v1480 = vpop.f32.mrf.mxu0
      %v1481 = vadd.f32 0.0, %v1480
      %1482 = vmatmul.bf16.gmra.mxu0 %v1338
      %v1483 = vpop.f32.mrf.mxu0
      %v1484 = vadd.f32 0.0, %v1483
      %v1485 = vpop.f32.mrf.mxu0
      %v1486 = vadd.f32 0.0, %v1485
      %1487 = vmatmul.bf16.gmra.mxu0 %v1339
      %v1488 = vpop.f32.mrf.mxu0
      %v1489 = vadd.f32 0.0, %v1488
      %v1490 = vpop.f32.mrf.mxu0
      %v1491 = vadd.f32 0.0, %v1490
      %1492 = vdwg.mxu0
      %v1493 = vadd.f32 %v1033, %v1414
      %v1494 = vadd.f32 %v1035, %v1416
      %v1495 = vadd.f32 %v1038, %v1419
      %v1496 = vadd.f32 %v1040, %v1421
      %v1497 = vadd.f32 %v1043, %v1424
      %v1498 = vadd.f32 %v1045, %v1426
      %v1499 = vadd.f32 %v1048, %v1429
      %v1500 = vadd.f32 %v1050, %v1431
      %v1501 = vadd.f32 %v1053, %v1434
      %v1502 = vadd.f32 %v1055, %v1436
      %v1503 = vadd.f32 %v1058, %v1439
      %v1504 = vadd.f32 %v1060, %v1441
      %v1505 = vadd.f32 %v1063, %v1444
      %v1506 = vadd.f32 %v1065, %v1446
      %v1507 = vadd.f32 %v1068, %v1449
      %v1508 = vadd.f32 %v1070, %v1451
      %v1509 = vadd.f32 %v1073, %v1454
      %v1510 = vadd.f32 %v1075, %v1456
      %v1511 = vadd.f32 %v1078, %v1459
      %v1512 = vadd.f32 %v1080, %v1461
      %v1513 = vadd.f32 %v1083, %v1464
      %v1514 = vadd.f32 %v1085, %v1466
      %v1515 = vadd.f32 %v1088, %v1469
      %v1516 = vadd.f32 %v1090, %v1471
      %v1517 = vadd.f32 %v1093, %v1474
      %v1518 = vadd.f32 %v1095, %v1476
      %v1519 = vadd.f32 %v1098, %v1479
      %v1520 = vadd.f32 %v1100, %v1481
      %v1521 = vadd.f32 %v1103, %v1484
      %v1522 = vadd.f32 %v1105, %v1486
      %v1523 = vadd.f32 %v1108, %v1489
      %v1524 = vadd.f32 %v1110, %v1491
      %s1525 = scalar_lea.vmem %s198, 12
      %v1526 = vld [vmem:[%s1525] sm:$0xf]
      %v1527 = vld [vmem:[%s1525 + $0x4] sm:$0xf]
      %v1528 = vld [vmem:[%s1525 + $0xc] sm:$0xf]
      %v1529 = vld [vmem:[%s1525 + $0x10] sm:$0xf]
      %v1530 = vld [vmem:[%s1525 + $0x18] sm:$0xf]
      %v1531 = vld [vmem:[%s1525 + $0x1c] sm:$0xf]
      %v1532 = vld [vmem:[%s1525 + $0x24] sm:$0xf]
      %v1533 = vld [vmem:[%s1525 + $0x28] sm:$0xf]
      %v1534 = vld [vmem:[%s1525 + $0x30] sm:$0xf]
      %v1535 = vld [vmem:[%s1525 + $0x34] sm:$0xf]
      %v1536 = vld [vmem:[%s1525 + $0x3c] sm:$0xf]
      %v1537 = vld [vmem:[%s1525 + $0x40] sm:$0xf]
      %v1538 = vld [vmem:[%s1525 + $0x48] sm:$0xf]
      %v1539 = vld [vmem:[%s1525 + $0x4c] sm:$0xf]
      %v1540 = vld [vmem:[%s1525 + $0x54] sm:$0xf]
      %v1541 = vld [vmem:[%s1525 + $0x58] sm:$0xf]
      %v1542 = vld [vmem:[%s1525 + $0x60] sm:$0xf]
      %v1543 = vld [vmem:[%s1525 + $0x64] sm:$0xf]
      %v1544 = vld [vmem:[%s1525 + $0x6c] sm:$0xf]
      %v1545 = vld [vmem:[%s1525 + $0x70] sm:$0xf]
      %v1546 = vld [vmem:[%s1525 + $0x78] sm:$0xf]
      %v1547 = vld [vmem:[%s1525 + $0x7c] sm:$0xf]
      %v1548 = vld [vmem:[%s1525 + $0x84] sm:$0xf]
      %v1549 = vld [vmem:[%s1525 + $0x88] sm:$0xf]
      %v1550 = vld [vmem:[%s1525 + $0x90] sm:$0xf]
      %v1551 = vld [vmem:[%s1525 + $0x94] sm:$0xf]
      %v1552 = vld [vmem:[%s1525 + $0x9c] sm:$0xf]
      %v1553 = vld [vmem:[%s1525 + $0xa0] sm:$0xf]
      %v1554 = vld [vmem:[%s1525 + $0xa8] sm:$0xf]
      %v1555 = vld [vmem:[%s1525 + $0xac] sm:$0xf]
      %v1556 = vld [vmem:[%s1525 + $0xb4] sm:$0xf]
      %v1557 = vld [vmem:[%s1525 + $0xb8] sm:$0xf]
      %s1558 = scalar_lea.vmem %s1, 192
      %v1559 = vld [vmem:[%s1558] sm:$0xf]
      %v1560 = vld [vmem:[%s1558 + $0x4] sm:$0xf]
      %v1561 = vld [vmem:[%s1558 + $0x8] sm:$0xf]
      %v1562 = vld [vmem:[%s1558 + $0xc] sm:$0xf]
      %v1563 = vld [vmem:[%s1558 + $0x10] sm:$0xf]
      %v1564 = vld [vmem:[%s1558 + $0x14] sm:$0xf]
      %v1565 = vld [vmem:[%s1558 + $0x18] sm:$0xf]
      %v1566 = vld [vmem:[%s1558 + $0x1c] sm:$0xf]
      %v1567 = vld [vmem:[%s1558 + $0x20] sm:$0xf]
      %v1568 = vld [vmem:[%s1558 + $0x24] sm:$0xf]
      %v1569 = vld [vmem:[%s1558 + $0x28] sm:$0xf]
      %v1570 = vld [vmem:[%s1558 + $0x2c] sm:$0xf]
      %v1571 = vld [vmem:[%s1558 + $0x30] sm:$0xf]
      %v1572 = vld [vmem:[%s1558 + $0x34] sm:$0xf]
      %v1573 = vld [vmem:[%s1558 + $0x38] sm:$0xf]
      %v1574 = vld [vmem:[%s1558 + $0x3c] sm:$0xf]
      %v1607 = vunpack.c.l.b16 %v1526
      %v1608 = vunpack.c.l.b16 %v1527
      %v1609 = vunpack.c.l.b16 %v1528
      %v1610 = vunpack.c.l.b16 %v1529
      %v1611 = vunpack.c.l.b16 %v1530
      %v1612 = vunpack.c.l.b16 %v1531
      %v1613 = vunpack.c.l.b16 %v1532
      %v1614 = vunpack.c.l.b16 %v1533
      %v1615 = vunpack.c.l.b16 %v1534
      %v1616 = vunpack.c.l.b16 %v1535
      %v1617 = vunpack.c.l.b16 %v1536
      %v1618 = vunpack.c.l.b16 %v1537
      %v1619 = vunpack.c.l.b16 %v1538
      %v1620 = vunpack.c.l.b16 %v1539
      %v1621 = vunpack.c.l.b16 %v1540
      %v1622 = vunpack.c.l.b16 %v1541
      %v1623 = vunpack.c.l.b16 %v1542
      %v1624 = vunpack.c.l.b16 %v1543
      %v1625 = vunpack.c.l.b16 %v1544
      %v1626 = vunpack.c.l.b16 %v1545
      %v1627 = vunpack.c.l.b16 %v1546
      %v1628 = vunpack.c.l.b16 %v1547
      %v1629 = vunpack.c.l.b16 %v1548
      %v1630 = vunpack.c.l.b16 %v1549
      %v1631 = vunpack.c.l.b16 %v1550
      %v1632 = vunpack.c.l.b16 %v1551
      %v1633 = vunpack.c.l.b16 %v1552
      %v1634 = vunpack.c.l.b16 %v1553
      %v1635 = vunpack.c.l.b16 %v1554
      %v1636 = vunpack.c.l.b16 %v1555
      %v1637 = vunpack.c.l.b16 %v1556
      %v1638 = vunpack.c.l.b16 %v1557
      %v1639 = vpack.c.b16 %v1608, %v1607
      %v1640 = vpack.c.b16 %v1610, %v1609
      %v1641 = vpack.c.b16 %v1612, %v1611
      %v1642 = vpack.c.b16 %v1614, %v1613
      %v1643 = vpack.c.b16 %v1616, %v1615
      %v1644 = vpack.c.b16 %v1618, %v1617
      %v1645 = vpack.c.b16 %v1620, %v1619
      %v1646 = vpack.c.b16 %v1622, %v1621
      %v1647 = vpack.c.b16 %v1624, %v1623
      %v1648 = vpack.c.b16 %v1626, %v1625
      %v1649 = vpack.c.b16 %v1628, %v1627
      %v1650 = vpack.c.b16 %v1630, %v1629
      %v1651 = vpack.c.b16 %v1632, %v1631
      %v1652 = vpack.c.b16 %v1634, %v1633
      %v1653 = vpack.c.b16 %v1636, %v1635
      %v1654 = vpack.c.b16 %v1638, %v1637
      %v1687 = vunpack.c.l.b16 %v1559
      %v1688 = vunpack.c.l.b16 %v1560
      %v1689 = vunpack.c.l.b16 %v1561
      %v1690 = vunpack.c.l.b16 %v1562
      %v1691 = vunpack.c.l.b16 %v1563
      %v1692 = vunpack.c.l.b16 %v1564
      %v1693 = vunpack.c.l.b16 %v1565
      %v1694 = vunpack.c.l.b16 %v1566
      %v1695 = vunpack.c.l.b16 %v1567
      %v1696 = vunpack.c.l.b16 %v1568
      %v1697 = vunpack.c.l.b16 %v1569
      %v1698 = vunpack.c.l.b16 %v1570
      %v1699 = vunpack.c.l.b16 %v1571
      %v1700 = vunpack.c.l.b16 %v1572
      %v1701 = vunpack.c.l.b16 %v1573
      %v1702 = vunpack.c.l.b16 %v1574
      %v1703 = vpack.c.b16 %v1688, %v1687
      %v1704 = vpack.c.b16 %v1690, %v1689
      %v1705 = vpack.c.b16 %v1692, %v1691
      %v1706 = vpack.c.b16 %v1694, %v1693
      %v1707 = vpack.c.b16 %v1696, %v1695
      %v1708 = vpack.c.b16 %v1698, %v1697
      %v1709 = vpack.c.b16 %v1700, %v1699
      %v1710 = vpack.c.b16 %v1702, %v1701
      %1719 = vmatpush.bf16.msra.mxu0 %v1710
      %1720 = vmatpush.bf16.msra.mxu0 %v1709
      %1721 = vmatpush.bf16.msra.mxu0 %v1708
      %1722 = vmatpush.bf16.msra.mxu0 %v1707
      %1723 = vmatpush.bf16.msra.mxu0 %v1706
      %1724 = vmatpush.bf16.msra.mxu0 %v1705
      %1725 = vmatpush.bf16.msra.mxu0 %v1704
      %1726 = vmatpush.bf16.msra.mxu0 %v1703
      %1727 = vmatmul.bf16.gmra.mxu0 %v1639
      %v1728 = vpop.f32.mrf.mxu0
      %v1729 = vadd.f32 0.0, %v1728
      %v1730 = vpop.f32.mrf.mxu0
      %v1731 = vadd.f32 0.0, %v1730
      %1732 = vmatmul.bf16.gmra.mxu0 %v1640
      %v1733 = vpop.f32.mrf.mxu0
      %v1734 = vadd.f32 0.0, %v1733
      %v1735 = vpop.f32.mrf.mxu0
      %v1736 = vadd.f32 0.0, %v1735
      %1737 = vmatmul.bf16.gmra.mxu0 %v1641
      %v1738 = vpop.f32.mrf.mxu0
      %v1739 = vadd.f32 0.0, %v1738
      %v1740 = vpop.f32.mrf.mxu0
      %v1741 = vadd.f32 0.0, %v1740
      %1742 = vmatmul.bf16.gmra.mxu0 %v1642
      %v1743 = vpop.f32.mrf.mxu0
      %v1744 = vadd.f32 0.0, %v1743
      %v1745 = vpop.f32.mrf.mxu0
      %v1746 = vadd.f32 0.0, %v1745
      %1747 = vmatmul.bf16.gmra.mxu0 %v1643
      %v1748 = vpop.f32.mrf.mxu0
      %v1749 = vadd.f32 0.0, %v1748
      %v1750 = vpop.f32.mrf.mxu0
      %v1751 = vadd.f32 0.0, %v1750
      %1752 = vmatmul.bf16.gmra.mxu0 %v1644
      %v1753 = vpop.f32.mrf.mxu0
      %v1754 = vadd.f32 0.0, %v1753
      %v1755 = vpop.f32.mrf.mxu0
      %v1756 = vadd.f32 0.0, %v1755
      %1757 = vmatmul.bf16.gmra.mxu0 %v1645
      %v1758 = vpop.f32.mrf.mxu0
      %v1759 = vadd.f32 0.0, %v1758
      %v1760 = vpop.f32.mrf.mxu0
      %v1761 = vadd.f32 0.0, %v1760
      %1762 = vmatmul.bf16.gmra.mxu0 %v1646
      %v1763 = vpop.f32.mrf.mxu0
      %v1764 = vadd.f32 0.0, %v1763
      %v1765 = vpop.f32.mrf.mxu0
      %v1766 = vadd.f32 0.0, %v1765
      %1767 = vmatmul.bf16.gmra.mxu0 %v1647
      %v1768 = vpop.f32.mrf.mxu0
      %v1769 = vadd.f32 0.0, %v1768
      %v1770 = vpop.f32.mrf.mxu0
      %v1771 = vadd.f32 0.0, %v1770
      %1772 = vmatmul.bf16.gmra.mxu0 %v1648
      %v1773 = vpop.f32.mrf.mxu0
      %v1774 = vadd.f32 0.0, %v1773
      %v1775 = vpop.f32.mrf.mxu0
      %v1776 = vadd.f32 0.0, %v1775
      %1777 = vmatmul.bf16.gmra.mxu0 %v1649
      %v1778 = vpop.f32.mrf.mxu0
      %v1779 = vadd.f32 0.0, %v1778
      %v1780 = vpop.f32.mrf.mxu0
      %v1781 = vadd.f32 0.0, %v1780
      %1782 = vmatmul.bf16.gmra.mxu0 %v1650
      %v1783 = vpop.f32.mrf.mxu0
      %v1784 = vadd.f32 0.0, %v1783
      %v1785 = vpop.f32.mrf.mxu0
      %v1786 = vadd.f32 0.0, %v1785
      %1787 = vmatmul.bf16.gmra.mxu0 %v1651
      %v1788 = vpop.f32.mrf.mxu0
      %v1789 = vadd.f32 0.0, %v1788
      %v1790 = vpop.f32.mrf.mxu0
      %v1791 = vadd.f32 0.0, %v1790
      %1792 = vmatmul.bf16.gmra.mxu0 %v1652
      %v1793 = vpop.f32.mrf.mxu0
      %v1794 = vadd.f32 0.0, %v1793
      %v1795 = vpop.f32.mrf.mxu0
      %v1796 = vadd.f32 0.0, %v1795
      %1797 = vmatmul.bf16.gmra.mxu0 %v1653
      %v1798 = vpop.f32.mrf.mxu0
      %v1799 = vadd.f32 0.0, %v1798
      %v1800 = vpop.f32.mrf.mxu0
      %v1801 = vadd.f32 0.0, %v1800
      %1802 = vmatmul.bf16.gmra.mxu0 %v1654
      %v1803 = vpop.f32.mrf.mxu0
      %v1804 = vadd.f32 0.0, %v1803
      %v1805 = vpop.f32.mrf.mxu0
      %v1806 = vadd.f32 0.0, %v1805
      %1807 = vdwg.mxu0
      %v1808 = vadd.f32 %v1493, %v1729
      %v1809 = vadd.f32 %v1494, %v1731
      %v1810 = vadd.f32 %v1495, %v1734
      %v1811 = vadd.f32 %v1496, %v1736
      %v1812 = vadd.f32 %v1497, %v1739
      %v1813 = vadd.f32 %v1498, %v1741
      %v1814 = vadd.f32 %v1499, %v1744
      %v1815 = vadd.f32 %v1500, %v1746
      %v1816 = vadd.f32 %v1501, %v1749
      %v1817 = vadd.f32 %v1502, %v1751
      %v1818 = vadd.f32 %v1503, %v1754
      %v1819 = vadd.f32 %v1504, %v1756
      %v1820 = vadd.f32 %v1505, %v1759
      %v1821 = vadd.f32 %v1506, %v1761
      %v1822 = vadd.f32 %v1507, %v1764
      %v1823 = vadd.f32 %v1508, %v1766
      %v1824 = vadd.f32 %v1509, %v1769
      %v1825 = vadd.f32 %v1510, %v1771
      %v1826 = vadd.f32 %v1511, %v1774
      %v1827 = vadd.f32 %v1512, %v1776
      %v1828 = vadd.f32 %v1513, %v1779
      %v1829 = vadd.f32 %v1514, %v1781
      %v1830 = vadd.f32 %v1515, %v1784
      %v1831 = vadd.f32 %v1516, %v1786
      %v1832 = vadd.f32 %v1517, %v1789
      %v1833 = vadd.f32 %v1518, %v1791
      %v1834 = vadd.f32 %v1519, %v1794
      %v1835 = vadd.f32 %v1520, %v1796
      %v1836 = vadd.f32 %v1521, %v1799
      %v1837 = vadd.f32 %v1522, %v1801
      %v1838 = vadd.f32 %v1523, %v1804
      %v1839 = vadd.f32 %v1524, %v1806
      %v1840 = vld [vmem:[%s1525] sm:$0xf]
      %v1841 = vld [vmem:[%s1525 + $0x4] sm:$0xf]
      %v1842 = vld [vmem:[%s1525 + $0x8] sm:$0x1]
      %v1843 = vld [vmem:[%s1525 + $0xc] sm:$0xf]
      %v1844 = vld [vmem:[%s1525 + $0x10] sm:$0xf]
      %v1845 = vld [vmem:[%s1525 + $0x14] sm:$0x1]
      %v1846 = vld [vmem:[%s1525 + $0x18] sm:$0xf]
      %v1847 = vld [vmem:[%s1525 + $0x1c] sm:$0xf]
      %v1848 = vld [vmem:[%s1525 + $0x20] sm:$0x1]
      %v1849 = vld [vmem:[%s1525 + $0x24] sm:$0xf]
      %v1850 = vld [vmem:[%s1525 + $0x28] sm:$0xf]
      %v1851 = vld [vmem:[%s1525 + $0x2c] sm:$0x1]
      %v1852 = vld [vmem:[%s1525 + $0x30] sm:$0xf]
      %v1853 = vld [vmem:[%s1525 + $0x34] sm:$0xf]
      %v1854 = vld [vmem:[%s1525 + $0x38] sm:$0x1]
      %v1855 = vld [vmem:[%s1525 + $0x3c] sm:$0xf]
      %v1856 = vld [vmem:[%s1525 + $0x40] sm:$0xf]
      %v1857 = vld [vmem:[%s1525 + $0x44] sm:$0x1]
      %v1858 = vld [vmem:[%s1525 + $0x48] sm:$0xf]
      %v1859 = vld [vmem:[%s1525 + $0x4c] sm:$0xf]
      %v1860 = vld [vmem:[%s1525 + $0x50] sm:$0x1]
      %v1861 = vld [vmem:[%s1525 + $0x54] sm:$0xf]
      %v1862 = vld [vmem:[%s1525 + $0x58] sm:$0xf]
      %v1863 = vld [vmem:[%s1525 + $0x5c] sm:$0x1]
      %v1864 = vld [vmem:[%s1525 + $0x60] sm:$0xf]
      %v1865 = vld [vmem:[%s1525 + $0x64] sm:$0xf]
      %v1866 = vld [vmem:[%s1525 + $0x68] sm:$0x1]
      %v1867 = vld [vmem:[%s1525 + $0x6c] sm:$0xf]
      %v1868 = vld [vmem:[%s1525 + $0x70] sm:$0xf]
      %v1869 = vld [vmem:[%s1525 + $0x74] sm:$0x1]
      %v1870 = vld [vmem:[%s1525 + $0x78] sm:$0xf]
      %v1871 = vld [vmem:[%s1525 + $0x7c] sm:$0xf]
      %v1872 = vld [vmem:[%s1525 + $0x80] sm:$0x1]
      %v1873 = vld [vmem:[%s1525 + $0x84] sm:$0xf]
      %v1874 = vld [vmem:[%s1525 + $0x88] sm:$0xf]
      %v1875 = vld [vmem:[%s1525 + $0x8c] sm:$0x1]
      %v1876 = vld [vmem:[%s1525 + $0x90] sm:$0xf]
      %v1877 = vld [vmem:[%s1525 + $0x94] sm:$0xf]
      %v1878 = vld [vmem:[%s1525 + $0x98] sm:$0x1]
      %v1879 = vld [vmem:[%s1525 + $0x9c] sm:$0xf]
      %v1880 = vld [vmem:[%s1525 + $0xa0] sm:$0xf]
      %v1881 = vld [vmem:[%s1525 + $0xa4] sm:$0x1]
      %v1882 = vld [vmem:[%s1525 + $0xa8] sm:$0xf]
      %v1883 = vld [vmem:[%s1525 + $0xac] sm:$0xf]
      %v1884 = vld [vmem:[%s1525 + $0xb0] sm:$0x1]
      %v1885 = vld [vmem:[%s1525 + $0xb4] sm:$0xf]
      %v1886 = vld [vmem:[%s1525 + $0xb8] sm:$0xf]
      %v1887 = vld [vmem:[%s1525 + $0xbc] sm:$0x1]
      %v1889 = vshrl.u32 %v1840, 16
      %v1891 = vrot.slane %v1889, 4
      %v1892 = vshll.u32 %v1840, 16
      %v1894 = vrot.slane %v1892, 5
      %v1895 = vor.u32 %v1891, %v1894
      %v1896 = vrot.slane %v1895, 4
      %v1898 = vshll.u32 %v1841, 16
      %v1900 = vrot.slane %v1898, 5
      %v1901 = vsel %vm276, %v1896, %v1900
      %v1902 = vshrl.u32 %v1841, 16
      %v1904 = vrot.slane %v1902, 4
      %v1905 = vor.u32 %v1904, %v1900
      %v1906 = vrot.slane %v1905, 4
      %v1908 = vshll.u32 %v1842, 16
      %v1910 = vrot.slane %v1908, 5
      %v1911 = vsel %vm276, %v1906, %v1910
      %v1913 = vshrl.u32 %v1843, 16
      %v1915 = vrot.slane %v1913, 4
      %v1916 = vshll.u32 %v1843, 16
      %v1918 = vrot.slane %v1916, 5
      %v1919 = vor.u32 %v1915, %v1918
      %v1920 = vrot.slane %v1919, 4
      %v1922 = vshll.u32 %v1844, 16
      %v1924 = vrot.slane %v1922, 5
      %v1925 = vsel %vm276, %v1920, %v1924
      %v1926 = vshrl.u32 %v1844, 16
      %v1928 = vrot.slane %v1926, 4
      %v1929 = vor.u32 %v1928, %v1924
      %v1930 = vrot.slane %v1929, 4
      %v1932 = vshll.u32 %v1845, 16
      %v1934 = vrot.slane %v1932, 5
      %v1935 = vsel %vm276, %v1930, %v1934
      %v1937 = vshrl.u32 %v1846, 16
      %v1939 = vrot.slane %v1937, 4
      %v1940 = vshll.u32 %v1846, 16
      %v1942 = vrot.slane %v1940, 5
      %v1943 = vor.u32 %v1939, %v1942
      %v1944 = vrot.slane %v1943, 4
      %v1946 = vshll.u32 %v1847, 16
      %v1948 = vrot.slane %v1946, 5
      %v1949 = vsel %vm276, %v1944, %v1948
      %v1950 = vshrl.u32 %v1847, 16
      %v1952 = vrot.slane %v1950, 4
      %v1953 = vor.u32 %v1952, %v1948
      %v1954 = vrot.slane %v1953, 4
      %v1956 = vshll.u32 %v1848, 16
      %v1958 = vrot.slane %v1956, 5
      %v1959 = vsel %vm276, %v1954, %v1958
      %v1961 = vshrl.u32 %v1849, 16
      %v1963 = vrot.slane %v1961, 4
      %v1964 = vshll.u32 %v1849, 16
      %v1966 = vrot.slane %v1964, 5
      %v1967 = vor.u32 %v1963, %v1966
      %v1968 = vrot.slane %v1967, 4
      %v1970 = vshll.u32 %v1850, 16
      %v1972 = vrot.slane %v1970, 5
      %v1973 = vsel %vm276, %v1968, %v1972
      %v1974 = vshrl.u32 %v1850, 16
      %v1976 = vrot.slane %v1974, 4
      %v1977 = vor.u32 %v1976, %v1972
      %v1978 = vrot.slane %v1977, 4
      %v1980 = vshll.u32 %v1851, 16
      %v1982 = vrot.slane %v1980, 5
      %v1983 = vsel %vm276, %v1978, %v1982
      %v1985 = vshrl.u32 %v1852, 16
      %v1987 = vrot.slane %v1985, 4
      %v1988 = vshll.u32 %v1852, 16
      %v1990 = vrot.slane %v1988, 5
      %v1991 = vor.u32 %v1987, %v1990
      %v1992 = vrot.slane %v1991, 4
      %v1994 = vshll.u32 %v1853, 16
      %v1996 = vrot.slane %v1994, 5
      %v1997 = vsel %vm276, %v1992, %v1996
      %v1998 = vshrl.u32 %v1853, 16
      %v2000 = vrot.slane %v1998, 4
      %v2001 = vor.u32 %v2000, %v1996
      %v2002 = vrot.slane %v2001, 4
      %v2004 = vshll.u32 %v1854, 16
      %v2006 = vrot.slane %v2004, 5
      %v2007 = vsel %vm276, %v2002, %v2006
      %v2009 = vshrl.u32 %v1855, 16
      %v2011 = vrot.slane %v2009, 4
      %v2012 = vshll.u32 %v1855, 16
      %v2014 = vrot.slane %v2012, 5
      %v2015 = vor.u32 %v2011, %v2014
      %v2016 = vrot.slane %v2015, 4
      %v2018 = vshll.u32 %v1856, 16
      %v2020 = vrot.slane %v2018, 5
      %v2021 = vsel %vm276, %v2016, %v2020
      %v2022 = vshrl.u32 %v1856, 16
      %v2024 = vrot.slane %v2022, 4
      %v2025 = vor.u32 %v2024, %v2020
      %v2026 = vrot.slane %v2025, 4
      %v2028 = vshll.u32 %v1857, 16
      %v2030 = vrot.slane %v2028, 5
      %v2031 = vsel %vm276, %v2026, %v2030
      %v2033 = vshrl.u32 %v1858, 16
      %v2035 = vrot.slane %v2033, 4
      %v2036 = vshll.u32 %v1858, 16
      %v2038 = vrot.slane %v2036, 5
      %v2039 = vor.u32 %v2035, %v2038
      %v2040 = vrot.slane %v2039, 4
      %v2042 = vshll.u32 %v1859, 16
      %v2044 = vrot.slane %v2042, 5
      %v2045 = vsel %vm276, %v2040, %v2044
      %v2046 = vshrl.u32 %v1859, 16
      %v2048 = vrot.slane %v2046, 4
      %v2049 = vor.u32 %v2048, %v2044
      %v2050 = vrot.slane %v2049, 4
      %v2052 = vshll.u32 %v1860, 16
      %v2054 = vrot.slane %v2052, 5
      %v2055 = vsel %vm276, %v2050, %v2054
      %v2057 = vshrl.u32 %v1861, 16
      %v2059 = vrot.slane %v2057, 4
      %v2060 = vshll.u32 %v1861, 16
      %v2062 = vrot.slane %v2060, 5
      %v2063 = vor.u32 %v2059, %v2062
      %v2064 = vrot.slane %v2063, 4
      %v2066 = vshll.u32 %v1862, 16
      %v2068 = vrot.slane %v2066, 5
      %v2069 = vsel %vm276, %v2064, %v2068
      %v2070 = vshrl.u32 %v1862, 16
      %v2072 = vrot.slane %v2070, 4
      %v2073 = vor.u32 %v2072, %v2068
      %v2074 = vrot.slane %v2073, 4
      %v2076 = vshll.u32 %v1863, 16
      %v2078 = vrot.slane %v2076, 5
      %v2079 = vsel %vm276, %v2074, %v2078
      %v2081 = vshrl.u32 %v1864, 16
      %v2083 = vrot.slane %v2081, 4
      %v2084 = vshll.u32 %v1864, 16
      %v2086 = vrot.slane %v2084, 5
      %v2087 = vor.u32 %v2083, %v2086
      %v2088 = vrot.slane %v2087, 4
      %v2090 = vshll.u32 %v1865, 16
      %v2092 = vrot.slane %v2090, 5
      %v2093 = vsel %vm276, %v2088, %v2092
      %v2094 = vshrl.u32 %v1865, 16
      %v2096 = vrot.slane %v2094, 4
      %v2097 = vor.u32 %v2096, %v2092
      %v2098 = vrot.slane %v2097, 4
      %v2100 = vshll.u32 %v1866, 16
      %v2102 = vrot.slane %v2100, 5
      %v2103 = vsel %vm276, %v2098, %v2102
      %v2105 = vshrl.u32 %v1867, 16
      %v2107 = vrot.slane %v2105, 4
      %v2108 = vshll.u32 %v1867, 16
      %v2110 = vrot.slane %v2108, 5
      %v2111 = vor.u32 %v2107, %v2110
      %v2112 = vrot.slane %v2111, 4
      %v2114 = vshll.u32 %v1868, 16
      %v2116 = vrot.slane %v2114, 5
      %v2117 = vsel %vm276, %v2112, %v2116
      %v2118 = vshrl.u32 %v1868, 16
      %v2120 = vrot.slane %v2118, 4
      %v2121 = vor.u32 %v2120, %v2116
      %v2122 = vrot.slane %v2121, 4
      %v2124 = vshll.u32 %v1869, 16
      %v2126 = vrot.slane %v2124, 5
      %v2127 = vsel %vm276, %v2122, %v2126
      %v2129 = vshrl.u32 %v1870, 16
      %v2131 = vrot.slane %v2129, 4
      %v2132 = vshll.u32 %v1870, 16
      %v2134 = vrot.slane %v2132, 5
      %v2135 = vor.u32 %v2131, %v2134
      %v2136 = vrot.slane %v2135, 4
      %v2138 = vshll.u32 %v1871, 16
      %v2140 = vrot.slane %v2138, 5
      %v2141 = vsel %vm276, %v2136, %v2140
      %v2142 = vshrl.u32 %v1871, 16
      %v2144 = vrot.slane %v2142, 4
      %v2145 = vor.u32 %v2144, %v2140
      %v2146 = vrot.slane %v2145, 4
      %v2148 = vshll.u32 %v1872, 16
      %v2150 = vrot.slane %v2148, 5
      %v2151 = vsel %vm276, %v2146, %v2150
      %v2153 = vshrl.u32 %v1873, 16
      %v2155 = vrot.slane %v2153, 4
      %v2156 = vshll.u32 %v1873, 16
      %v2158 = vrot.slane %v2156, 5
      %v2159 = vor.u32 %v2155, %v2158
      %v2160 = vrot.slane %v2159, 4
      %v2162 = vshll.u32 %v1874, 16
      %v2164 = vrot.slane %v2162, 5
      %v2165 = vsel %vm276, %v2160, %v2164
      %v2166 = vshrl.u32 %v1874, 16
      %v2168 = vrot.slane %v2166, 4
      %v2169 = vor.u32 %v2168, %v2164
      %v2170 = vrot.slane %v2169, 4
      %v2172 = vshll.u32 %v1875, 16
      %v2174 = vrot.slane %v2172, 5
      %v2175 = vsel %vm276, %v2170, %v2174
      %v2177 = vshrl.u32 %v1876, 16
      %v2179 = vrot.slane %v2177, 4
      %v2180 = vshll.u32 %v1876, 16
      %v2182 = vrot.slane %v2180, 5
      %v2183 = vor.u32 %v2179, %v2182
      %v2184 = vrot.slane %v2183, 4
      %v2186 = vshll.u32 %v1877, 16
      %v2188 = vrot.slane %v2186, 5
      %v2189 = vsel %vm276, %v2184, %v2188
      %v2190 = vshrl.u32 %v1877, 16
      %v2192 = vrot.slane %v2190, 4
      %v2193 = vor.u32 %v2192, %v2188
      %v2194 = vrot.slane %v2193, 4
      %v2196 = vshll.u32 %v1878, 16
      %v2198 = vrot.slane %v2196, 5
      %v2199 = vsel %vm276, %v2194, %v2198
      %v2201 = vshrl.u32 %v1879, 16
      %v2203 = vrot.slane %v2201, 4
      %v2204 = vshll.u32 %v1879, 16
      %v2206 = vrot.slane %v2204, 5
      %v2207 = vor.u32 %v2203, %v2206
      %v2208 = vrot.slane %v2207, 4
      %v2210 = vshll.u32 %v1880, 16
      %v2212 = vrot.slane %v2210, 5
      %v2213 = vsel %vm276, %v2208, %v2212
      %v2214 = vshrl.u32 %v1880, 16
      %v2216 = vrot.slane %v2214, 4
      %v2217 = vor.u32 %v2216, %v2212
      %v2218 = vrot.slane %v2217, 4
      %v2220 = vshll.u32 %v1881, 16
      %v2222 = vrot.slane %v2220, 5
      %v2223 = vsel %vm276, %v2218, %v2222
      %v2225 = vshrl.u32 %v1882, 16
      %v2227 = vrot.slane %v2225, 4
      %v2228 = vshll.u32 %v1882, 16
      %v2230 = vrot.slane %v2228, 5
      %v2231 = vor.u32 %v2227, %v2230
      %v2232 = vrot.slane %v2231, 4
      %v2234 = vshll.u32 %v1883, 16
      %v2236 = vrot.slane %v2234, 5
      %v2237 = vsel %vm276, %v2232, %v2236
      %v2238 = vshrl.u32 %v1883, 16
      %v2240 = vrot.slane %v2238, 4
      %v2241 = vor.u32 %v2240, %v2236
      %v2242 = vrot.slane %v2241, 4
      %v2244 = vshll.u32 %v1884, 16
      %v2246 = vrot.slane %v2244, 5
      %v2247 = vsel %vm276, %v2242, %v2246
      %v2249 = vshrl.u32 %v1885, 16
      %v2251 = vrot.slane %v2249, 4
      %v2252 = vshll.u32 %v1885, 16
      %v2254 = vrot.slane %v2252, 5
      %v2255 = vor.u32 %v2251, %v2254
      %v2256 = vrot.slane %v2255, 4
      %v2258 = vshll.u32 %v1886, 16
      %v2260 = vrot.slane %v2258, 5
      %v2261 = vsel %vm276, %v2256, %v2260
      %v2262 = vshrl.u32 %v1886, 16
      %v2264 = vrot.slane %v2262, 4
      %v2265 = vor.u32 %v2264, %v2260
      %v2266 = vrot.slane %v2265, 4
      %v2268 = vshll.u32 %v1887, 16
      %v2270 = vrot.slane %v2268, 5
      %v2271 = vsel %vm276, %v2266, %v2270
      %s2272 = scalar_lea.vmem %s1, 256
      %v2273 = vld [vmem:[%s2272] sm:$0xf]
      %v2274 = vld [vmem:[%s2272 + $0x4] sm:$0xf]
      %v2275 = vld [vmem:[%s2272 + $0x8] sm:$0xf]
      %v2276 = vld [vmem:[%s2272 + $0xc] sm:$0xf]
      %v2277 = vld [vmem:[%s2272 + $0x10] sm:$0xf]
      %v2278 = vld [vmem:[%s2272 + $0x14] sm:$0xf]
      %v2279 = vld [vmem:[%s2272 + $0x18] sm:$0xf]
      %v2280 = vld [vmem:[%s2272 + $0x1c] sm:$0xf]
      %v2281 = vld [vmem:[%s2272 + $0x20] sm:$0xf]
      %v2282 = vld [vmem:[%s2272 + $0x24] sm:$0xf]
      %v2283 = vld [vmem:[%s2272 + $0x28] sm:$0xf]
      %v2284 = vld [vmem:[%s2272 + $0x2c] sm:$0xf]
      %v2285 = vld [vmem:[%s2272 + $0x30] sm:$0xf]
      %v2286 = vld [vmem:[%s2272 + $0x34] sm:$0xf]
      %v2287 = vld [vmem:[%s2272 + $0x38] sm:$0xf]
      %v2288 = vld [vmem:[%s2272 + $0x3c] sm:$0xf]
      %v2289 = vunpack.c.l.b16 %v1901
      %v2290 = vunpack.c.l.b16 %v1911
      %v2291 = vunpack.c.l.b16 %v1925
      %v2292 = vunpack.c.l.b16 %v1935
      %v2293 = vunpack.c.l.b16 %v1949
      %v2294 = vunpack.c.l.b16 %v1959
      %v2295 = vunpack.c.l.b16 %v1973
      %v2296 = vunpack.c.l.b16 %v1983
      %v2297 = vunpack.c.l.b16 %v1997
      %v2298 = vunpack.c.l.b16 %v2007
      %v2299 = vunpack.c.l.b16 %v2021
      %v2300 = vunpack.c.l.b16 %v2031
      %v2301 = vunpack.c.l.b16 %v2045
      %v2302 = vunpack.c.l.b16 %v2055
      %v2303 = vunpack.c.l.b16 %v2069
      %v2304 = vunpack.c.l.b16 %v2079
      %v2305 = vunpack.c.l.b16 %v2093
      %v2306 = vunpack.c.l.b16 %v2103
      %v2307 = vunpack.c.l.b16 %v2117
      %v2308 = vunpack.c.l.b16 %v2127
      %v2309 = vunpack.c.l.b16 %v2141
      %v2310 = vunpack.c.l.b16 %v2151
      %v2311 = vunpack.c.l.b16 %v2165
      %v2312 = vunpack.c.l.b16 %v2175
      %v2313 = vunpack.c.l.b16 %v2189
      %v2314 = vunpack.c.l.b16 %v2199
      %v2315 = vunpack.c.l.b16 %v2213
      %v2316 = vunpack.c.l.b16 %v2223
      %v2317 = vunpack.c.l.b16 %v2237
      %v2318 = vunpack.c.l.b16 %v2247
      %v2319 = vunpack.c.l.b16 %v2261
      %v2320 = vunpack.c.l.b16 %v2271
      %v2321 = vpack.c.b16 %v2290, %v2289
      %v2322 = vpack.c.b16 %v2292, %v2291
      %v2323 = vpack.c.b16 %v2294, %v2293
      %v2324 = vpack.c.b16 %v2296, %v2295
      %v2325 = vpack.c.b16 %v2298, %v2297
      %v2326 = vpack.c.b16 %v2300, %v2299
      %v2327 = vpack.c.b16 %v2302, %v2301
      %v2328 = vpack.c.b16 %v2304, %v2303
      %v2329 = vpack.c.b16 %v2306, %v2305
      %v2330 = vpack.c.b16 %v2308, %v2307
      %v2331 = vpack.c.b16 %v2310, %v2309
      %v2332 = vpack.c.b16 %v2312, %v2311
      %v2333 = vpack.c.b16 %v2314, %v2313
      %v2334 = vpack.c.b16 %v2316, %v2315
      %v2335 = vpack.c.b16 %v2318, %v2317
      %v2336 = vpack.c.b16 %v2320, %v2319
      %v2369 = vunpack.c.l.b16 %v2273
      %v2370 = vunpack.c.l.b16 %v2274
      %v2371 = vunpack.c.l.b16 %v2275
      %v2372 = vunpack.c.l.b16 %v2276
      %v2373 = vunpack.c.l.b16 %v2277
      %v2374 = vunpack.c.l.b16 %v2278
      %v2375 = vunpack.c.l.b16 %v2279
      %v2376 = vunpack.c.l.b16 %v2280
      %v2377 = vunpack.c.l.b16 %v2281
      %v2378 = vunpack.c.l.b16 %v2282
      %v2379 = vunpack.c.l.b16 %v2283
      %v2380 = vunpack.c.l.b16 %v2284
      %v2381 = vunpack.c.l.b16 %v2285
      %v2382 = vunpack.c.l.b16 %v2286
      %v2383 = vunpack.c.l.b16 %v2287
      %v2384 = vunpack.c.l.b16 %v2288
      %v2385 = vpack.c.b16 %v2370, %v2369
      %v2386 = vpack.c.b16 %v2372, %v2371
      %v2387 = vpack.c.b16 %v2374, %v2373
      %v2388 = vpack.c.b16 %v2376, %v2375
      %v2389 = vpack.c.b16 %v2378, %v2377
      %v2390 = vpack.c.b16 %v2380, %v2379
      %v2391 = vpack.c.b16 %v2382, %v2381
      %v2392 = vpack.c.b16 %v2384, %v2383
      %2401 = vmatpush.bf16.msra.mxu0 %v2392
      %2402 = vmatpush.bf16.msra.mxu0 %v2391
      %2403 = vmatpush.bf16.msra.mxu0 %v2390
      %2404 = vmatpush.bf16.msra.mxu0 %v2389
      %2405 = vmatpush.bf16.msra.mxu0 %v2388
      %2406 = vmatpush.bf16.msra.mxu0 %v2387
      %2407 = vmatpush.bf16.msra.mxu0 %v2386
      %2408 = vmatpush.bf16.msra.mxu0 %v2385
      %2409 = vmatmul.bf16.gmra.mxu0 %v2321
      %v2410 = vpop.f32.mrf.mxu0
      %v2411 = vadd.f32 0.0, %v2410
      %v2412 = vpop.f32.mrf.mxu0
      %v2413 = vadd.f32 0.0, %v2412
      %2414 = vmatmul.bf16.gmra.mxu0 %v2322
      %v2415 = vpop.f32.mrf.mxu0
      %v2416 = vadd.f32 0.0, %v2415
      %v2417 = vpop.f32.mrf.mxu0
      %v2418 = vadd.f32 0.0, %v2417
      %2419 = vmatmul.bf16.gmra.mxu0 %v2323
      %v2420 = vpop.f32.mrf.mxu0
      %v2421 = vadd.f32 0.0, %v2420
      %v2422 = vpop.f32.mrf.mxu0
      %v2423 = vadd.f32 0.0, %v2422
      %2424 = vmatmul.bf16.gmra.mxu0 %v2324
      %v2425 = vpop.f32.mrf.mxu0
      %v2426 = vadd.f32 0.0, %v2425
      %v2427 = vpop.f32.mrf.mxu0
      %v2428 = vadd.f32 0.0, %v2427
      %2429 = vmatmul.bf16.gmra.mxu0 %v2325
      %v2430 = vpop.f32.mrf.mxu0
      %v2431 = vadd.f32 0.0, %v2430
      %v2432 = vpop.f32.mrf.mxu0
      %v2433 = vadd.f32 0.0, %v2432
      %2434 = vmatmul.bf16.gmra.mxu0 %v2326
      %v2435 = vpop.f32.mrf.mxu0
      %v2436 = vadd.f32 0.0, %v2435
      %v2437 = vpop.f32.mrf.mxu0
      %v2438 = vadd.f32 0.0, %v2437
      %2439 = vmatmul.bf16.gmra.mxu0 %v2327
      %v2440 = vpop.f32.mrf.mxu0
      %v2441 = vadd.f32 0.0, %v2440
      %v2442 = vpop.f32.mrf.mxu0
      %v2443 = vadd.f32 0.0, %v2442
      %2444 = vmatmul.bf16.gmra.mxu0 %v2328
      %v2445 = vpop.f32.mrf.mxu0
      %v2446 = vadd.f32 0.0, %v2445
      %v2447 = vpop.f32.mrf.mxu0
      %v2448 = vadd.f32 0.0, %v2447
      %2449 = vmatmul.bf16.gmra.mxu0 %v2329
      %v2450 = vpop.f32.mrf.mxu0
      %v2451 = vadd.f32 0.0, %v2450
      %v2452 = vpop.f32.mrf.mxu0
      %v2453 = vadd.f32 0.0, %v2452
      %2454 = vmatmul.bf16.gmra.mxu0 %v2330
      %v2455 = vpop.f32.mrf.mxu0
      %v2456 = vadd.f32 0.0, %v2455
      %v2457 = vpop.f32.mrf.mxu0
      %v2458 = vadd.f32 0.0, %v2457
      %2459 = vmatmul.bf16.gmra.mxu0 %v2331
      %v2460 = vpop.f32.mrf.mxu0
      %v2461 = vadd.f32 0.0, %v2460
      %v2462 = vpop.f32.mrf.mxu0
      %v2463 = vadd.f32 0.0, %v2462
      %2464 = vmatmul.bf16.gmra.mxu0 %v2332
      %v2465 = vpop.f32.mrf.mxu0
      %v2466 = vadd.f32 0.0, %v2465
      %v2467 = vpop.f32.mrf.mxu0
      %v2468 = vadd.f32 0.0, %v2467
      %2469 = vmatmul.bf16.gmra.mxu0 %v2333
      %v2470 = vpop.f32.mrf.mxu0
      %v2471 = vadd.f32 0.0, %v2470
      %v2472 = vpop.f32.mrf.mxu0
      %v2473 = vadd.f32 0.0, %v2472
      %2474 = vmatmul.bf16.gmra.mxu0 %v2334
      %v2475 = vpop.f32.mrf.mxu0
      %v2476 = vadd.f32 0.0, %v2475
      %v2477 = vpop.f32.mrf.mxu0
      %v2478 = vadd.f32 0.0, %v2477
      %2479 = vmatmul.bf16.gmra.mxu0 %v2335
      %v2480 = vpop.f32.mrf.mxu0
      %v2481 = vadd.f32 0.0, %v2480
      %v2482 = vpop.f32.mrf.mxu0
      %v2483 = vadd.f32 0.0, %v2482
      %2484 = vmatmul.bf16.gmra.mxu0 %v2336
      %v2485 = vpop.f32.mrf.mxu0
      %v2486 = vadd.f32 0.0, %v2485
      %v2487 = vpop.f32.mrf.mxu0
      %v2488 = vadd.f32 0.0, %v2487
      %2489 = vdwg.mxu0
      %v2490 = vadd.f32 %v1808, %v2411
      %v2491 = vadd.f32 %v1809, %v2413
      %v2492 = vadd.f32 %v1810, %v2416
      %v2493 = vadd.f32 %v1811, %v2418
      %v2494 = vadd.f32 %v1812, %v2421
      %v2495 = vadd.f32 %v1813, %v2423
      %v2496 = vadd.f32 %v1814, %v2426
      %v2497 = vadd.f32 %v1815, %v2428
      %v2498 = vadd.f32 %v1816, %v2431
      %v2499 = vadd.f32 %v1817, %v2433
      %v2500 = vadd.f32 %v1818, %v2436
      %v2501 = vadd.f32 %v1819, %v2438
      %v2502 = vadd.f32 %v1820, %v2441
      %v2503 = vadd.f32 %v1821, %v2443
      %v2504 = vadd.f32 %v1822, %v2446
      %v2505 = vadd.f32 %v1823, %v2448
      %v2506 = vadd.f32 %v1824, %v2451
      %v2507 = vadd.f32 %v1825, %v2453
      %v2508 = vadd.f32 %v1826, %v2456
      %v2509 = vadd.f32 %v1827, %v2458
      %v2510 = vadd.f32 %v1828, %v2461
      %v2511 = vadd.f32 %v1829, %v2463
      %v2512 = vadd.f32 %v1830, %v2466
      %v2513 = vadd.f32 %v1831, %v2468
      %v2514 = vadd.f32 %v1832, %v2471
      %v2515 = vadd.f32 %v1833, %v2473
      %v2516 = vadd.f32 %v1834, %v2476
      %v2517 = vadd.f32 %v1835, %v2478
      %v2518 = vadd.f32 %v1836, %v2481
      %v2519 = vadd.f32 %v1837, %v2483
      %v2520 = vadd.f32 %v1838, %v2486
      %v2521 = vadd.f32 %v1839, %v2488
      %v2522 = vld [vmem:[%s1525] sm:$0xe]
      %v2523 = vld [vmem:[%s1525 + $0xc] sm:$0xe]
      %v2524 = vld [vmem:[%s1525 + $0x18] sm:$0xe]
      %v2525 = vld [vmem:[%s1525 + $0x24] sm:$0xe]
      %v2526 = vld [vmem:[%s1525 + $0x30] sm:$0xe]
      %v2527 = vld [vmem:[%s1525 + $0x3c] sm:$0xe]
      %v2528 = vld [vmem:[%s1525 + $0x48] sm:$0xe]
      %v2529 = vld [vmem:[%s1525 + $0x54] sm:$0xe]
      %v2530 = vld [vmem:[%s1525 + $0x60] sm:$0xe]
      %v2531 = vld [vmem:[%s1525 + $0x6c] sm:$0xe]
      %v2532 = vld [vmem:[%s1525 + $0x78] sm:$0xe]
      %v2533 = vld [vmem:[%s1525 + $0x84] sm:$0xe]
      %v2534 = vld [vmem:[%s1525 + $0x90] sm:$0xe]
      %v2535 = vld [vmem:[%s1525 + $0x9c] sm:$0xe]
      %v2536 = vld [vmem:[%s1525 + $0xa8] sm:$0xe]
      %v2537 = vld [vmem:[%s1525 + $0xb4] sm:$0xe]
      %v2586 = vrot.slane %v2522, 5
      %v2587 = vrot.slane %v2586, 4
      %v2588 = vrot.slane %v1841, 5
      %v2589 = vsel %vm1162, %v2587, %v2588
      %v2590 = vrot.slane %v2588, 4
      %v2591 = vrot.slane %v1842, 5
      %v2592 = vsel %vm1162, %v2590, %v2591
      %v2593 = vrot.slane %v2523, 5
      %v2594 = vrot.slane %v2593, 4
      %v2595 = vrot.slane %v1844, 5
      %v2596 = vsel %vm1162, %v2594, %v2595
      %v2597 = vrot.slane %v2595, 4
      %v2598 = vrot.slane %v1845, 5
      %v2599 = vsel %vm1162, %v2597, %v2598
      %v2600 = vrot.slane %v2524, 5
      %v2601 = vrot.slane %v2600, 4
      %v2602 = vrot.slane %v1847, 5
      %v2603 = vsel %vm1162, %v2601, %v2602
      %v2604 = vrot.slane %v2602, 4
      %v2605 = vrot.slane %v1848, 5
      %v2606 = vsel %vm1162, %v2604, %v2605
      %v2607 = vrot.slane %v2525, 5
      %v2608 = vrot.slane %v2607, 4
      %v2609 = vrot.slane %v1850, 5
      %v2610 = vsel %vm1162, %v2608, %v2609
      %v2611 = vrot.slane %v2609, 4
      %v2612 = vrot.slane %v1851, 5
      %v2613 = vsel %vm1162, %v2611, %v2612
      %v2614 = vrot.slane %v2526, 5
      %v2615 = vrot.slane %v2614, 4
      %v2616 = vrot.slane %v1853, 5
      %v2617 = vsel %vm1162, %v2615, %v2616
      %v2618 = vrot.slane %v2616, 4
      %v2619 = vrot.slane %v1854, 5
      %v2620 = vsel %vm1162, %v2618, %v2619
      %v2621 = vrot.slane %v2527, 5
      %v2622 = vrot.slane %v2621, 4
      %v2623 = vrot.slane %v1856, 5
      %v2624 = vsel %vm1162, %v2622, %v2623
      %v2625 = vrot.slane %v2623, 4
      %v2626 = vrot.slane %v1857, 5
      %v2627 = vsel %vm1162, %v2625, %v2626
      %v2628 = vrot.slane %v2528, 5
      %v2629 = vrot.slane %v2628, 4
      %v2630 = vrot.slane %v1859, 5
      %v2631 = vsel %vm1162, %v2629, %v2630
      %v2632 = vrot.slane %v2630, 4
      %v2633 = vrot.slane %v1860, 5
      %v2634 = vsel %vm1162, %v2632, %v2633
      %v2635 = vrot.slane %v2529, 5
      %v2636 = vrot.slane %v2635, 4
      %v2637 = vrot.slane %v1862, 5
      %v2638 = vsel %vm1162, %v2636, %v2637
      %v2639 = vrot.slane %v2637, 4
      %v2640 = vrot.slane %v1863, 5
      %v2641 = vsel %vm1162, %v2639, %v2640
      %v2642 = vrot.slane %v2530, 5
      %v2643 = vrot.slane %v2642, 4
      %v2644 = vrot.slane %v1865, 5
      %v2645 = vsel %vm1162, %v2643, %v2644
      %v2646 = vrot.slane %v2644, 4
      %v2647 = vrot.slane %v1866, 5
      %v2648 = vsel %vm1162, %v2646, %v2647
      %v2649 = vrot.slane %v2531, 5
      %v2650 = vrot.slane %v2649, 4
      %v2651 = vrot.slane %v1868, 5
      %v2652 = vsel %vm1162, %v2650, %v2651
      %v2653 = vrot.slane %v2651, 4
      %v2654 = vrot.slane %v1869, 5
      %v2655 = vsel %vm1162, %v2653, %v2654
      %v2656 = vrot.slane %v2532, 5
      %v2657 = vrot.slane %v2656, 4
      %v2658 = vrot.slane %v1871, 5
      %v2659 = vsel %vm1162, %v2657, %v2658
      %v2660 = vrot.slane %v2658, 4
      %v2661 = vrot.slane %v1872, 5
      %v2662 = vsel %vm1162, %v2660, %v2661
      %v2663 = vrot.slane %v2533, 5
      %v2664 = vrot.slane %v2663, 4
      %v2665 = vrot.slane %v1874, 5
      %v2666 = vsel %vm1162, %v2664, %v2665
      %v2667 = vrot.slane %v2665, 4
      %v2668 = vrot.slane %v1875, 5
      %v2669 = vsel %vm1162, %v2667, %v2668
      %v2670 = vrot.slane %v2534, 5
      %v2671 = vrot.slane %v2670, 4
      %v2672 = vrot.slane %v1877, 5
      %v2673 = vsel %vm1162, %v2671, %v2672
      %v2674 = vrot.slane %v2672, 4
      %v2675 = vrot.slane %v1878, 5
      %v2676 = vsel %vm1162, %v2674, %v2675
      %v2677 = vrot.slane %v2535, 5
      %v2678 = vrot.slane %v2677, 4
      %v2679 = vrot.slane %v1880, 5
      %v2680 = vsel %vm1162, %v2678, %v2679
      %v2681 = vrot.slane %v2679, 4
      %v2682 = vrot.slane %v1881, 5
      %v2683 = vsel %vm1162, %v2681, %v2682
      %v2684 = vrot.slane %v2536, 5
      %v2685 = vrot.slane %v2684, 4
      %v2686 = vrot.slane %v1883, 5
      %v2687 = vsel %vm1162, %v2685, %v2686
      %v2688 = vrot.slane %v2686, 4
      %v2689 = vrot.slane %v1884, 5
      %v2690 = vsel %vm1162, %v2688, %v2689
      %v2691 = vrot.slane %v2537, 5
      %v2692 = vrot.slane %v2691, 4
      %v2693 = vrot.slane %v1886, 5
      %v2694 = vsel %vm1162, %v2692, %v2693
      %v2695 = vrot.slane %v2693, 4
      %v2696 = vrot.slane %v1887, 5
      %v2697 = vsel %vm1162, %v2695, %v2696
      %s2698 = scalar_lea.vmem %s1, 320
      %v2699 = vld [vmem:[%s2698] sm:$0xf]
      %v2700 = vld [vmem:[%s2698 + $0x4] sm:$0xf]
      %v2701 = vld [vmem:[%s2698 + $0x8] sm:$0xf]
      %v2702 = vld [vmem:[%s2698 + $0xc] sm:$0xf]
      %v2703 = vld [vmem:[%s2698 + $0x10] sm:$0xf]
      %v2704 = vld [vmem:[%s2698 + $0x14] sm:$0xf]
      %v2705 = vld [vmem:[%s2698 + $0x18] sm:$0xf]
      %v2706 = vld [vmem:[%s2698 + $0x1c] sm:$0xf]
      %v2707 = vld [vmem:[%s2698 + $0x20] sm:$0xf]
      %v2708 = vld [vmem:[%s2698 + $0x24] sm:$0xf]
      %v2709 = vld [vmem:[%s2698 + $0x28] sm:$0xf]
      %v2710 = vld [vmem:[%s2698 + $0x2c] sm:$0xf]
      %v2711 = vld [vmem:[%s2698 + $0x30] sm:$0xf]
      %v2712 = vld [vmem:[%s2698 + $0x34] sm:$0xf]
      %v2713 = vld [vmem:[%s2698 + $0x38] sm:$0xf]
      %v2714 = vld [vmem:[%s2698 + $0x3c] sm:$0xf]
      %v2715 = vunpack.c.l.b16 %v2589
      %v2716 = vunpack.c.l.b16 %v2592
      %v2717 = vunpack.c.l.b16 %v2596
      %v2718 = vunpack.c.l.b16 %v2599
      %v2719 = vunpack.c.l.b16 %v2603
      %v2720 = vunpack.c.l.b16 %v2606
      %v2721 = vunpack.c.l.b16 %v2610
      %v2722 = vunpack.c.l.b16 %v2613
      %v2723 = vunpack.c.l.b16 %v2617
      %v2724 = vunpack.c.l.b16 %v2620
      %v2725 = vunpack.c.l.b16 %v2624
      %v2726 = vunpack.c.l.b16 %v2627
      %v2727 = vunpack.c.l.b16 %v2631
      %v2728 = vunpack.c.l.b16 %v2634
      %v2729 = vunpack.c.l.b16 %v2638
      %v2730 = vunpack.c.l.b16 %v2641
      %v2731 = vunpack.c.l.b16 %v2645
      %v2732 = vunpack.c.l.b16 %v2648
      %v2733 = vunpack.c.l.b16 %v2652
      %v2734 = vunpack.c.l.b16 %v2655
      %v2735 = vunpack.c.l.b16 %v2659
      %v2736 = vunpack.c.l.b16 %v2662
      %v2737 = vunpack.c.l.b16 %v2666
      %v2738 = vunpack.c.l.b16 %v2669
      %v2739 = vunpack.c.l.b16 %v2673
      %v2740 = vunpack.c.l.b16 %v2676
      %v2741 = vunpack.c.l.b16 %v2680
      %v2742 = vunpack.c.l.b16 %v2683
      %v2743 = vunpack.c.l.b16 %v2687
      %v2744 = vunpack.c.l.b16 %v2690
      %v2745 = vunpack.c.l.b16 %v2694
      %v2746 = vunpack.c.l.b16 %v2697
      %v2747 = vpack.c.b16 %v2716, %v2715
      %v2748 = vpack.c.b16 %v2718, %v2717
      %v2749 = vpack.c.b16 %v2720, %v2719
      %v2750 = vpack.c.b16 %v2722, %v2721
      %v2751 = vpack.c.b16 %v2724, %v2723
      %v2752 = vpack.c.b16 %v2726, %v2725
      %v2753 = vpack.c.b16 %v2728, %v2727
      %v2754 = vpack.c.b16 %v2730, %v2729
      %v2755 = vpack.c.b16 %v2732, %v2731
      %v2756 = vpack.c.b16 %v2734, %v2733
      %v2757 = vpack.c.b16 %v2736, %v2735
      %v2758 = vpack.c.b16 %v2738, %v2737
      %v2759 = vpack.c.b16 %v2740, %v2739
      %v2760 = vpack.c.b16 %v2742, %v2741
      %v2761 = vpack.c.b16 %v2744, %v2743
      %v2762 = vpack.c.b16 %v2746, %v2745
      %v2795 = vunpack.c.l.b16 %v2699
      %v2796 = vunpack.c.l.b16 %v2700
      %v2797 = vunpack.c.l.b16 %v2701
      %v2798 = vunpack.c.l.b16 %v2702
      %v2799 = vunpack.c.l.b16 %v2703
      %v2800 = vunpack.c.l.b16 %v2704
      %v2801 = vunpack.c.l.b16 %v2705
      %v2802 = vunpack.c.l.b16 %v2706
      %v2803 = vunpack.c.l.b16 %v2707
      %v2804 = vunpack.c.l.b16 %v2708
      %v2805 = vunpack.c.l.b16 %v2709
      %v2806 = vunpack.c.l.b16 %v2710
      %v2807 = vunpack.c.l.b16 %v2711
      %v2808 = vunpack.c.l.b16 %v2712
      %v2809 = vunpack.c.l.b16 %v2713
      %v2810 = vunpack.c.l.b16 %v2714
      %v2811 = vpack.c.b16 %v2796, %v2795
      %v2812 = vpack.c.b16 %v2798, %v2797
      %v2813 = vpack.c.b16 %v2800, %v2799
      %v2814 = vpack.c.b16 %v2802, %v2801
      %v2815 = vpack.c.b16 %v2804, %v2803
      %v2816 = vpack.c.b16 %v2806, %v2805
      %v2817 = vpack.c.b16 %v2808, %v2807
      %v2818 = vpack.c.b16 %v2810, %v2809
      %2827 = vmatpush.bf16.msra.mxu0 %v2818
      %2828 = vmatpush.bf16.msra.mxu0 %v2817
      %2829 = vmatpush.bf16.msra.mxu0 %v2816
      %2830 = vmatpush.bf16.msra.mxu0 %v2815
      %2831 = vmatpush.bf16.msra.mxu0 %v2814
      %2832 = vmatpush.bf16.msra.mxu0 %v2813
      %2833 = vmatpush.bf16.msra.mxu0 %v2812
      %2834 = vmatpush.bf16.msra.mxu0 %v2811
      %2835 = vmatmul.bf16.gmra.mxu0 %v2747
      %v2836 = vpop.f32.mrf.mxu0
      %v2837 = vadd.f32 0.0, %v2836
      %v2838 = vpop.f32.mrf.mxu0
      %v2839 = vadd.f32 0.0, %v2838
      %2840 = vmatmul.bf16.gmra.mxu0 %v2748
      %v2841 = vpop.f32.mrf.mxu0
      %v2842 = vadd.f32 0.0, %v2841
      %v2843 = vpop.f32.mrf.mxu0
      %v2844 = vadd.f32 0.0, %v2843
      %2845 = vmatmul.bf16.gmra.mxu0 %v2749
      %v2846 = vpop.f32.mrf.mxu0
      %v2847 = vadd.f32 0.0, %v2846
      %v2848 = vpop.f32.mrf.mxu0
      %v2849 = vadd.f32 0.0, %v2848
      %2850 = vmatmul.bf16.gmra.mxu0 %v2750
      %v2851 = vpop.f32.mrf.mxu0
      %v2852 = vadd.f32 0.0, %v2851
      %v2853 = vpop.f32.mrf.mxu0
      %v2854 = vadd.f32 0.0, %v2853
      %2855 = vmatmul.bf16.gmra.mxu0 %v2751
      %v2856 = vpop.f32.mrf.mxu0
      %v2857 = vadd.f32 0.0, %v2856
      %v2858 = vpop.f32.mrf.mxu0
      %v2859 = vadd.f32 0.0, %v2858
      %2860 = vmatmul.bf16.gmra.mxu0 %v2752
      %v2861 = vpop.f32.mrf.mxu0
      %v2862 = vadd.f32 0.0, %v2861
      %v2863 = vpop.f32.mrf.mxu0
      %v2864 = vadd.f32 0.0, %v2863
      %2865 = vmatmul.bf16.gmra.mxu0 %v2753
      %v2866 = vpop.f32.mrf.mxu0
      %v2867 = vadd.f32 0.0, %v2866
      %v2868 = vpop.f32.mrf.mxu0
      %v2869 = vadd.f32 0.0, %v2868
      %2870 = vmatmul.bf16.gmra.mxu0 %v2754
      %v2871 = vpop.f32.mrf.mxu0
      %v2872 = vadd.f32 0.0, %v2871
      %v2873 = vpop.f32.mrf.mxu0
      %v2874 = vadd.f32 0.0, %v2873
      %2875 = vmatmul.bf16.gmra.mxu0 %v2755
      %v2876 = vpop.f32.mrf.mxu0
      %v2877 = vadd.f32 0.0, %v2876
      %v2878 = vpop.f32.mrf.mxu0
      %v2879 = vadd.f32 0.0, %v2878
      %2880 = vmatmul.bf16.gmra.mxu0 %v2756
      %v2881 = vpop.f32.mrf.mxu0
      %v2882 = vadd.f32 0.0, %v2881
      %v2883 = vpop.f32.mrf.mxu0
      %v2884 = vadd.f32 0.0, %v2883
      %2885 = vmatmul.bf16.gmra.mxu0 %v2757
      %v2886 = vpop.f32.mrf.mxu0
      %v2887 = vadd.f32 0.0, %v2886
      %v2888 = vpop.f32.mrf.mxu0
      %v2889 = vadd.f32 0.0, %v2888
      %2890 = vmatmul.bf16.gmra.mxu0 %v2758
      %v2891 = vpop.f32.mrf.mxu0
      %v2892 = vadd.f32 0.0, %v2891
      %v2893 = vpop.f32.mrf.mxu0
      %v2894 = vadd.f32 0.0, %v2893
      %2895 = vmatmul.bf16.gmra.mxu0 %v2759
      %v2896 = vpop.f32.mrf.mxu0
      %v2897 = vadd.f32 0.0, %v2896
      %v2898 = vpop.f32.mrf.mxu0
      %v2899 = vadd.f32 0.0, %v2898
      %2900 = vmatmul.bf16.gmra.mxu0 %v2760
      %v2901 = vpop.f32.mrf.mxu0
      %v2902 = vadd.f32 0.0, %v2901
      %v2903 = vpop.f32.mrf.mxu0
      %v2904 = vadd.f32 0.0, %v2903
      %2905 = vmatmul.bf16.gmra.mxu0 %v2761
      %v2906 = vpop.f32.mrf.mxu0
      %v2907 = vadd.f32 0.0, %v2906
      %v2908 = vpop.f32.mrf.mxu0
      %v2909 = vadd.f32 0.0, %v2908
      %2910 = vmatmul.bf16.gmra.mxu0 %v2762
      %v2911 = vpop.f32.mrf.mxu0
      %v2912 = vadd.f32 0.0, %v2911
      %v2913 = vpop.f32.mrf.mxu0
      %v2914 = vadd.f32 0.0, %v2913
      %2915 = vdwg.mxu0
      %v2916 = vadd.f32 %v2490, %v2837
      %v2917 = vadd.f32 %v2491, %v2839
      %v2918 = vadd.f32 %v2492, %v2842
      %v2919 = vadd.f32 %v2493, %v2844
      %v2920 = vadd.f32 %v2494, %v2847
      %v2921 = vadd.f32 %v2495, %v2849
      %v2922 = vadd.f32 %v2496, %v2852
      %v2923 = vadd.f32 %v2497, %v2854
      %v2924 = vadd.f32 %v2498, %v2857
      %v2925 = vadd.f32 %v2499, %v2859
      %v2926 = vadd.f32 %v2500, %v2862
      %v2927 = vadd.f32 %v2501, %v2864
      %v2928 = vadd.f32 %v2502, %v2867
      %v2929 = vadd.f32 %v2503, %v2869
      %v2930 = vadd.f32 %v2504, %v2872
      %v2931 = vadd.f32 %v2505, %v2874
      %v2932 = vadd.f32 %v2506, %v2877
      %v2933 = vadd.f32 %v2507, %v2879
      %v2934 = vadd.f32 %v2508, %v2882
      %v2935 = vadd.f32 %v2509, %v2884
      %v2936 = vadd.f32 %v2510, %v2887
      %v2937 = vadd.f32 %v2511, %v2889
      %v2938 = vadd.f32 %v2512, %v2892
      %v2939 = vadd.f32 %v2513, %v2894
      %v2940 = vadd.f32 %v2514, %v2897
      %v2941 = vadd.f32 %v2515, %v2899
      %v2942 = vadd.f32 %v2516, %v2902
      %v2943 = vadd.f32 %v2517, %v2904
      %v2944 = vadd.f32 %v2518, %v2907
      %v2945 = vadd.f32 %v2519, %v2909
      %v2946 = vadd.f32 %v2520, %v2912
      %v2947 = vadd.f32 %v2521, %v2914
      %s2948 = scalar_lea.vmem %s198, 24
      %v2949 = vld [vmem:[%s2948] sm:$0xf]
      %v2950 = vld [vmem:[%s2948 + $0x4] sm:$0xf]
      %v2951 = vld [vmem:[%s2948 + $0xc] sm:$0xf]
      %v2952 = vld [vmem:[%s2948 + $0x10] sm:$0xf]
      %v2953 = vld [vmem:[%s2948 + $0x18] sm:$0xf]
      %v2954 = vld [vmem:[%s2948 + $0x1c] sm:$0xf]
      %v2955 = vld [vmem:[%s2948 + $0x24] sm:$0xf]
      %v2956 = vld [vmem:[%s2948 + $0x28] sm:$0xf]
      %v2957 = vld [vmem:[%s2948 + $0x30] sm:$0xf]
      %v2958 = vld [vmem:[%s2948 + $0x34] sm:$0xf]
      %v2959 = vld [vmem:[%s2948 + $0x3c] sm:$0xf]
      %v2960 = vld [vmem:[%s2948 + $0x40] sm:$0xf]
      %v2961 = vld [vmem:[%s2948 + $0x48] sm:$0xf]
      %v2962 = vld [vmem:[%s2948 + $0x4c] sm:$0xf]
      %v2963 = vld [vmem:[%s2948 + $0x54] sm:$0xf]
      %v2964 = vld [vmem:[%s2948 + $0x58] sm:$0xf]
      %v2965 = vld [vmem:[%s2948 + $0x60] sm:$0xf]
      %v2966 = vld [vmem:[%s2948 + $0x64] sm:$0xf]
      %v2967 = vld [vmem:[%s2948 + $0x6c] sm:$0xf]
      %v2968 = vld [vmem:[%s2948 + $0x70] sm:$0xf]
      %v2969 = vld [vmem:[%s2948 + $0x78] sm:$0xf]
      %v2970 = vld [vmem:[%s2948 + $0x7c] sm:$0xf]
      %v2971 = vld [vmem:[%s2948 + $0x84] sm:$0xf]
      %v2972 = vld [vmem:[%s2948 + $0x88] sm:$0xf]
      %v2973 = vld [vmem:[%s2948 + $0x90] sm:$0xf]
      %v2974 = vld [vmem:[%s2948 + $0x94] sm:$0xf]
      %v2975 = vld [vmem:[%s2948 + $0x9c] sm:$0xf]
      %v2976 = vld [vmem:[%s2948 + $0xa0] sm:$0xf]
      %v2977 = vld [vmem:[%s2948 + $0xa8] sm:$0xf]
      %v2978 = vld [vmem:[%s2948 + $0xac] sm:$0xf]
      %v2979 = vld [vmem:[%s2948 + $0xb4] sm:$0xf]
      %v2980 = vld [vmem:[%s2948 + $0xb8] sm:$0xf]
      %s2981 = scalar_lea.vmem %s1, 384
      %v2982 = vld [vmem:[%s2981] sm:$0xf]
      %v2983 = vld [vmem:[%s2981 + $0x4] sm:$0xf]
      %v2984 = vld [vmem:[%s2981 + $0x8] sm:$0xf]
      %v2985 = vld [vmem:[%s2981 + $0xc] sm:$0xf]
      %v2986 = vld [vmem:[%s2981 + $0x10] sm:$0xf]
      %v2987 = vld [vmem:[%s2981 + $0x14] sm:$0xf]
      %v2988 = vld [vmem:[%s2981 + $0x18] sm:$0xf]
      %v2989 = vld [vmem:[%s2981 + $0x1c] sm:$0xf]
      %v2990 = vld [vmem:[%s2981 + $0x20] sm:$0xf]
      %v2991 = vld [vmem:[%s2981 + $0x24] sm:$0xf]
      %v2992 = vld [vmem:[%s2981 + $0x28] sm:$0xf]
      %v2993 = vld [vmem:[%s2981 + $0x2c] sm:$0xf]
      %v2994 = vld [vmem:[%s2981 + $0x30] sm:$0xf]
      %v2995 = vld [vmem:[%s2981 + $0x34] sm:$0xf]
      %v2996 = vld [vmem:[%s2981 + $0x38] sm:$0xf]
      %v2997 = vld [vmem:[%s2981 + $0x3c] sm:$0xf]
      %v3030 = vunpack.c.l.b16 %v2949
      %v3031 = vunpack.c.l.b16 %v2950
      %v3032 = vunpack.c.l.b16 %v2951
      %v3033 = vunpack.c.l.b16 %v2952
      %v3034 = vunpack.c.l.b16 %v2953
      %v3035 = vunpack.c.l.b16 %v2954
      %v3036 = vunpack.c.l.b16 %v2955
      %v3037 = vunpack.c.l.b16 %v2956
      %v3038 = vunpack.c.l.b16 %v2957
      %v3039 = vunpack.c.l.b16 %v2958
      %v3040 = vunpack.c.l.b16 %v2959
      %v3041 = vunpack.c.l.b16 %v2960
      %v3042 = vunpack.c.l.b16 %v2961
      %v3043 = vunpack.c.l.b16 %v2962
      %v3044 = vunpack.c.l.b16 %v2963
      %v3045 = vunpack.c.l.b16 %v2964
      %v3046 = vunpack.c.l.b16 %v2965
      %v3047 = vunpack.c.l.b16 %v2966
      %v3048 = vunpack.c.l.b16 %v2967
      %v3049 = vunpack.c.l.b16 %v2968
      %v3050 = vunpack.c.l.b16 %v2969
      %v3051 = vunpack.c.l.b16 %v2970
      %v3052 = vunpack.c.l.b16 %v2971
      %v3053 = vunpack.c.l.b16 %v2972
      %v3054 = vunpack.c.l.b16 %v2973
      %v3055 = vunpack.c.l.b16 %v2974
      %v3056 = vunpack.c.l.b16 %v2975
      %v3057 = vunpack.c.l.b16 %v2976
      %v3058 = vunpack.c.l.b16 %v2977
      %v3059 = vunpack.c.l.b16 %v2978
      %v3060 = vunpack.c.l.b16 %v2979
      %v3061 = vunpack.c.l.b16 %v2980
      %v3062 = vpack.c.b16 %v3031, %v3030
      %v3063 = vpack.c.b16 %v3033, %v3032
      %v3064 = vpack.c.b16 %v3035, %v3034
      %v3065 = vpack.c.b16 %v3037, %v3036
      %v3066 = vpack.c.b16 %v3039, %v3038
      %v3067 = vpack.c.b16 %v3041, %v3040
      %v3068 = vpack.c.b16 %v3043, %v3042
      %v3069 = vpack.c.b16 %v3045, %v3044
      %v3070 = vpack.c.b16 %v3047, %v3046
      %v3071 = vpack.c.b16 %v3049, %v3048
      %v3072 = vpack.c.b16 %v3051, %v3050
      %v3073 = vpack.c.b16 %v3053, %v3052
      %v3074 = vpack.c.b16 %v3055, %v3054
      %v3075 = vpack.c.b16 %v3057, %v3056
      %v3076 = vpack.c.b16 %v3059, %v3058
      %v3077 = vpack.c.b16 %v3061, %v3060
      %v3110 = vunpack.c.l.b16 %v2982
      %v3111 = vunpack.c.l.b16 %v2983
      %v3112 = vunpack.c.l.b16 %v2984
      %v3113 = vunpack.c.l.b16 %v2985
      %v3114 = vunpack.c.l.b16 %v2986
      %v3115 = vunpack.c.l.b16 %v2987
      %v3116 = vunpack.c.l.b16 %v2988
      %v3117 = vunpack.c.l.b16 %v2989
      %v3118 = vunpack.c.l.b16 %v2990
      %v3119 = vunpack.c.l.b16 %v2991
      %v3120 = vunpack.c.l.b16 %v2992
      %v3121 = vunpack.c.l.b16 %v2993
      %v3122 = vunpack.c.l.b16 %v2994
      %v3123 = vunpack.c.l.b16 %v2995
      %v3124 = vunpack.c.l.b16 %v2996
      %v3125 = vunpack.c.l.b16 %v2997
      %v3126 = vpack.c.b16 %v3111, %v3110
      %v3127 = vpack.c.b16 %v3113, %v3112
      %v3128 = vpack.c.b16 %v3115, %v3114
      %v3129 = vpack.c.b16 %v3117, %v3116
      %v3130 = vpack.c.b16 %v3119, %v3118
      %v3131 = vpack.c.b16 %v3121, %v3120
      %v3132 = vpack.c.b16 %v3123, %v3122
      %v3133 = vpack.c.b16 %v3125, %v3124
      %3142 = vmatpush.bf16.msra.mxu0 %v3133
      %3143 = vmatpush.bf16.msra.mxu0 %v3132
      %3144 = vmatpush.bf16.msra.mxu0 %v3131
      %3145 = vmatpush.bf16.msra.mxu0 %v3130
      %3146 = vmatpush.bf16.msra.mxu0 %v3129
      %3147 = vmatpush.bf16.msra.mxu0 %v3128
      %3148 = vmatpush.bf16.msra.mxu0 %v3127
      %3149 = vmatpush.bf16.msra.mxu0 %v3126
      %3150 = vmatmul.bf16.gmra.mxu0 %v3062
      %v3151 = vpop.f32.mrf.mxu0
      %v3152 = vadd.f32 0.0, %v3151
      %v3153 = vpop.f32.mrf.mxu0
      %v3154 = vadd.f32 0.0, %v3153
      %3155 = vmatmul.bf16.gmra.mxu0 %v3063
      %v3156 = vpop.f32.mrf.mxu0
      %v3157 = vadd.f32 0.0, %v3156
      %v3158 = vpop.f32.mrf.mxu0
      %v3159 = vadd.f32 0.0, %v3158
      %3160 = vmatmul.bf16.gmra.mxu0 %v3064
      %v3161 = vpop.f32.mrf.mxu0
      %v3162 = vadd.f32 0.0, %v3161
      %v3163 = vpop.f32.mrf.mxu0
      %v3164 = vadd.f32 0.0, %v3163
      %3165 = vmatmul.bf16.gmra.mxu0 %v3065
      %v3166 = vpop.f32.mrf.mxu0
      %v3167 = vadd.f32 0.0, %v3166
      %v3168 = vpop.f32.mrf.mxu0
      %v3169 = vadd.f32 0.0, %v3168
      %3170 = vmatmul.bf16.gmra.mxu0 %v3066
      %v3171 = vpop.f32.mrf.mxu0
      %v3172 = vadd.f32 0.0, %v3171
      %v3173 = vpop.f32.mrf.mxu0
      %v3174 = vadd.f32 0.0, %v3173
      %3175 = vmatmul.bf16.gmra.mxu0 %v3067
      %v3176 = vpop.f32.mrf.mxu0
      %v3177 = vadd.f32 0.0, %v3176
      %v3178 = vpop.f32.mrf.mxu0
      %v3179 = vadd.f32 0.0, %v3178
      %3180 = vmatmul.bf16.gmra.mxu0 %v3068
      %v3181 = vpop.f32.mrf.mxu0
      %v3182 = vadd.f32 0.0, %v3181
      %v3183 = vpop.f32.mrf.mxu0
      %v3184 = vadd.f32 0.0, %v3183
      %3185 = vmatmul.bf16.gmra.mxu0 %v3069
      %v3186 = vpop.f32.mrf.mxu0
      %v3187 = vadd.f32 0.0, %v3186
      %v3188 = vpop.f32.mrf.mxu0
      %v3189 = vadd.f32 0.0, %v3188
      %3190 = vmatmul.bf16.gmra.mxu0 %v3070
      %v3191 = vpop.f32.mrf.mxu0
      %v3192 = vadd.f32 0.0, %v3191
      %v3193 = vpop.f32.mrf.mxu0
      %v3194 = vadd.f32 0.0, %v3193
      %3195 = vmatmul.bf16.gmra.mxu0 %v3071
      %v3196 = vpop.f32.mrf.mxu0
      %v3197 = vadd.f32 0.0, %v3196
      %v3198 = vpop.f32.mrf.mxu0
      %v3199 = vadd.f32 0.0, %v3198
      %3200 = vmatmul.bf16.gmra.mxu0 %v3072
      %v3201 = vpop.f32.mrf.mxu0
      %v3202 = vadd.f32 0.0, %v3201
      %v3203 = vpop.f32.mrf.mxu0
      %v3204 = vadd.f32 0.0, %v3203
      %3205 = vmatmul.bf16.gmra.mxu0 %v3073
      %v3206 = vpop.f32.mrf.mxu0
      %v3207 = vadd.f32 0.0, %v3206
      %v3208 = vpop.f32.mrf.mxu0
      %v3209 = vadd.f32 0.0, %v3208
      %3210 = vmatmul.bf16.gmra.mxu0 %v3074
      %v3211 = vpop.f32.mrf.mxu0
      %v3212 = vadd.f32 0.0, %v3211
      %v3213 = vpop.f32.mrf.mxu0
      %v3214 = vadd.f32 0.0, %v3213
      %3215 = vmatmul.bf16.gmra.mxu0 %v3075
      %v3216 = vpop.f32.mrf.mxu0
      %v3217 = vadd.f32 0.0, %v3216
      %v3218 = vpop.f32.mrf.mxu0
      %v3219 = vadd.f32 0.0, %v3218
      %3220 = vmatmul.bf16.gmra.mxu0 %v3076
      %v3221 = vpop.f32.mrf.mxu0
      %v3222 = vadd.f32 0.0, %v3221
      %v3223 = vpop.f32.mrf.mxu0
      %v3224 = vadd.f32 0.0, %v3223
      %3225 = vmatmul.bf16.gmra.mxu0 %v3077
      %v3226 = vpop.f32.mrf.mxu0
      %v3227 = vadd.f32 0.0, %v3226
      %v3228 = vpop.f32.mrf.mxu0
      %v3229 = vadd.f32 0.0, %v3228
      %3230 = vdwg.mxu0
      %v3231 = vadd.f32 %v2916, %v3152
      %v3232 = vadd.f32 %v2917, %v3154
      %v3233 = vadd.f32 %v2918, %v3157
      %v3234 = vadd.f32 %v2919, %v3159
      %v3235 = vadd.f32 %v2920, %v3162
      %v3236 = vadd.f32 %v2921, %v3164
      %v3237 = vadd.f32 %v2922, %v3167
      %v3238 = vadd.f32 %v2923, %v3169
      %v3239 = vadd.f32 %v2924, %v3172
      %v3240 = vadd.f32 %v2925, %v3174
      %v3241 = vadd.f32 %v2926, %v3177
      %v3242 = vadd.f32 %v2927, %v3179
      %v3243 = vadd.f32 %v2928, %v3182
      %v3244 = vadd.f32 %v2929, %v3184
      %v3245 = vadd.f32 %v2930, %v3187
      %v3246 = vadd.f32 %v2931, %v3189
      %v3247 = vadd.f32 %v2932, %v3192
      %v3248 = vadd.f32 %v2933, %v3194
      %v3249 = vadd.f32 %v2934, %v3197
      %v3250 = vadd.f32 %v2935, %v3199
      %v3251 = vadd.f32 %v2936, %v3202
      %v3252 = vadd.f32 %v2937, %v3204
      %v3253 = vadd.f32 %v2938, %v3207
      %v3254 = vadd.f32 %v2939, %v3209
      %v3255 = vadd.f32 %v2940, %v3212
      %v3256 = vadd.f32 %v2941, %v3214
      %v3257 = vadd.f32 %v2942, %v3217
      %v3258 = vadd.f32 %v2943, %v3219
      %v3259 = vadd.f32 %v2944, %v3222
      %v3260 = vadd.f32 %v2945, %v3224
      %v3261 = vadd.f32 %v2946, %v3227
      %v3262 = vadd.f32 %v2947, %v3229
      %v3263 = vld [vmem:[%s2948] sm:$0xf]
      %v3264 = vld [vmem:[%s2948 + $0x4] sm:$0xf]
      %v3265 = vld [vmem:[%s2948 + $0x8] sm:$0x1]
      %v3266 = vld [vmem:[%s2948 + $0xc] sm:$0xf]
      %v3267 = vld [vmem:[%s2948 + $0x10] sm:$0xf]
      %v3268 = vld [vmem:[%s2948 + $0x14] sm:$0x1]
      %v3269 = vld [vmem:[%s2948 + $0x18] sm:$0xf]
      %v3270 = vld [vmem:[%s2948 + $0x1c] sm:$0xf]
      %v3271 = vld [vmem:[%s2948 + $0x20] sm:$0x1]
      %v3272 = vld [vmem:[%s2948 + $0x24] sm:$0xf]
      %v3273 = vld [vmem:[%s2948 + $0x28] sm:$0xf]
      %v3274 = vld [vmem:[%s2948 + $0x2c] sm:$0x1]
      %v3275 = vld [vmem:[%s2948 + $0x30] sm:$0xf]
      %v3276 = vld [vmem:[%s2948 + $0x34] sm:$0xf]
      %v3277 = vld [vmem:[%s2948 + $0x38] sm:$0x1]
      %v3278 = vld [vmem:[%s2948 + $0x3c] sm:$0xf]
      %v3279 = vld [vmem:[%s2948 + $0x40] sm:$0xf]
      %v3280 = vld [vmem:[%s2948 + $0x44] sm:$0x1]
      %v3281 = vld [vmem:[%s2948 + $0x48] sm:$0xf]
      %v3282 = vld [vmem:[%s2948 + $0x4c] sm:$0xf]
      %v3283 = vld [vmem:[%s2948 + $0x50] sm:$0x1]
      %v3284 = vld [vmem:[%s2948 + $0x54] sm:$0xf]
      %v3285 = vld [vmem:[%s2948 + $0x58] sm:$0xf]
      %v3286 = vld [vmem:[%s2948 + $0x5c] sm:$0x1]
      %v3287 = vld [vmem:[%s2948 + $0x60] sm:$0xf]
      %v3288 = vld [vmem:[%s2948 + $0x64] sm:$0xf]
      %v3289 = vld [vmem:[%s2948 + $0x68] sm:$0x1]
      %v3290 = vld [vmem:[%s2948 + $0x6c] sm:$0xf]
      %v3291 = vld [vmem:[%s2948 + $0x70] sm:$0xf]
      %v3292 = vld [vmem:[%s2948 + $0x74] sm:$0x1]
      %v3293 = vld [vmem:[%s2948 + $0x78] sm:$0xf]
      %v3294 = vld [vmem:[%s2948 + $0x7c] sm:$0xf]
      %v3295 = vld [vmem:[%s2948 + $0x80] sm:$0x1]
      %v3296 = vld [vmem:[%s2948 + $0x84] sm:$0xf]
      %v3297 = vld [vmem:[%s2948 + $0x88] sm:$0xf]
      %v3298 = vld [vmem:[%s2948 + $0x8c] sm:$0x1]
      %v3299 = vld [vmem:[%s2948 + $0x90] sm:$0xf]
      %v3300 = vld [vmem:[%s2948 + $0x94] sm:$0xf]
      %v3301 = vld [vmem:[%s2948 + $0x98] sm:$0x1]
      %v3302 = vld [vmem:[%s2948 + $0x9c] sm:$0xf]
      %v3303 = vld [vmem:[%s2948 + $0xa0] sm:$0xf]
      %v3304 = vld [vmem:[%s2948 + $0xa4] sm:$0x1]
      %v3305 = vld [vmem:[%s2948 + $0xa8] sm:$0xf]
      %v3306 = vld [vmem:[%s2948 + $0xac] sm:$0xf]
      %v3307 = vld [vmem:[%s2948 + $0xb0] sm:$0x1]
      %v3308 = vld [vmem:[%s2948 + $0xb4] sm:$0xf]
      %v3309 = vld [vmem:[%s2948 + $0xb8] sm:$0xf]
      %v3310 = vld [vmem:[%s2948 + $0xbc] sm:$0x1]
      %v3312 = vshrl.u32 %v3263, 16
      %v3314 = vrot.slane %v3312, 4
      %v3315 = vshll.u32 %v3263, 16
      %v3317 = vrot.slane %v3315, 5
      %v3318 = vor.u32 %v3314, %v3317
      %v3319 = vrot.slane %v3318, 4
      %v3321 = vshll.u32 %v3264, 16
      %v3323 = vrot.slane %v3321, 5
      %v3324 = vsel %vm276, %v3319, %v3323
      %v3325 = vshrl.u32 %v3264, 16
      %v3327 = vrot.slane %v3325, 4
      %v3328 = vor.u32 %v3327, %v3323
      %v3329 = vrot.slane %v3328, 4
      %v3331 = vshll.u32 %v3265, 16
      %v3333 = vrot.slane %v3331, 5
      %v3334 = vsel %vm276, %v3329, %v3333
      %v3336 = vshrl.u32 %v3266, 16
      %v3338 = vrot.slane %v3336, 4
      %v3339 = vshll.u32 %v3266, 16
      %v3341 = vrot.slane %v3339, 5
      %v3342 = vor.u32 %v3338, %v3341
      %v3343 = vrot.slane %v3342, 4
      %v3345 = vshll.u32 %v3267, 16
      %v3347 = vrot.slane %v3345, 5
      %v3348 = vsel %vm276, %v3343, %v3347
      %v3349 = vshrl.u32 %v3267, 16
      %v3351 = vrot.slane %v3349, 4
      %v3352 = vor.u32 %v3351, %v3347
      %v3353 = vrot.slane %v3352, 4
      %v3355 = vshll.u32 %v3268, 16
      %v3357 = vrot.slane %v3355, 5
      %v3358 = vsel %vm276, %v3353, %v3357
      %v3360 = vshrl.u32 %v3269, 16
      %v3362 = vrot.slane %v3360, 4
      %v3363 = vshll.u32 %v3269, 16
      %v3365 = vrot.slane %v3363, 5
      %v3366 = vor.u32 %v3362, %v3365
      %v3367 = vrot.slane %v3366, 4
      %v3369 = vshll.u32 %v3270, 16
      %v3371 = vrot.slane %v3369, 5
      %v3372 = vsel %vm276, %v3367, %v3371
      %v3373 = vshrl.u32 %v3270, 16
      %v3375 = vrot.slane %v3373, 4
      %v3376 = vor.u32 %v3375, %v3371
      %v3377 = vrot.slane %v3376, 4
      %v3379 = vshll.u32 %v3271, 16
      %v3381 = vrot.slane %v3379, 5
      %v3382 = vsel %vm276, %v3377, %v3381
      %v3384 = vshrl.u32 %v3272, 16
      %v3386 = vrot.slane %v3384, 4
      %v3387 = vshll.u32 %v3272, 16
      %v3389 = vrot.slane %v3387, 5
      %v3390 = vor.u32 %v3386, %v3389
      %v3391 = vrot.slane %v3390, 4
      %v3393 = vshll.u32 %v3273, 16
      %v3395 = vrot.slane %v3393, 5
      %v3396 = vsel %vm276, %v3391, %v3395
      %v3397 = vshrl.u32 %v3273, 16
      %v3399 = vrot.slane %v3397, 4
      %v3400 = vor.u32 %v3399, %v3395
      %v3401 = vrot.slane %v3400, 4
      %v3403 = vshll.u32 %v3274, 16
      %v3405 = vrot.slane %v3403, 5
      %v3406 = vsel %vm276, %v3401, %v3405
      %v3408 = vshrl.u32 %v3275, 16
      %v3410 = vrot.slane %v3408, 4
      %v3411 = vshll.u32 %v3275, 16
      %v3413 = vrot.slane %v3411, 5
      %v3414 = vor.u32 %v3410, %v3413
      %v3415 = vrot.slane %v3414, 4
      %v3417 = vshll.u32 %v3276, 16
      %v3419 = vrot.slane %v3417, 5
      %v3420 = vsel %vm276, %v3415, %v3419
      %v3421 = vshrl.u32 %v3276, 16
      %v3423 = vrot.slane %v3421, 4
      %v3424 = vor.u32 %v3423, %v3419
      %v3425 = vrot.slane %v3424, 4
      %v3427 = vshll.u32 %v3277, 16
      %v3429 = vrot.slane %v3427, 5
      %v3430 = vsel %vm276, %v3425, %v3429
      %v3432 = vshrl.u32 %v3278, 16
      %v3434 = vrot.slane %v3432, 4
      %v3435 = vshll.u32 %v3278, 16
      %v3437 = vrot.slane %v3435, 5
      %v3438 = vor.u32 %v3434, %v3437
      %v3439 = vrot.slane %v3438, 4
      %v3441 = vshll.u32 %v3279, 16
      %v3443 = vrot.slane %v3441, 5
      %v3444 = vsel %vm276, %v3439, %v3443
      %v3445 = vshrl.u32 %v3279, 16
      %v3447 = vrot.slane %v3445, 4
      %v3448 = vor.u32 %v3447, %v3443
      %v3449 = vrot.slane %v3448, 4
      %v3451 = vshll.u32 %v3280, 16
      %v3453 = vrot.slane %v3451, 5
      %v3454 = vsel %vm276, %v3449, %v3453
      %v3456 = vshrl.u32 %v3281, 16
      %v3458 = vrot.slane %v3456, 4
      %v3459 = vshll.u32 %v3281, 16
      %v3461 = vrot.slane %v3459, 5
      %v3462 = vor.u32 %v3458, %v3461
      %v3463 = vrot.slane %v3462, 4
      %v3465 = vshll.u32 %v3282, 16
      %v3467 = vrot.slane %v3465, 5
      %v3468 = vsel %vm276, %v3463, %v3467
      %v3469 = vshrl.u32 %v3282, 16
      %v3471 = vrot.slane %v3469, 4
      %v3472 = vor.u32 %v3471, %v3467
      %v3473 = vrot.slane %v3472, 4
      %v3475 = vshll.u32 %v3283, 16
      %v3477 = vrot.slane %v3475, 5
      %v3478 = vsel %vm276, %v3473, %v3477
      %v3480 = vshrl.u32 %v3284, 16
      %v3482 = vrot.slane %v3480, 4
      %v3483 = vshll.u32 %v3284, 16
      %v3485 = vrot.slane %v3483, 5
      %v3486 = vor.u32 %v3482, %v3485
      %v3487 = vrot.slane %v3486, 4
      %v3489 = vshll.u32 %v3285, 16
      %v3491 = vrot.slane %v3489, 5
      %v3492 = vsel %vm276, %v3487, %v3491
      %v3493 = vshrl.u32 %v3285, 16
      %v3495 = vrot.slane %v3493, 4
      %v3496 = vor.u32 %v3495, %v3491
      %v3497 = vrot.slane %v3496, 4
      %v3499 = vshll.u32 %v3286, 16
      %v3501 = vrot.slane %v3499, 5
      %v3502 = vsel %vm276, %v3497, %v3501
      %v3504 = vshrl.u32 %v3287, 16
      %v3506 = vrot.slane %v3504, 4
      %v3507 = vshll.u32 %v3287, 16
      %v3509 = vrot.slane %v3507, 5
      %v3510 = vor.u32 %v3506, %v3509
      %v3511 = vrot.slane %v3510, 4
      %v3513 = vshll.u32 %v3288, 16
      %v3515 = vrot.slane %v3513, 5
      %v3516 = vsel %vm276, %v3511, %v3515
      %v3517 = vshrl.u32 %v3288, 16
      %v3519 = vrot.slane %v3517, 4
      %v3520 = vor.u32 %v3519, %v3515
      %v3521 = vrot.slane %v3520, 4
      %v3523 = vshll.u32 %v3289, 16
      %v3525 = vrot.slane %v3523, 5
      %v3526 = vsel %vm276, %v3521, %v3525
      %v3528 = vshrl.u32 %v3290, 16
      %v3530 = vrot.slane %v3528, 4
      %v3531 = vshll.u32 %v3290, 16
      %v3533 = vrot.slane %v3531, 5
      %v3534 = vor.u32 %v3530, %v3533
      %v3535 = vrot.slane %v3534, 4
      %v3537 = vshll.u32 %v3291, 16
      %v3539 = vrot.slane %v3537, 5
      %v3540 = vsel %vm276, %v3535, %v3539
      %v3541 = vshrl.u32 %v3291, 16
      %v3543 = vrot.slane %v3541, 4
      %v3544 = vor.u32 %v3543, %v3539
      %v3545 = vrot.slane %v3544, 4
      %v3547 = vshll.u32 %v3292, 16
      %v3549 = vrot.slane %v3547, 5
      %v3550 = vsel %vm276, %v3545, %v3549
      %v3552 = vshrl.u32 %v3293, 16
      %v3554 = vrot.slane %v3552, 4
      %v3555 = vshll.u32 %v3293, 16
      %v3557 = vrot.slane %v3555, 5
      %v3558 = vor.u32 %v3554, %v3557
      %v3559 = vrot.slane %v3558, 4
      %v3561 = vshll.u32 %v3294, 16
      %v3563 = vrot.slane %v3561, 5
      %v3564 = vsel %vm276, %v3559, %v3563
      %v3565 = vshrl.u32 %v3294, 16
      %v3567 = vrot.slane %v3565, 4
      %v3568 = vor.u32 %v3567, %v3563
      %v3569 = vrot.slane %v3568, 4
      %v3571 = vshll.u32 %v3295, 16
      %v3573 = vrot.slane %v3571, 5
      %v3574 = vsel %vm276, %v3569, %v3573
      %v3576 = vshrl.u32 %v3296, 16
      %v3578 = vrot.slane %v3576, 4
      %v3579 = vshll.u32 %v3296, 16
      %v3581 = vrot.slane %v3579, 5
      %v3582 = vor.u32 %v3578, %v3581
      %v3583 = vrot.slane %v3582, 4
      %v3585 = vshll.u32 %v3297, 16
      %v3587 = vrot.slane %v3585, 5
      %v3588 = vsel %vm276, %v3583, %v3587
      %v3589 = vshrl.u32 %v3297, 16
      %v3591 = vrot.slane %v3589, 4
      %v3592 = vor.u32 %v3591, %v3587
      %v3593 = vrot.slane %v3592, 4
      %v3595 = vshll.u32 %v3298, 16
      %v3597 = vrot.slane %v3595, 5
      %v3598 = vsel %vm276, %v3593, %v3597
      %v3600 = vshrl.u32 %v3299, 16
      %v3602 = vrot.slane %v3600, 4
      %v3603 = vshll.u32 %v3299, 16
      %v3605 = vrot.slane %v3603, 5
      %v3606 = vor.u32 %v3602, %v3605
      %v3607 = vrot.slane %v3606, 4
      %v3609 = vshll.u32 %v3300, 16
      %v3611 = vrot.slane %v3609, 5
      %v3612 = vsel %vm276, %v3607, %v3611
      %v3613 = vshrl.u32 %v3300, 16
      %v3615 = vrot.slane %v3613, 4
      %v3616 = vor.u32 %v3615, %v3611
      %v3617 = vrot.slane %v3616, 4
      %v3619 = vshll.u32 %v3301, 16
      %v3621 = vrot.slane %v3619, 5
      %v3622 = vsel %vm276, %v3617, %v3621
      %v3624 = vshrl.u32 %v3302, 16
      %v3626 = vrot.slane %v3624, 4
      %v3627 = vshll.u32 %v3302, 16
      %v3629 = vrot.slane %v3627, 5
      %v3630 = vor.u32 %v3626, %v3629
      %v3631 = vrot.slane %v3630, 4
      %v3633 = vshll.u32 %v3303, 16
      %v3635 = vrot.slane %v3633, 5
      %v3636 = vsel %vm276, %v3631, %v3635
      %v3637 = vshrl.u32 %v3303, 16
      %v3639 = vrot.slane %v3637, 4
      %v3640 = vor.u32 %v3639, %v3635
      %v3641 = vrot.slane %v3640, 4
      %v3643 = vshll.u32 %v3304, 16
      %v3645 = vrot.slane %v3643, 5
      %v3646 = vsel %vm276, %v3641, %v3645
      %v3648 = vshrl.u32 %v3305, 16
      %v3650 = vrot.slane %v3648, 4
      %v3651 = vshll.u32 %v3305, 16
      %v3653 = vrot.slane %v3651, 5
      %v3654 = vor.u32 %v3650, %v3653
      %v3655 = vrot.slane %v3654, 4
      %v3657 = vshll.u32 %v3306, 16
      %v3659 = vrot.slane %v3657, 5
      %v3660 = vsel %vm276, %v3655, %v3659
      %v3661 = vshrl.u32 %v3306, 16
      %v3663 = vrot.slane %v3661, 4
      %v3664 = vor.u32 %v3663, %v3659
      %v3665 = vrot.slane %v3664, 4
      %v3667 = vshll.u32 %v3307, 16
      %v3669 = vrot.slane %v3667, 5
      %v3670 = vsel %vm276, %v3665, %v3669
      %v3672 = vshrl.u32 %v3308, 16
      %v3674 = vrot.slane %v3672, 4
      %v3675 = vshll.u32 %v3308, 16
      %v3677 = vrot.slane %v3675, 5
      %v3678 = vor.u32 %v3674, %v3677
      %v3679 = vrot.slane %v3678, 4
      %v3681 = vshll.u32 %v3309, 16
      %v3683 = vrot.slane %v3681, 5
      %v3684 = vsel %vm276, %v3679, %v3683
      %v3685 = vshrl.u32 %v3309, 16
      %v3687 = vrot.slane %v3685, 4
      %v3688 = vor.u32 %v3687, %v3683
      %v3689 = vrot.slane %v3688, 4
      %v3691 = vshll.u32 %v3310, 16
      %v3693 = vrot.slane %v3691, 5
      %v3694 = vsel %vm276, %v3689, %v3693
      %s3695 = scalar_lea.vmem %s1, 448
      %v3696 = vld [vmem:[%s3695] sm:$0xf]
      %v3697 = vld [vmem:[%s3695 + $0x4] sm:$0xf]
      %v3698 = vld [vmem:[%s3695 + $0x8] sm:$0xf]
      %v3699 = vld [vmem:[%s3695 + $0xc] sm:$0xf]
      %v3700 = vld [vmem:[%s3695 + $0x10] sm:$0xf]
      %v3701 = vld [vmem:[%s3695 + $0x14] sm:$0xf]
      %v3702 = vld [vmem:[%s3695 + $0x18] sm:$0xf]
      %v3703 = vld [vmem:[%s3695 + $0x1c] sm:$0xf]
      %v3704 = vld [vmem:[%s3695 + $0x20] sm:$0xf]
      %v3705 = vld [vmem:[%s3695 + $0x24] sm:$0xf]
      %v3706 = vld [vmem:[%s3695 + $0x28] sm:$0xf]
      %v3707 = vld [vmem:[%s3695 + $0x2c] sm:$0xf]
      %v3708 = vld [vmem:[%s3695 + $0x30] sm:$0xf]
      %v3709 = vld [vmem:[%s3695 + $0x34] sm:$0xf]
      %v3710 = vld [vmem:[%s3695 + $0x38] sm:$0xf]
      %v3711 = vld [vmem:[%s3695 + $0x3c] sm:$0xf]
      %v3712 = vunpack.c.l.b16 %v3324
      %v3713 = vunpack.c.l.b16 %v3334
      %v3714 = vunpack.c.l.b16 %v3348
      %v3715 = vunpack.c.l.b16 %v3358
      %v3716 = vunpack.c.l.b16 %v3372
      %v3717 = vunpack.c.l.b16 %v3382
      %v3718 = vunpack.c.l.b16 %v3396
      %v3719 = vunpack.c.l.b16 %v3406
      %v3720 = vunpack.c.l.b16 %v3420
      %v3721 = vunpack.c.l.b16 %v3430
      %v3722 = vunpack.c.l.b16 %v3444
      %v3723 = vunpack.c.l.b16 %v3454
      %v3724 = vunpack.c.l.b16 %v3468
      %v3725 = vunpack.c.l.b16 %v3478
      %v3726 = vunpack.c.l.b16 %v3492
      %v3727 = vunpack.c.l.b16 %v3502
      %v3728 = vunpack.c.l.b16 %v3516
      %v3729 = vunpack.c.l.b16 %v3526
      %v3730 = vunpack.c.l.b16 %v3540
      %v3731 = vunpack.c.l.b16 %v3550
      %v3732 = vunpack.c.l.b16 %v3564
      %v3733 = vunpack.c.l.b16 %v3574
      %v3734 = vunpack.c.l.b16 %v3588
      %v3735 = vunpack.c.l.b16 %v3598
      %v3736 = vunpack.c.l.b16 %v3612
      %v3737 = vunpack.c.l.b16 %v3622
      %v3738 = vunpack.c.l.b16 %v3636
      %v3739 = vunpack.c.l.b16 %v3646
      %v3740 = vunpack.c.l.b16 %v3660
      %v3741 = vunpack.c.l.b16 %v3670
      %v3742 = vunpack.c.l.b16 %v3684
      %v3743 = vunpack.c.l.b16 %v3694
      %v3744 = vpack.c.b16 %v3713, %v3712
      %v3745 = vpack.c.b16 %v3715, %v3714
      %v3746 = vpack.c.b16 %v3717, %v3716
      %v3747 = vpack.c.b16 %v3719, %v3718
      %v3748 = vpack.c.b16 %v3721, %v3720
      %v3749 = vpack.c.b16 %v3723, %v3722
      %v3750 = vpack.c.b16 %v3725, %v3724
      %v3751 = vpack.c.b16 %v3727, %v3726
      %v3752 = vpack.c.b16 %v3729, %v3728
      %v3753 = vpack.c.b16 %v3731, %v3730
      %v3754 = vpack.c.b16 %v3733, %v3732
      %v3755 = vpack.c.b16 %v3735, %v3734
      %v3756 = vpack.c.b16 %v3737, %v3736
      %v3757 = vpack.c.b16 %v3739, %v3738
      %v3758 = vpack.c.b16 %v3741, %v3740
      %v3759 = vpack.c.b16 %v3743, %v3742
      %v3792 = vunpack.c.l.b16 %v3696
      %v3793 = vunpack.c.l.b16 %v3697
      %v3794 = vunpack.c.l.b16 %v3698
      %v3795 = vunpack.c.l.b16 %v3699
      %v3796 = vunpack.c.l.b16 %v3700
      %v3797 = vunpack.c.l.b16 %v3701
      %v3798 = vunpack.c.l.b16 %v3702
      %v3799 = vunpack.c.l.b16 %v3703
      %v3800 = vunpack.c.l.b16 %v3704
      %v3801 = vunpack.c.l.b16 %v3705
      %v3802 = vunpack.c.l.b16 %v3706
      %v3803 = vunpack.c.l.b16 %v3707
      %v3804 = vunpack.c.l.b16 %v3708
      %v3805 = vunpack.c.l.b16 %v3709
      %v3806 = vunpack.c.l.b16 %v3710
      %v3807 = vunpack.c.l.b16 %v3711
      %v3808 = vpack.c.b16 %v3793, %v3792
      %v3809 = vpack.c.b16 %v3795, %v3794
      %v3810 = vpack.c.b16 %v3797, %v3796
      %v3811 = vpack.c.b16 %v3799, %v3798
      %v3812 = vpack.c.b16 %v3801, %v3800
      %v3813 = vpack.c.b16 %v3803, %v3802
      %v3814 = vpack.c.b16 %v3805, %v3804
      %v3815 = vpack.c.b16 %v3807, %v3806
      %3824 = vmatpush.bf16.msra.mxu0 %v3815
      %3825 = vmatpush.bf16.msra.mxu0 %v3814
      %3826 = vmatpush.bf16.msra.mxu0 %v3813
      %3827 = vmatpush.bf16.msra.mxu0 %v3812
      %3828 = vmatpush.bf16.msra.mxu0 %v3811
      %3829 = vmatpush.bf16.msra.mxu0 %v3810
      %3830 = vmatpush.bf16.msra.mxu0 %v3809
      %3831 = vmatpush.bf16.msra.mxu0 %v3808
      %3832 = vmatmul.bf16.gmra.mxu0 %v3744
      %v3833 = vpop.f32.mrf.mxu0
      %v3834 = vadd.f32 0.0, %v3833
      %v3835 = vpop.f32.mrf.mxu0
      %v3836 = vadd.f32 0.0, %v3835
      %3837 = vmatmul.bf16.gmra.mxu0 %v3745
      %v3838 = vpop.f32.mrf.mxu0
      %v3839 = vadd.f32 0.0, %v3838
      %v3840 = vpop.f32.mrf.mxu0
      %v3841 = vadd.f32 0.0, %v3840
      %3842 = vmatmul.bf16.gmra.mxu0 %v3746
      %v3843 = vpop.f32.mrf.mxu0
      %v3844 = vadd.f32 0.0, %v3843
      %v3845 = vpop.f32.mrf.mxu0
      %v3846 = vadd.f32 0.0, %v3845
      %3847 = vmatmul.bf16.gmra.mxu0 %v3747
      %v3848 = vpop.f32.mrf.mxu0
      %v3849 = vadd.f32 0.0, %v3848
      %v3850 = vpop.f32.mrf.mxu0
      %v3851 = vadd.f32 0.0, %v3850
      %3852 = vmatmul.bf16.gmra.mxu0 %v3748
      %v3853 = vpop.f32.mrf.mxu0
      %v3854 = vadd.f32 0.0, %v3853
      %v3855 = vpop.f32.mrf.mxu0
      %v3856 = vadd.f32 0.0, %v3855
      %3857 = vmatmul.bf16.gmra.mxu0 %v3749
      %v3858 = vpop.f32.mrf.mxu0
      %v3859 = vadd.f32 0.0, %v3858
      %v3860 = vpop.f32.mrf.mxu0
      %v3861 = vadd.f32 0.0, %v3860
      %3862 = vmatmul.bf16.gmra.mxu0 %v3750
      %v3863 = vpop.f32.mrf.mxu0
      %v3864 = vadd.f32 0.0, %v3863
      %v3865 = vpop.f32.mrf.mxu0
      %v3866 = vadd.f32 0.0, %v3865
      %3867 = vmatmul.bf16.gmra.mxu0 %v3751
      %v3868 = vpop.f32.mrf.mxu0
      %v3869 = vadd.f32 0.0, %v3868
      %v3870 = vpop.f32.mrf.mxu0
      %v3871 = vadd.f32 0.0, %v3870
      %3872 = vmatmul.bf16.gmra.mxu0 %v3752
      %v3873 = vpop.f32.mrf.mxu0
      %v3874 = vadd.f32 0.0, %v3873
      %v3875 = vpop.f32.mrf.mxu0
      %v3876 = vadd.f32 0.0, %v3875
      %3877 = vmatmul.bf16.gmra.mxu0 %v3753
      %v3878 = vpop.f32.mrf.mxu0
      %v3879 = vadd.f32 0.0, %v3878
      %v3880 = vpop.f32.mrf.mxu0
      %v3881 = vadd.f32 0.0, %v3880
      %3882 = vmatmul.bf16.gmra.mxu0 %v3754
      %v3883 = vpop.f32.mrf.mxu0
      %v3884 = vadd.f32 0.0, %v3883
      %v3885 = vpop.f32.mrf.mxu0
      %v3886 = vadd.f32 0.0, %v3885
      %3887 = vmatmul.bf16.gmra.mxu0 %v3755
      %v3888 = vpop.f32.mrf.mxu0
      %v3889 = vadd.f32 0.0, %v3888
      %v3890 = vpop.f32.mrf.mxu0
      %v3891 = vadd.f32 0.0, %v3890
      %3892 = vmatmul.bf16.gmra.mxu0 %v3756
      %v3893 = vpop.f32.mrf.mxu0
      %v3894 = vadd.f32 0.0, %v3893
      %v3895 = vpop.f32.mrf.mxu0
      %v3896 = vadd.f32 0.0, %v3895
      %3897 = vmatmul.bf16.gmra.mxu0 %v3757
      %v3898 = vpop.f32.mrf.mxu0
      %v3899 = vadd.f32 0.0, %v3898
      %v3900 = vpop.f32.mrf.mxu0
      %v3901 = vadd.f32 0.0, %v3900
      %3902 = vmatmul.bf16.gmra.mxu0 %v3758
      %v3903 = vpop.f32.mrf.mxu0
      %v3904 = vadd.f32 0.0, %v3903
      %v3905 = vpop.f32.mrf.mxu0
      %v3906 = vadd.f32 0.0, %v3905
      %3907 = vmatmul.bf16.gmra.mxu0 %v3759
      %v3908 = vpop.f32.mrf.mxu0
      %v3909 = vadd.f32 0.0, %v3908
      %v3910 = vpop.f32.mrf.mxu0
      %v3911 = vadd.f32 0.0, %v3910
      %3912 = vdwg.mxu0
      %v3913 = vadd.f32 %v3231, %v3834
      %v3914 = vadd.f32 %v3232, %v3836
      %v3915 = vadd.f32 %v3233, %v3839
      %v3916 = vadd.f32 %v3234, %v3841
      %v3917 = vadd.f32 %v3235, %v3844
      %v3918 = vadd.f32 %v3236, %v3846
      %v3919 = vadd.f32 %v3237, %v3849
      %v3920 = vadd.f32 %v3238, %v3851
      %v3921 = vadd.f32 %v3239, %v3854
      %v3922 = vadd.f32 %v3240, %v3856
      %v3923 = vadd.f32 %v3241, %v3859
      %v3924 = vadd.f32 %v3242, %v3861
      %v3925 = vadd.f32 %v3243, %v3864
      %v3926 = vadd.f32 %v3244, %v3866
      %v3927 = vadd.f32 %v3245, %v3869
      %v3928 = vadd.f32 %v3246, %v3871
      %v3929 = vadd.f32 %v3247, %v3874
      %v3930 = vadd.f32 %v3248, %v3876
      %v3931 = vadd.f32 %v3249, %v3879
      %v3932 = vadd.f32 %v3250, %v3881
      %v3933 = vadd.f32 %v3251, %v3884
      %v3934 = vadd.f32 %v3252, %v3886
      %v3935 = vadd.f32 %v3253, %v3889
      %v3936 = vadd.f32 %v3254, %v3891
      %v3937 = vadd.f32 %v3255, %v3894
      %v3938 = vadd.f32 %v3256, %v3896
      %v3939 = vadd.f32 %v3257, %v3899
      %v3940 = vadd.f32 %v3258, %v3901
      %v3941 = vadd.f32 %v3259, %v3904
      %v3942 = vadd.f32 %v3260, %v3906
      %v3943 = vadd.f32 %v3261, %v3909
      %v3944 = vadd.f32 %v3262, %v3911
      %v3945 = vld [vmem:[%s2948] sm:$0xe]
      %v3946 = vld [vmem:[%s2948 + $0xc] sm:$0xe]
      %v3947 = vld [vmem:[%s2948 + $0x18] sm:$0xe]
      %v3948 = vld [vmem:[%s2948 + $0x24] sm:$0xe]
      %v3949 = vld [vmem:[%s2948 + $0x30] sm:$0xe]
      %v3950 = vld [vmem:[%s2948 + $0x3c] sm:$0xe]
      %v3951 = vld [vmem:[%s2948 + $0x48] sm:$0xe]
      %v3952 = vld [vmem:[%s2948 + $0x54] sm:$0xe]
      %v3953 = vld [vmem:[%s2948 + $0x60] sm:$0xe]
      %v3954 = vld [vmem:[%s2948 + $0x6c] sm:$0xe]
      %v3955 = vld [vmem:[%s2948 + $0x78] sm:$0xe]
      %v3956 = vld [vmem:[%s2948 + $0x84] sm:$0xe]
      %v3957 = vld [vmem:[%s2948 + $0x90] sm:$0xe]
      %v3958 = vld [vmem:[%s2948 + $0x9c] sm:$0xe]
      %v3959 = vld [vmem:[%s2948 + $0xa8] sm:$0xe]
      %v3960 = vld [vmem:[%s2948 + $0xb4] sm:$0xe]
      %v4009 = vrot.slane %v3945, 5
      %v4010 = vrot.slane %v4009, 4
      %v4011 = vrot.slane %v3264, 5
      %v4012 = vsel %vm1162, %v4010, %v4011
      %v4013 = vrot.slane %v4011, 4
      %v4014 = vrot.slane %v3265, 5
      %v4015 = vsel %vm1162, %v4013, %v4014
      %v4016 = vrot.slane %v3946, 5
      %v4017 = vrot.slane %v4016, 4
      %v4018 = vrot.slane %v3267, 5
      %v4019 = vsel %vm1162, %v4017, %v4018
      %v4020 = vrot.slane %v4018, 4
      %v4021 = vrot.slane %v3268, 5
      %v4022 = vsel %vm1162, %v4020, %v4021
      %v4023 = vrot.slane %v3947, 5
      %v4024 = vrot.slane %v4023, 4
      %v4025 = vrot.slane %v3270, 5
      %v4026 = vsel %vm1162, %v4024, %v4025
      %v4027 = vrot.slane %v4025, 4
      %v4028 = vrot.slane %v3271, 5
      %v4029 = vsel %vm1162, %v4027, %v4028
      %v4030 = vrot.slane %v3948, 5
      %v4031 = vrot.slane %v4030, 4
      %v4032 = vrot.slane %v3273, 5
      %v4033 = vsel %vm1162, %v4031, %v4032
      %v4034 = vrot.slane %v4032, 4
      %v4035 = vrot.slane %v3274, 5
      %v4036 = vsel %vm1162, %v4034, %v4035
      %v4037 = vrot.slane %v3949, 5
      %v4038 = vrot.slane %v4037, 4
      %v4039 = vrot.slane %v3276, 5
      %v4040 = vsel %vm1162, %v4038, %v4039
      %v4041 = vrot.slane %v4039, 4
      %v4042 = vrot.slane %v3277, 5
      %v4043 = vsel %vm1162, %v4041, %v4042
      %v4044 = vrot.slane %v3950, 5
      %v4045 = vrot.slane %v4044, 4
      %v4046 = vrot.slane %v3279, 5
      %v4047 = vsel %vm1162, %v4045, %v4046
      %v4048 = vrot.slane %v4046, 4
      %v4049 = vrot.slane %v3280, 5
      %v4050 = vsel %vm1162, %v4048, %v4049
      %v4051 = vrot.slane %v3951, 5
      %v4052 = vrot.slane %v4051, 4
      %v4053 = vrot.slane %v3282, 5
      %v4054 = vsel %vm1162, %v4052, %v4053
      %v4055 = vrot.slane %v4053, 4
      %v4056 = vrot.slane %v3283, 5
      %v4057 = vsel %vm1162, %v4055, %v4056
      %v4058 = vrot.slane %v3952, 5
      %v4059 = vrot.slane %v4058, 4
      %v4060 = vrot.slane %v3285, 5
      %v4061 = vsel %vm1162, %v4059, %v4060
      %v4062 = vrot.slane %v4060, 4
      %v4063 = vrot.slane %v3286, 5
      %v4064 = vsel %vm1162, %v4062, %v4063
      %v4065 = vrot.slane %v3953, 5
      %v4066 = vrot.slane %v4065, 4
      %v4067 = vrot.slane %v3288, 5
      %v4068 = vsel %vm1162, %v4066, %v4067
      %v4069 = vrot.slane %v4067, 4
      %v4070 = vrot.slane %v3289, 5
      %v4071 = vsel %vm1162, %v4069, %v4070
      %v4072 = vrot.slane %v3954, 5
      %v4073 = vrot.slane %v4072, 4
      %v4074 = vrot.slane %v3291, 5
      %v4075 = vsel %vm1162, %v4073, %v4074
      %v4076 = vrot.slane %v4074, 4
      %v4077 = vrot.slane %v3292, 5
      %v4078 = vsel %vm1162, %v4076, %v4077
      %v4079 = vrot.slane %v3955, 5
      %v4080 = vrot.slane %v4079, 4
      %v4081 = vrot.slane %v3294, 5
      %v4082 = vsel %vm1162, %v4080, %v4081
      %v4083 = vrot.slane %v4081, 4
      %v4084 = vrot.slane %v3295, 5
      %v4085 = vsel %vm1162, %v4083, %v4084
      %v4086 = vrot.slane %v3956, 5
      %v4087 = vrot.slane %v4086, 4
      %v4088 = vrot.slane %v3297, 5
      %v4089 = vsel %vm1162, %v4087, %v4088
      %v4090 = vrot.slane %v4088, 4
      %v4091 = vrot.slane %v3298, 5
      %v4092 = vsel %vm1162, %v4090, %v4091
      %v4093 = vrot.slane %v3957, 5
      %v4094 = vrot.slane %v4093, 4
      %v4095 = vrot.slane %v3300, 5
      %v4096 = vsel %vm1162, %v4094, %v4095
      %v4097 = vrot.slane %v4095, 4
      %v4098 = vrot.slane %v3301, 5
      %v4099 = vsel %vm1162, %v4097, %v4098
      %v4100 = vrot.slane %v3958, 5
      %v4101 = vrot.slane %v4100, 4
      %v4102 = vrot.slane %v3303, 5
      %v4103 = vsel %vm1162, %v4101, %v4102
      %v4104 = vrot.slane %v4102, 4
      %v4105 = vrot.slane %v3304, 5
      %v4106 = vsel %vm1162, %v4104, %v4105
      %v4107 = vrot.slane %v3959, 5
      %v4108 = vrot.slane %v4107, 4
      %v4109 = vrot.slane %v3306, 5
      %v4110 = vsel %vm1162, %v4108, %v4109
      %v4111 = vrot.slane %v4109, 4
      %v4112 = vrot.slane %v3307, 5
      %v4113 = vsel %vm1162, %v4111, %v4112
      %v4114 = vrot.slane %v3960, 5
      %v4115 = vrot.slane %v4114, 4
      %v4116 = vrot.slane %v3309, 5
      %v4117 = vsel %vm1162, %v4115, %v4116
      %v4118 = vrot.slane %v4116, 4
      %v4119 = vrot.slane %v3310, 5
      %v4120 = vsel %vm1162, %v4118, %v4119
      %s4121 = scalar_lea.vmem %s1, 512
      %v4122 = vld [vmem:[%s4121] sm:$0xf]
      %v4123 = vld [vmem:[%s4121 + $0x4] sm:$0xf]
      %v4124 = vld [vmem:[%s4121 + $0x8] sm:$0xf]
      %v4125 = vld [vmem:[%s4121 + $0xc] sm:$0xf]
      %v4126 = vld [vmem:[%s4121 + $0x10] sm:$0xf]
      %v4127 = vld [vmem:[%s4121 + $0x14] sm:$0xf]
      %v4128 = vld [vmem:[%s4121 + $0x18] sm:$0xf]
      %v4129 = vld [vmem:[%s4121 + $0x1c] sm:$0xf]
      %v4130 = vld [vmem:[%s4121 + $0x20] sm:$0xf]
      %v4131 = vld [vmem:[%s4121 + $0x24] sm:$0xf]
      %v4132 = vld [vmem:[%s4121 + $0x28] sm:$0xf]
      %v4133 = vld [vmem:[%s4121 + $0x2c] sm:$0xf]
      %v4134 = vld [vmem:[%s4121 + $0x30] sm:$0xf]
      %v4135 = vld [vmem:[%s4121 + $0x34] sm:$0xf]
      %v4136 = vld [vmem:[%s4121 + $0x38] sm:$0xf]
      %v4137 = vld [vmem:[%s4121 + $0x3c] sm:$0xf]
      %v4138 = vunpack.c.l.b16 %v4012
      %v4139 = vunpack.c.l.b16 %v4015
      %v4140 = vunpack.c.l.b16 %v4019
      %v4141 = vunpack.c.l.b16 %v4022
      %v4142 = vunpack.c.l.b16 %v4026
      %v4143 = vunpack.c.l.b16 %v4029
      %v4144 = vunpack.c.l.b16 %v4033
      %v4145 = vunpack.c.l.b16 %v4036
      %v4146 = vunpack.c.l.b16 %v4040
      %v4147 = vunpack.c.l.b16 %v4043
      %v4148 = vunpack.c.l.b16 %v4047
      %v4149 = vunpack.c.l.b16 %v4050
      %v4150 = vunpack.c.l.b16 %v4054
      %v4151 = vunpack.c.l.b16 %v4057
      %v4152 = vunpack.c.l.b16 %v4061
      %v4153 = vunpack.c.l.b16 %v4064
      %v4154 = vunpack.c.l.b16 %v4068
      %v4155 = vunpack.c.l.b16 %v4071
      %v4156 = vunpack.c.l.b16 %v4075
      %v4157 = vunpack.c.l.b16 %v4078
      %v4158 = vunpack.c.l.b16 %v4082
      %v4159 = vunpack.c.l.b16 %v4085
      %v4160 = vunpack.c.l.b16 %v4089
      %v4161 = vunpack.c.l.b16 %v4092
      %v4162 = vunpack.c.l.b16 %v4096
      %v4163 = vunpack.c.l.b16 %v4099
      %v4164 = vunpack.c.l.b16 %v4103
      %v4165 = vunpack.c.l.b16 %v4106
      %v4166 = vunpack.c.l.b16 %v4110
      %v4167 = vunpack.c.l.b16 %v4113
      %v4168 = vunpack.c.l.b16 %v4117
      %v4169 = vunpack.c.l.b16 %v4120
      %v4170 = vpack.c.b16 %v4139, %v4138
      %v4171 = vpack.c.b16 %v4141, %v4140
      %v4172 = vpack.c.b16 %v4143, %v4142
      %v4173 = vpack.c.b16 %v4145, %v4144
      %v4174 = vpack.c.b16 %v4147, %v4146
      %v4175 = vpack.c.b16 %v4149, %v4148
      %v4176 = vpack.c.b16 %v4151, %v4150
      %v4177 = vpack.c.b16 %v4153, %v4152
      %v4178 = vpack.c.b16 %v4155, %v4154
      %v4179 = vpack.c.b16 %v4157, %v4156
      %v4180 = vpack.c.b16 %v4159, %v4158
      %v4181 = vpack.c.b16 %v4161, %v4160
      %v4182 = vpack.c.b16 %v4163, %v4162
      %v4183 = vpack.c.b16 %v4165, %v4164
      %v4184 = vpack.c.b16 %v4167, %v4166
      %v4185 = vpack.c.b16 %v4169, %v4168
      %v4218 = vunpack.c.l.b16 %v4122
      %v4219 = vunpack.c.l.b16 %v4123
      %v4220 = vunpack.c.l.b16 %v4124
      %v4221 = vunpack.c.l.b16 %v4125
      %v4222 = vunpack.c.l.b16 %v4126
      %v4223 = vunpack.c.l.b16 %v4127
      %v4224 = vunpack.c.l.b16 %v4128
      %v4225 = vunpack.c.l.b16 %v4129
      %v4226 = vunpack.c.l.b16 %v4130
      %v4227 = vunpack.c.l.b16 %v4131
      %v4228 = vunpack.c.l.b16 %v4132
      %v4229 = vunpack.c.l.b16 %v4133
      %v4230 = vunpack.c.l.b16 %v4134
      %v4231 = vunpack.c.l.b16 %v4135
      %v4232 = vunpack.c.l.b16 %v4136
      %v4233 = vunpack.c.l.b16 %v4137
      %v4234 = vpack.c.b16 %v4219, %v4218
      %v4235 = vpack.c.b16 %v4221, %v4220
      %v4236 = vpack.c.b16 %v4223, %v4222
      %v4237 = vpack.c.b16 %v4225, %v4224
      %v4238 = vpack.c.b16 %v4227, %v4226
      %v4239 = vpack.c.b16 %v4229, %v4228
      %v4240 = vpack.c.b16 %v4231, %v4230
      %v4241 = vpack.c.b16 %v4233, %v4232
      %4250 = vmatpush.bf16.msra.mxu0 %v4241
      %4251 = vmatpush.bf16.msra.mxu0 %v4240
      %4252 = vmatpush.bf16.msra.mxu0 %v4239
      %4253 = vmatpush.bf16.msra.mxu0 %v4238
      %4254 = vmatpush.bf16.msra.mxu0 %v4237
      %4255 = vmatpush.bf16.msra.mxu0 %v4236
      %4256 = vmatpush.bf16.msra.mxu0 %v4235
      %4257 = vmatpush.bf16.msra.mxu0 %v4234
      %4258 = vmatmul.bf16.gmra.mxu0 %v4170
      %v4259 = vpop.f32.mrf.mxu0
      %v4260 = vadd.f32 0.0, %v4259
      %v4261 = vpop.f32.mrf.mxu0
      %v4262 = vadd.f32 0.0, %v4261
      %4263 = vmatmul.bf16.gmra.mxu0 %v4171
      %v4264 = vpop.f32.mrf.mxu0
      %v4265 = vadd.f32 0.0, %v4264
      %v4266 = vpop.f32.mrf.mxu0
      %v4267 = vadd.f32 0.0, %v4266
      %4268 = vmatmul.bf16.gmra.mxu0 %v4172
      %v4269 = vpop.f32.mrf.mxu0
      %v4270 = vadd.f32 0.0, %v4269
      %v4271 = vpop.f32.mrf.mxu0
      %v4272 = vadd.f32 0.0, %v4271
      %4273 = vmatmul.bf16.gmra.mxu0 %v4173
      %v4274 = vpop.f32.mrf.mxu0
      %v4275 = vadd.f32 0.0, %v4274
      %v4276 = vpop.f32.mrf.mxu0
      %v4277 = vadd.f32 0.0, %v4276
      %4278 = vmatmul.bf16.gmra.mxu0 %v4174
      %v4279 = vpop.f32.mrf.mxu0
      %v4280 = vadd.f32 0.0, %v4279
      %v4281 = vpop.f32.mrf.mxu0
      %v4282 = vadd.f32 0.0, %v4281
      %4283 = vmatmul.bf16.gmra.mxu0 %v4175
      %v4284 = vpop.f32.mrf.mxu0
      %v4285 = vadd.f32 0.0, %v4284
      %v4286 = vpop.f32.mrf.mxu0
      %v4287 = vadd.f32 0.0, %v4286
      %4288 = vmatmul.bf16.gmra.mxu0 %v4176
      %v4289 = vpop.f32.mrf.mxu0
      %v4290 = vadd.f32 0.0, %v4289
      %v4291 = vpop.f32.mrf.mxu0
      %v4292 = vadd.f32 0.0, %v4291
      %4293 = vmatmul.bf16.gmra.mxu0 %v4177
      %v4294 = vpop.f32.mrf.mxu0
      %v4295 = vadd.f32 0.0, %v4294
      %v4296 = vpop.f32.mrf.mxu0
      %v4297 = vadd.f32 0.0, %v4296
      %4298 = vmatmul.bf16.gmra.mxu0 %v4178
      %v4299 = vpop.f32.mrf.mxu0
      %v4300 = vadd.f32 0.0, %v4299
      %v4301 = vpop.f32.mrf.mxu0
      %v4302 = vadd.f32 0.0, %v4301
      %4303 = vmatmul.bf16.gmra.mxu0 %v4179
      %v4304 = vpop.f32.mrf.mxu0
      %v4305 = vadd.f32 0.0, %v4304
      %v4306 = vpop.f32.mrf.mxu0
      %v4307 = vadd.f32 0.0, %v4306
      %4308 = vmatmul.bf16.gmra.mxu0 %v4180
      %v4309 = vpop.f32.mrf.mxu0
      %v4310 = vadd.f32 0.0, %v4309
      %v4311 = vpop.f32.mrf.mxu0
      %v4312 = vadd.f32 0.0, %v4311
      %4313 = vmatmul.bf16.gmra.mxu0 %v4181
      %v4314 = vpop.f32.mrf.mxu0
      %v4315 = vadd.f32 0.0, %v4314
      %v4316 = vpop.f32.mrf.mxu0
      %v4317 = vadd.f32 0.0, %v4316
      %4318 = vmatmul.bf16.gmra.mxu0 %v4182
      %v4319 = vpop.f32.mrf.mxu0
      %v4320 = vadd.f32 0.0, %v4319
      %v4321 = vpop.f32.mrf.mxu0
      %v4322 = vadd.f32 0.0, %v4321
      %4323 = vmatmul.bf16.gmra.mxu0 %v4183
      %v4324 = vpop.f32.mrf.mxu0
      %v4325 = vadd.f32 0.0, %v4324
      %v4326 = vpop.f32.mrf.mxu0
      %v4327 = vadd.f32 0.0, %v4326
      %4328 = vmatmul.bf16.gmra.mxu0 %v4184
      %v4329 = vpop.f32.mrf.mxu0
      %v4330 = vadd.f32 0.0, %v4329
      %v4331 = vpop.f32.mrf.mxu0
      %v4332 = vadd.f32 0.0, %v4331
      %4333 = vmatmul.bf16.gmra.mxu0 %v4185
      %v4334 = vpop.f32.mrf.mxu0
      %v4335 = vadd.f32 0.0, %v4334
      %v4336 = vpop.f32.mrf.mxu0
      %v4337 = vadd.f32 0.0, %v4336
      %4338 = vdwg.mxu0
      %v4339 = vadd.f32 %v3913, %v4260
      %v4340 = vadd.f32 %v3914, %v4262
      %v4341 = vadd.f32 %v3915, %v4265
      %v4342 = vadd.f32 %v3916, %v4267
      %v4343 = vadd.f32 %v3917, %v4270
      %v4344 = vadd.f32 %v3918, %v4272
      %v4345 = vadd.f32 %v3919, %v4275
      %v4346 = vadd.f32 %v3920, %v4277
      %v4347 = vadd.f32 %v3921, %v4280
      %v4348 = vadd.f32 %v3922, %v4282
      %v4349 = vadd.f32 %v3923, %v4285
      %v4350 = vadd.f32 %v3924, %v4287
      %v4351 = vadd.f32 %v3925, %v4290
      %v4352 = vadd.f32 %v3926, %v4292
      %v4353 = vadd.f32 %v3927, %v4295
      %v4354 = vadd.f32 %v3928, %v4297
      %v4355 = vadd.f32 %v3929, %v4300
      %v4356 = vadd.f32 %v3930, %v4302
      %v4357 = vadd.f32 %v3931, %v4305
      %v4358 = vadd.f32 %v3932, %v4307
      %v4359 = vadd.f32 %v3933, %v4310
      %v4360 = vadd.f32 %v3934, %v4312
      %v4361 = vadd.f32 %v3935, %v4315
      %v4362 = vadd.f32 %v3936, %v4317
      %v4363 = vadd.f32 %v3937, %v4320
      %v4364 = vadd.f32 %v3938, %v4322
      %v4365 = vadd.f32 %v3939, %v4325
      %v4366 = vadd.f32 %v3940, %v4327
      %v4367 = vadd.f32 %v3941, %v4330
      %v4368 = vadd.f32 %v3942, %v4332
      %v4369 = vadd.f32 %v3943, %v4335
      %v4370 = vadd.f32 %v3944, %v4337
      %v4371 = vld [vmem:[%s2] sm:$0x1]
      %v4373 = vperm.slane %v4371, 0
      %v4375 = vadd.f32 %v4339, %v4373
      %v4376 = vadd.f32 %v4340, %v4373
      %v4377 = vadd.f32 %v4341, %v4373
      %v4378 = vadd.f32 %v4342, %v4373
      %v4379 = vadd.f32 %v4343, %v4373
      %v4380 = vadd.f32 %v4344, %v4373
      %v4381 = vadd.f32 %v4345, %v4373
      %v4382 = vadd.f32 %v4346, %v4373
      %v4383 = vadd.f32 %v4347, %v4373
      %v4384 = vadd.f32 %v4348, %v4373
      %v4385 = vadd.f32 %v4349, %v4373
      %v4386 = vadd.f32 %v4350, %v4373
      %v4387 = vadd.f32 %v4351, %v4373
      %v4388 = vadd.f32 %v4352, %v4373
      %v4389 = vadd.f32 %v4353, %v4373
      %v4390 = vadd.f32 %v4354, %v4373
      %v4391 = vadd.f32 %v4355, %v4373
      %v4392 = vadd.f32 %v4356, %v4373
      %v4393 = vadd.f32 %v4357, %v4373
      %v4394 = vadd.f32 %v4358, %v4373
      %v4395 = vadd.f32 %v4359, %v4373
      %v4396 = vadd.f32 %v4360, %v4373
      %v4397 = vadd.f32 %v4361, %v4373
      %v4398 = vadd.f32 %v4362, %v4373
      %v4399 = vadd.f32 %v4363, %v4373
      %v4400 = vadd.f32 %v4364, %v4373
      %v4401 = vadd.f32 %v4365, %v4373
      %v4402 = vadd.f32 %v4366, %v4373
      %v4403 = vadd.f32 %v4367, %v4373
      %v4404 = vadd.f32 %v4368, %v4373
      %v4405 = vadd.f32 %v4369, %v4373
      %v4406 = vadd.f32 %v4370, %v4373
      %v4407 = vmax.f32 %v4375, 0.0
      %v4408 = vmax.f32 %v4376, 0.0
      %v4409 = vmax.f32 %v4377, 0.0
      %v4410 = vmax.f32 %v4378, 0.0
      %v4411 = vmax.f32 %v4379, 0.0
      %v4412 = vmax.f32 %v4380, 0.0
      %v4413 = vmax.f32 %v4381, 0.0
      %v4414 = vmax.f32 %v4382, 0.0
      %v4415 = vmax.f32 %v4383, 0.0
      %v4416 = vmax.f32 %v4384, 0.0
      %v4417 = vmax.f32 %v4385, 0.0
      %v4418 = vmax.f32 %v4386, 0.0
      %v4419 = vmax.f32 %v4387, 0.0
      %v4420 = vmax.f32 %v4388, 0.0
      %v4421 = vmax.f32 %v4389, 0.0
      %v4422 = vmax.f32 %v4390, 0.0
      %v4423 = vmax.f32 %v4391, 0.0
      %v4424 = vmax.f32 %v4392, 0.0
      %v4425 = vmax.f32 %v4393, 0.0
      %v4426 = vmax.f32 %v4394, 0.0
      %v4427 = vmax.f32 %v4395, 0.0
      %v4428 = vmax.f32 %v4396, 0.0
      %v4429 = vmax.f32 %v4397, 0.0
      %v4430 = vmax.f32 %v4398, 0.0
      %v4431 = vmax.f32 %v4399, 0.0
      %v4432 = vmax.f32 %v4400, 0.0
      %v4433 = vmax.f32 %v4401, 0.0
      %v4434 = vmax.f32 %v4402, 0.0
      %v4435 = vmax.f32 %v4403, 0.0
      %v4436 = vmax.f32 %v4404, 0.0
      %v4437 = vmax.f32 %v4405, 0.0
      %v4438 = vmax.f32 %v4406, 0.0
      %v4439 = vpack.c.bf16 %v4407, %v4407
      %v4440 = vpack.c.bf16 %v4408, %v4408
      %v4441 = vpack.c.bf16 %v4409, %v4409
      %v4442 = vpack.c.bf16 %v4410, %v4410
      %v4443 = vpack.c.bf16 %v4411, %v4411
      %v4444 = vpack.c.bf16 %v4412, %v4412
      %v4445 = vpack.c.bf16 %v4413, %v4413
      %v4446 = vpack.c.bf16 %v4414, %v4414
      %v4447 = vpack.c.bf16 %v4415, %v4415
      %v4448 = vpack.c.bf16 %v4416, %v4416
      %v4449 = vpack.c.bf16 %v4417, %v4417
      %v4450 = vpack.c.bf16 %v4418, %v4418
      %v4451 = vpack.c.bf16 %v4419, %v4419
      %v4452 = vpack.c.bf16 %v4420, %v4420
      %v4453 = vpack.c.bf16 %v4421, %v4421
      %v4454 = vpack.c.bf16 %v4422, %v4422
      %v4455 = vpack.c.bf16 %v4423, %v4423
      %v4456 = vpack.c.bf16 %v4424, %v4424
      %v4457 = vpack.c.bf16 %v4425, %v4425
      %v4458 = vpack.c.bf16 %v4426, %v4426
      %v4459 = vpack.c.bf16 %v4427, %v4427
      %v4460 = vpack.c.bf16 %v4428, %v4428
      %v4461 = vpack.c.bf16 %v4429, %v4429
      %v4462 = vpack.c.bf16 %v4430, %v4430
      %v4463 = vpack.c.bf16 %v4431, %v4431
      %v4464 = vpack.c.bf16 %v4432, %v4432
      %v4465 = vpack.c.bf16 %v4433, %v4433
      %v4466 = vpack.c.bf16 %v4434, %v4434
      %v4467 = vpack.c.bf16 %v4435, %v4435
      %v4468 = vpack.c.bf16 %v4436, %v4436
      %v4469 = vpack.c.bf16 %v4437, %v4437
      %v4470 = vpack.c.bf16 %v4438, %v4438
      %4471 = vst [vmem:[%s208] sm:$0xf] %v4439
      %4472 = vst [vmem:[%s208 + $0x4] sm:$0xf] %v4440
      %4473 = vst [vmem:[%s208 + $0x8] sm:$0xf] %v4441
      %4474 = vst [vmem:[%s208 + $0xc] sm:$0xf] %v4442
      %4475 = vst [vmem:[%s208 + $0x10] sm:$0xf] %v4443
      %4476 = vst [vmem:[%s208 + $0x14] sm:$0xf] %v4444
      %4477 = vst [vmem:[%s208 + $0x18] sm:$0xf] %v4445
      %4478 = vst [vmem:[%s208 + $0x1c] sm:$0xf] %v4446
      %4479 = vst [vmem:[%s208 + $0x20] sm:$0xf] %v4447
      %4480 = vst [vmem:[%s208 + $0x24] sm:$0xf] %v4448
      %4481 = vst [vmem:[%s208 + $0x28] sm:$0xf] %v4449
      %4482 = vst [vmem:[%s208 + $0x2c] sm:$0xf] %v4450
      %4483 = vst [vmem:[%s208 + $0x30] sm:$0xf] %v4451
      %4484 = vst [vmem:[%s208 + $0x34] sm:$0xf] %v4452
      %4485 = vst [vmem:[%s208 + $0x38] sm:$0xf] %v4453
      %4486 = vst [vmem:[%s208 + $0x3c] sm:$0xf] %v4454
      %4487 = vst [vmem:[%s208 + $0x40] sm:$0xf] %v4455
      %4488 = vst [vmem:[%s208 + $0x44] sm:$0xf] %v4456
      %4489 = vst [vmem:[%s208 + $0x48] sm:$0xf] %v4457
      %4490 = vst [vmem:[%s208 + $0x4c] sm:$0xf] %v4458
      %4491 = vst [vmem:[%s208 + $0x50] sm:$0xf] %v4459
      %4492 = vst [vmem:[%s208 + $0x54] sm:$0xf] %v4460
      %4493 = vst [vmem:[%s208 + $0x58] sm:$0xf] %v4461
      %4494 = vst [vmem:[%s208 + $0x5c] sm:$0xf] %v4462
      %4495 = vst [vmem:[%s208 + $0x60] sm:$0xf] %v4463
      %4496 = vst [vmem:[%s208 + $0x64] sm:$0xf] %v4464
      %4497 = vst [vmem:[%s208 + $0x68] sm:$0xf] %v4465
      %4498 = vst [vmem:[%s208 + $0x6c] sm:$0xf] %v4466
      %4499 = vst [vmem:[%s208 + $0x70] sm:$0xf] %v4467
      %4500 = vst [vmem:[%s208 + $0x74] sm:$0xf] %v4468
      %4501 = vst [vmem:[%s208 + $0x78] sm:$0xf] %v4469
      %4502 = vst [vmem:[%s208 + $0x7c] sm:$0xf] %v4470
      %s4503 = smul.u32 16, %s19
      %p4504 = scmp.lt.s32.totalorder %s18, 1
      %s4505 = scalar_select %p4504, %s18, 1
      %p4506 = scmp.lt.s32.totalorder %s4503, 15
      %s4507 = scalar_select %p4506, %s4503, 15
      %s4508 = smul.addr %s4507, 2
      %s4509 = smul.addr %s4505, 32
      %s4510 = sadd.s32 %s4508, %s4509
      %s4511 = smul.addr %s4510, 4
      %s4512 = scalar_lea.vmem %s3, %s4511
      // Predicated region
      $region33: #{unet_upx3_forward.5} parent=31 // pred_check
        %p4513 = pneg %p116
      $region34: #{unet_upx3_forward.5} parent=31 // pred_check_branch
        %4515 = sbr.rel (%p4513) target = $region36
      $region35: #{unet_upx3_forward.5} parent=31 // pred_region
        %s4516 = smul.u32 16, %s19
      $region36: #{unet_upx3_forward.5} parent=31 // pred_fallthru
        _
    $region32: #{unet_upx3_forward.5} parent=5 // pred_fallthru
      _
    %p4517 = scmp.le.s32.totalorder 2, %s9
    // Predicated region
    $region37: #{unet_upx3_forward.5} parent=5 // pred_check
      %p4518 = pneg %p4517
    $region38: #{unet_upx3_forward.5} parent=5 // pred_check_branch
      %4520 = sbr.rel (%p4518) target = $region40
    $region39: #{unet_upx3_forward.5} parent=5 // pred_region
      %s4521 = ssub.s32 %s9, 2
      // Predicated region
      $region41: #{unet_upx3_forward.5} parent=39 // pred_check
        %p4522 = pneg %p122
      $region42: #{unet_upx3_forward.5} parent=39 // pred_check_branch
        %4524 = sbr.rel (%p4522) target = $region44
      $region43: #{unet_upx3_forward.5} parent=39 // pred_region
        %s4525 = smul.u32 16, %s21
        %p4526 = scmp.lt.s32.totalorder %s20, 1
        %s4527 = scalar_select %p4526, %s20, 1
        %p4528 = scmp.lt.s32.totalorder %s4525, 15
        %s4529 = scalar_select %p4528, %s4525, 15
        %s4530 = smul.addr %s4529, 2
        %s4531 = smul.addr %s4527, 32
        %s4532 = sadd.s32 %s4530, %s4531
        %s4533 = smul.addr %s4532, 4
        %s4534 = scalar_lea.vmem %s3, %s4533
      $region44: #{unet_upx3_forward.5} parent=39 // pred_fallthru
        _
    $region40: #{unet_upx3_forward.5} parent=5 // pred_fallthru
      _
  $region6: #{unet_upx3_forward.5} parent=0 // loop_footer
    %s13 = sadd.s32 1, %s9
  $region7: #{unet_upx3_forward.5} parent=0 // loop_footer_branch
    %8 = sbr.rel target = $region3
  $region8: #{unet_upx3_forward.5} parent=0 // loop_exit
    _

</llo_original>
